<compile_context>
chip_gen: v5e
topology: v5e:2x2
jax: 0.10.0
libtpu: 0.0.40
codegen_flags: <defaults>
</compile_context>

<pallas_src>
import numpy as np
import jax
import jax.numpy as jnp
from jax.experimental import pallas as pl
from jax.experimental.pallas import tpu as pltpu


# ----------------------------------------------------------------------------
# Row packing: fold R rows into one lane-row so R*W*C >= 128 (lane-dense I/O).
# ----------------------------------------------------------------------------
def choose_row_pack(H, W, C):
    R = 1
    while (R * W * C < 128) and (H % (2 * R) == 0):
        R *= 2
    return R


# ----------------------------------------------------------------------------
# Weight prep: 3x3 conv taps -> 3 banded block-Toeplitz matmul weights for
# row-packed images.
# ----------------------------------------------------------------------------
def make_block_toeplitz(w_taps, W, R):
    """w_taps: (9, C, Cout) with tap index k = ky*3 + kx.

    Returns (3, R*W*C, R*W*Cout).  With images folded as
    (packed_row, lane=(r, x, c)) and one zero halo packed-row above/below,
    the 'same' conv of a packed output row p is
        out_row(p) = sum_dy padded_row(p + dy - 1) @ T[dy]
    Left/right truncation is encoded in the band; top/bottom via the halo.
    """
    _, C, Cout = w_taps.shape
    idx = np.full((3, R, W, R, W), -1, dtype=np.int32)   # (dy, r_in, xp, r_out, x)
    for r_out in range(R):
        for ky in range(3):
            yoff = r_out + ky - 1
            dy = (yoff // R) + 1          # packed-row offset + 1  -> {0,1,2}
            r_in = yoff % R
            for x in range(W):
                for kx in range(3):
                    xp = x + kx - 1
                    if 0 <= xp < W:
                        idx[dy, r_in, xp, r_out, x] = ky * 3 + kx
    idx = jnp.asarray(idx)
    gathered = w_taps[jnp.clip(idx, 0)]                              # (3,R,W,R,W,C,Co)
    gathered = jnp.where((idx >= 0)[..., None, None], gathered, 0.0)
    t = jnp.transpose(gathered, (0, 1, 2, 5, 3, 4, 6))               # (3,R,W,C,R,W,Co)
    return t.reshape(3, R * W * C, R * W * Cout)


# ----------------------------------------------------------------------------
# Stage 1 kernel: hoisted x-side conv for ALL timesteps (non-recurrent).
# Columns of wx are [update | reset | out_gate]; biases already folded in.
# ----------------------------------------------------------------------------
def make_xconv_kernel(B, T, HP, KX, NX):
    M = B * T * HP

    def kernel(xpad_ref, wx_ref, b_ref, out_ref):
        acc = jnp.zeros((M, NX), jnp.float32)
        for dy in range(3):
            lhs = xpad_ref[:, :, dy:dy + HP, :].reshape(M, KX)       # bf16 rows
            acc = acc + jnp.dot(lhs, wx_ref[dy],
                                preferred_element_type=jnp.float32)
        out_ref[...] = (acc + b_ref[...]).reshape(B, T, HP, NX)

    return kernel


# ----------------------------------------------------------------------------
# Stage 2 kernel: the ConvGRU recurrence over T (sequential grid axis).
# ----------------------------------------------------------------------------
def make_convgru_kernel(B, HP, NWR):
    BHP = B * HP
    NX = 3 * NWR

    def rows(pad_ref, dy):
        # (B, HP+2, NWR) bf16 halo'd slab -> (B*HP, NWR) matmul LHS.
        # Pure sublane slice + leading-dim merge, no lane relayout.
        return pad_ref[:, dy:dy + HP, :].reshape(BHP, NWR)

    def kernel(xacc_ref, h0_ref, wgh_ref, woh_ref,
               out_ref, h_f32, hpad, hrpad):
        t = pl.program_id(0)

        @pl.when(t == 0)
        def _():
            # Zero only the halo rows (top/bottom 'same' padding); the
            # interiors are fully overwritten every step.
            zrow = jnp.zeros((B, 1, NWR), jnp.bfloat16)
            hpad[:, 0:1, :] = zrow
            hpad[:, HP + 1:HP + 2, :] = zrow
            hrpad[:, 0:1, :] = zrow
            hrpad[:, HP + 1:HP + 2, :] = zrow
            h_f32[...] = h0_ref[...]
            hpad[:, 1:HP + 1, :] = h0_ref[...].astype(jnp.bfloat16)

        # Pre-computed x contribution (+ biases) for this timestep.
        xg = xacc_ref[...].reshape(BHP, NX)

        # combined_gates conv: h contribution (3 banded MXU matmuls).
        acch = jnp.zeros((BHP, 2 * NWR), jnp.float32)
        for dy in range(3):
            acch = acch + jnp.dot(rows(hpad, dy), wgh_ref[dy],
                                  preferred_element_type=jnp.float32)

        g = xg[:, :2 * NWR] + acch
        update = jax.nn.sigmoid(g[:, :NWR])        # gamma -> update
        reset = jax.nn.sigmoid(g[:, NWR:])         # beta  -> reset

        h_prev = h_f32[...].reshape(BHP, NWR)
        hrpad[:, 1:HP + 1, :] = (h_prev * reset).reshape(
            B, HP, NWR).astype(jnp.bfloat16)

        # out_gate conv: h*reset contribution (x part + bias already in xg).
        acco = xg[:, 2 * NWR:]
        for dy in range(3):
            acco = acco + jnp.dot(rows(hrpad, dy), woh_ref[dy],
                                  preferred_element_type=jnp.float32)

        out_inputs = jnp.tanh(acco)
        new_h = h_prev * (1.0 - update) + out_inputs * update        # f32
        new_h_rows = new_h.reshape(B, HP, NWR)

        out_ref[...] = new_h_rows.reshape(B, 1, HP, NWR).astype(out_ref.dtype)
        h_f32[...] = new_h_rows                                      # precise carry
        hpad[:, 1:HP + 1, :] = new_h_rows.astype(jnp.bfloat16)       # matmul carry

    return kernel


# ----------------------------------------------------------------------------
# One ConvGRU layer = hoisted x-conv pallas_call + recurrent pallas_call.
# ----------------------------------------------------------------------------
def convgru_layer_pallas(x, h0, wgx, wgh, bg, wox, woh, bo,
                         out_dtype=jnp.bfloat16):
    """x: (B, T, H, W, Cin), h0: (B, H, W, Ch) -> (B, T, H, W, Ch)."""
    B, T, H, W, Cin = x.shape
    Ch = h0.shape[-1]
    R = choose_row_pack(H, W, Ch)
    HP = H // R
    KX = R * W * Cin          # folded x row width
    NWR = R * W * Ch          # folded h / conv-output row width
    NX = 3 * NWR              # fused x-conv output width [update|reset|out]

    # Banded block-Toeplitz weights (bf16 MXU operands).
    wx = jnp.concatenate([
        make_block_toeplitz(wgx[:, :, :Ch], W, R),
        make_block_toeplitz(wgx[:, :, Ch:], W, R),
        make_block_toeplitz(wox, W, R)], axis=-1).astype(jnp.bfloat16)      # (3,KX,NX)
    wgh_t = jnp.concatenate([
        make_block_toeplitz(wgh[:, :, :Ch], W, R),
        make_block_toeplitz(wgh[:, :, Ch:], W, R)],
        axis=-1).astype(jnp.bfloat16)                                       # (3,NWR,2NWR)
    woh_t = make_block_toeplitz(woh, W, R).astype(jnp.bfloat16)             # (3,NWR,NWR)
    b_full = jnp.concatenate([jnp.tile(bg[:, :Ch], (1, R * W)),
                              jnp.tile(bg[:, Ch:], (1, R * W)),
                              jnp.tile(bo, (1, R * W))],
                             axis=-1).astype(jnp.float32)                   # (1, NX)

    # ---- Stage 1: x-side conv for all timesteps at once (M = T*B*HP). ------
    x_f = x.reshape(B, T, HP, KX)                                    # pure reshape
    x_pad = jnp.pad(x_f.astype(jnp.bfloat16), ((0, 0), (0, 0), (1, 1), (0, 0)))
    xacc = pl.pallas_call(
        make_xconv_kernel(B, T, HP, KX, NX),
        out_shape=jax.ShapeDtypeStruct((B, T, HP, NX), jnp.float32),
        grid=(1,),
        in_specs=[
            pl.BlockSpec((B, T, HP + 2, KX), lambda i: (0, 0, 0, 0)),
            pl.BlockSpec((3, KX, NX), lambda i: (0, 0, 0)),
            pl.BlockSpec((1, NX), lambda i: (0, 0)),
        ],
        out_specs=pl.BlockSpec((B, T, HP, NX), lambda i: (0, 0, 0, 0)),
    )(x_pad, wx, b_full)

    # ---- Stage 2: the recurrence over T. -----------------------------------
    h0_f = h0.reshape(B, HP, NWR).astype(jnp.float32)                # pure reshape
    out_f = pl.pallas_call(
        make_convgru_kernel(B, HP, NWR),
        out_shape=jax.ShapeDtypeStruct((B, T, HP, NWR), out_dtype),
        grid=(T,),
        in_specs=[
            pl.BlockSpec((B, 1, HP, NX), lambda t: (0, t, 0, 0)),    # streamed xacc
            pl.BlockSpec((B, HP, NWR), lambda t: (0, 0, 0)),         # h0
            pl.BlockSpec((3, NWR, 2 * NWR), lambda t: (0, 0, 0)),    # gate conv W (h)
            pl.BlockSpec((3, NWR, NWR), lambda t: (0, 0, 0)),        # out conv W (h)
        ],
        out_specs=pl.BlockSpec((B, 1, HP, NWR), lambda t: (0, t, 0, 0)),
        scratch_shapes=[
            pltpu.VMEM((B, HP, NWR), jnp.float32),                   # precise h carry
            pltpu.VMEM((B, HP + 2, NWR), jnp.bfloat16),              # halo'd h (bf16)
            pltpu.VMEM((B, HP + 2, NWR), jnp.bfloat16),              # halo'd h*reset
        ],
        compiler_params=pltpu.CompilerParams(
            dimension_semantics=("arbitrary",)),                     # true recurrence
    )(xacc, h0_f, wgh_t, woh_t)

    return out_f.reshape(B, T, HP, R, W, Ch).reshape(B, T, H, W, Ch)


# ----------------------------------------------------------------------------
# Plain-JAX glue: PixelShuffle(2) and the Decoder block stack
# ----------------------------------------------------------------------------
def pixel_shuffle_nhwc(x, r=2):
    """x: (B, T, H, W, C) with C = Cout*r*r -> (B, T, H*r, W*r, Cout)."""
    B, T, H, W, C = x.shape
    Cout = C // (r * r)
    x = x.reshape(B, T, H, W, Cout, r, r)
    x = x.transpose(0, 1, 2, 5, 3, 6, 4)
    return x.reshape(B, T, H * r, W * r, Cout)


def decoder_forward(x, hidden_states, params):
    n = len(params)
    for i, ((wgx, wgh, bg, wox, woh, bo), h0) in enumerate(zip(params, hidden_states)):
        out_dtype = jnp.float32 if i == n - 1 else jnp.bfloat16
        x = convgru_layer_pallas(x, h0, wgx, wgh, bg, wox, woh, bo,
                                 out_dtype=out_dtype)
        x = pixel_shuffle_nhwc(x, 2)
    return x


# ----------------------------------------------------------------------------
# Deterministic parameter init (mirrors nn.Conv2d shapes, stored tap-major)
# ----------------------------------------------------------------------------
def init_block_params(key, cin, ch):
    k1, k2, k3, k4 = jax.random.split(key, 4)
    fan_in = (cin + ch) * 9
    s = 1.0 / np.sqrt(fan_in)
    wg = jax.random.uniform(k1, (9, cin + ch, 2 * ch), jnp.float32, -s, s)
    bg = jax.random.uniform(k2, (1, 2 * ch), jnp.float32, -s, s)
    wo = jax.random.uniform(k3, (9, cin + ch, ch), jnp.float32, -s, s)
    bo = jax.random.uniform(k4, (1, ch), jnp.float32, -s, s)
    return (wg[:, :cin], wg[:, cin:], bg, wo[:, :cin], wo[:, cin:], bo)


# ----------------------------------------------------------------------------
# Pure-JAX reference (correctness sanity check)
# ----------------------------------------------------------------------------
def _conv3x3_ref(x, w, b):
    w4 = w.reshape(3, 3, w.shape[1], w.shape[2])
    y = jax.lax.conv_general_dilated(
        x, w4, window_strides=(1, 1), padding="SAME",
        dimension_numbers=("NHWC", "HWIO", "NHWC"),
        precision=jax.lax.Precision.HIGHEST)
    return y + b.reshape(1, 1, 1, -1)


def convgru_layer_ref(x, h, wgx, wgh, bg, wox, woh, bo):
    T = x.shape[1]
    Ch = h.shape[-1]
    wg = jnp.concatenate([wgx, wgh], axis=1)
    wo = jnp.concatenate([wox, woh], axis=1)
    outs = []
    for t in range(T):
        xt = x[:, t]
        g = _conv3x3_ref(jnp.concatenate([xt, h], -1), wg, bg)
        update = jax.nn.sigmoid(g[..., :Ch])
        reset = jax.nn.sigmoid(g[..., Ch:])
        o = jnp.tanh(_conv3x3_ref(jnp.concatenate([xt, h * reset], -1), wo, bo))
        h = h * (1.0 - update) + o * update
        outs.append(h)
    return jnp.stack(outs, axis=1)


def decoder_ref(x, hidden_states, params):
    for (wgx, wgh, bg, wox, woh, bo), h0 in zip(params, hidden_states):
        x = convgru_layer_ref(x, h0, wgx, wgh, bg, wox, woh, bo)
        x = pixel_shuffle_nhwc(x, 2)
    return x


# ----------------------------------------------------------------------------
if __name__ == "__main__":
    key = jax.random.PRNGKey(0)

    # Decoder(output_channels=1, num_blocks=2):
    #   channel_sizes = [1 * 4**2, 1 * 4**1] = [16, 4]
    output_channels, num_blocks = 1, 2
    channel_sizes = [output_channels * 4 ** (i + 1) for i in reversed(range(num_blocks))]

    B, T, H0, W0 = 2, 3, 8, 8

    kx = jax.random.fold_in(key, 0)
    x = jax.random.normal(kx, (B, T, H0, W0, channel_sizes[0]), dtype=jnp.float32)

    params, hiddens = [], []
    h, w = H0, W0
    for i, c in enumerate(channel_sizes):
        params.append(init_block_params(jax.random.fold_in(key, 10 + i), c, c))
        hiddens.append(jax.random.normal(jax.random.fold_in(key, 100 + i),
                                         (B, h, w, c), dtype=jnp.float32))
        h, w = h * 2, w * 2  # each block doubles spatial resolution for the next

    out = jax.jit(decoder_forward)(x, hiddens, params)
    out = jax.block_until_ready(out)

    expected_shape = (B, T, H0 * 2 ** num_blocks, W0 * 2 ** num_blocks, output_channels)
    assert out.shape == expected_shape, (out.shape, expected_shape)

    ref = jax.block_until_ready(decoder_ref(x, hiddens, params))
    # bf16 MXU operands + bf16 inter-layer activations (f32 accumulation & carry)
    # -> loose-ish tolerance vs the f32 reference.
    np.testing.assert_allclose(np.asarray(out), np.asarray(ref), rtol=5e-2, atol=5e-2)

    print("KERNEL_OK")
</pallas_src>

<mosaic_0001>
module attributes {stable_mosaic.version = 11 : i64} {
  func.func @kernel(%arg0: i32, %arg1: memref<2x3x10x128xbf16, #tpu.memory_space<vmem>>, %arg2: memref<3x128x384xbf16, #tpu.memory_space<vmem>>, %arg3: memref<1x384xf32, #tpu.memory_space<vmem>>, %arg4: memref<2x3x8x384xf32, #tpu.memory_space<vmem>>) attributes {dimension_semantics = [#tpu.dimension_semantics<arbitrary>], iteration_bounds = array<i64: 1>, scalar_prefetch = 0 : i64, scratch_operands = 0 : i64, tpu.core_type = #tpu.core_type<tc>, window_params = [{pipeline_mode = #tpu.pipeline_mode<synchronous>, transform_indices = @transform_0, window_bounds = array<i64: 2, 3, 10, 128>}, {pipeline_mode = #tpu.pipeline_mode<synchronous>, transform_indices = @transform_1, window_bounds = array<i64: 3, 128, 384>}, {pipeline_mode = #tpu.pipeline_mode<synchronous>, transform_indices = @transform_2, window_bounds = array<i64: 1, 384>}, {pipeline_mode = #tpu.pipeline_mode<synchronous>, transform_indices = @transform_3, window_bounds = array<i64: 2, 3, 8, 384>}]} {
    %cst = arith.constant 0.000000e+00 : f32
    %0 = vector.broadcast %cst : f32 to vector<48x384xf32>
    %c0 = arith.constant 0 : index
    %c0_0 = arith.constant 0 : index
    %c0_1 = arith.constant 0 : index
    %c0_2 = arith.constant 0 : index
    %1 = vector.load %arg1[%c0, %c0_0, %c0_1, %c0_2] : memref<2x3x10x128xbf16, #tpu.memory_space<vmem>>, vector<2x3x8x128xbf16>
    %2 = vector.shape_cast %1 : vector<2x3x8x128xbf16> to vector<48x128xbf16>
    %c0_3 = arith.constant 0 : index
    %c0_4 = arith.constant 0 : index
    %c0_5 = arith.constant 0 : index
    %3 = vector.load %arg2[%c0_3, %c0_4, %c0_5] : memref<3x128x384xbf16, #tpu.memory_space<vmem>>, vector<1x128x384xbf16>
    %4 = vector.shape_cast %3 : vector<1x128x384xbf16> to vector<128x384xbf16>
    %cst_6 = arith.constant dense<0.000000e+00> : vector<48x384xf32>
    %5 = tpu.matmul %2, %4, %cst_6 {dimension_numbers = #tpu.dot_dimension_numbers<[1], [0], [0], [1], [0, 0, 1, 1], [], []>} : vector<48x128xbf16>, vector<128x384xbf16>, vector<48x384xf32> -> vector<48x384xf32>
    %6 = arith.addf %0, %5 : vector<48x384xf32>
    %c0_7 = arith.constant 0 : index
    %c0_8 = arith.constant 0 : index
    %c1 = arith.constant 1 : index
    %c0_9 = arith.constant 0 : index
    %7 = vector.load %arg1[%c0_7, %c0_8, %c1, %c0_9] : memref<2x3x10x128xbf16, #tpu.memory_space<vmem>>, vector<2x3x8x128xbf16>
    %8 = vector.shape_cast %7 : vector<2x3x8x128xbf16> to vector<48x128xbf16>
    %c1_10 = arith.constant 1 : index
    %c0_11 = arith.constant 0 : index
    %c0_12 = arith.constant 0 : index
    %9 = vector.load %arg2[%c1_10, %c0_11, %c0_12] : memref<3x128x384xbf16, #tpu.memory_space<vmem>>, vector<1x128x384xbf16>
    %10 = vector.shape_cast %9 : vector<1x128x384xbf16> to vector<128x384xbf16>
    %cst_13 = arith.constant dense<0.000000e+00> : vector<48x384xf32>
    %11 = tpu.matmul %8, %10, %cst_13 {dimension_numbers = #tpu.dot_dimension_numbers<[1], [0], [0], [1], [0, 0, 1, 1], [], []>} : vector<48x128xbf16>, vector<128x384xbf16>, vector<48x384xf32> -> vector<48x384xf32>
    %12 = arith.addf %6, %11 : vector<48x384xf32>
    %c0_14 = arith.constant 0 : index
    %c0_15 = arith.constant 0 : index
    %c2 = arith.constant 2 : index
    %c0_16 = arith.constant 0 : index
    %13 = vector.load %arg1[%c0_14, %c0_15, %c2, %c0_16] : memref<2x3x10x128xbf16, #tpu.memory_space<vmem>>, vector<2x3x8x128xbf16>
    %14 = vector.shape_cast %13 : vector<2x3x8x128xbf16> to vector<48x128xbf16>
    %c2_17 = arith.constant 2 : index
    %c0_18 = arith.constant 0 : index
    %c0_19 = arith.constant 0 : index
    %15 = vector.load %arg2[%c2_17, %c0_18, %c0_19] : memref<3x128x384xbf16, #tpu.memory_space<vmem>>, vector<1x128x384xbf16>
    %16 = vector.shape_cast %15 : vector<1x128x384xbf16> to vector<128x384xbf16>
    %cst_20 = arith.constant dense<0.000000e+00> : vector<48x384xf32>
    %17 = tpu.matmul %14, %16, %cst_20 {dimension_numbers = #tpu.dot_dimension_numbers<[1], [0], [0], [1], [0, 0, 1, 1], [], []>} : vector<48x128xbf16>, vector<128x384xbf16>, vector<48x384xf32> -> vector<48x384xf32>
    %18 = arith.addf %12, %17 : vector<48x384xf32>
    %c0_21 = arith.constant 0 : index
    %c0_22 = arith.constant 0 : index
    %19 = vector.load %arg3[%c0_21, %c0_22] : memref<1x384xf32, #tpu.memory_space<vmem>>, vector<1x384xf32>
    %20 = vector.broadcast %19 : vector<1x384xf32> to vector<48x384xf32>
    %21 = arith.addf %18, %20 : vector<48x384xf32>
    %22 = vector.shape_cast %21 : vector<48x384xf32> to vector<2x3x8x384xf32>
    %c0_23 = arith.constant 0 : index
    %c0_24 = arith.constant 0 : index
    %c0_25 = arith.constant 0 : index
    %c0_26 = arith.constant 0 : index
    %23 = vector.load %arg4[%c0_23, %c0_24, %c0_25, %c0_26] : memref<2x3x8x384xf32, #tpu.memory_space<vmem>>, vector<2x3x8x384xf32>
    tpu.vector_store %arg4[%c0_23, %c0_24, %c0_25, %c0_26], %22 {strides = array<i32>} : memref<2x3x8x384xf32, #tpu.memory_space<vmem>>, vector<2x3x8x384xf32>,
    return
  }
  func.func @transform_0(%arg0: i32) -> (i32, i32, i32, i32) {
    %c0_i32 = arith.constant 0 : i32
    %c0_i32_0 = arith.constant 0 : i32
    %c0_i32_1 = arith.constant 0 : i32
    %c0_i32_2 = arith.constant 0 : i32
    %c0_i32_3 = arith.constant 0 : i32
    return %c0_i32, %c0_i32_0, %c0_i32_1, %c0_i32_2 : i32, i32, i32, i32
  }
  func.func @transform_1(%arg0: i32) -> (i32, i32, i32) {
    %c0_i32 = arith.constant 0 : i32
    %c0_i32_0 = arith.constant 0 : i32
    %c0_i32_1 = arith.constant 0 : i32
    %c0_i32_2 = arith.constant 0 : i32
    return %c0_i32, %c0_i32_0, %c0_i32_1 : i32, i32, i32
  }
  func.func @transform_2(%arg0: i32) -> (i32, i32) {
    %c0_i32 = arith.constant 0 : i32
    %c0_i32_0 = arith.constant 0 : i32
    %c0_i32_1 = arith.constant 0 : i32
    return %c0_i32, %c0_i32_0 : i32, i32
  }
  func.func @transform_3(%arg0: i32) -> (i32, i32, i32, i32) {
    %c0_i32 = arith.constant 0 : i32
    %c0_i32_0 = arith.constant 0 : i32
    %c0_i32_1 = arith.constant 0 : i32
    %c0_i32_2 = arith.constant 0 : i32
    %c0_i32_3 = arith.constant 0 : i32
    return %c0_i32, %c0_i32_0, %c0_i32_1, %c0_i32_2 : i32, i32, i32, i32
  }
}

module attributes {stable_mosaic.version = 11 : i64} {
  func.func @kernel(%arg0: i32, %arg1: memref<2x1x8x384xf32, #tpu.memory_space<vmem>>, %arg2: memref<2x8x128xf32, #tpu.memory_space<vmem>>, %arg3: memref<3x128x256xbf16, #tpu.memory_space<vmem>>, %arg4: memref<3x128x128xbf16, #tpu.memory_space<vmem>>, %arg5: memref<2x1x8x128xbf16, #tpu.memory_space<vmem>>, %arg6: memref<2x8x128xf32, #tpu.memory_space<vmem>>, %arg7: memref<2x10x128xbf16, #tpu.memory_space<vmem>>, %arg8: memref<2x10x128xbf16, #tpu.memory_space<vmem>>) attributes {dimension_semantics = [#tpu.dimension_semantics<arbitrary>], iteration_bounds = array<i64: 3>, scalar_prefetch = 0 : i64, scratch_operands = 3 : i64, tpu.core_type = #tpu.core_type<tc>, window_params = [{transform_indices = @transform_0, window_bounds = array<i64: 2, 1, 8, 384>}, {pipeline_mode = #tpu.pipeline_mode<synchronous>, transform_indices = @transform_1, window_bounds = array<i64: 2, 8, 128>}, {pipeline_mode = #tpu.pipeline_mode<synchronous>, transform_indices = @transform_2, window_bounds = array<i64: 3, 128, 256>}, {pipeline_mode = #tpu.pipeline_mode<synchronous>, transform_indices = @transform_3, window_bounds = array<i64: 3, 128, 128>}, {transform_indices = @transform_4, window_bounds = array<i64: 2, 1, 8, 128>}]} {
    %c0_i32 = arith.constant 0 : i32
    %0 = arith.cmpi eq, %arg0, %c0_i32 : i32
    %1 = arith.extui %0 : i1 to i32
    %c0_i32_0 = arith.constant 0 : i32
    %2 = arith.cmpi ne, %1, %c0_i32_0 : i32
    scf.if %2 {
      %cst_63 = arith.constant 0.000000e+00 : bf16
      %76 = vector.broadcast %cst_63 : bf16 to vector<2x1x128xbf16>
      %c0_64 = arith.constant 0 : index
      %c0_65 = arith.constant 0 : index
      %c0_66 = arith.constant 0 : index
      %77 = vector.load %arg7[%c0_64, %c0_65, %c0_66] : memref<2x10x128xbf16, #tpu.memory_space<vmem>>, vector<2x1x128xbf16>
      tpu.vector_store %arg7[%c0_64, %c0_65, %c0_66], %76 {strides = array<i32>} : memref<2x10x128xbf16, #tpu.memory_space<vmem>>, vector<2x1x128xbf16>,
      %c0_67 = arith.constant 0 : index
      %c9 = arith.constant 9 : index
      %c0_68 = arith.constant 0 : index
      %78 = vector.load %arg7[%c0_67, %c9, %c0_68] : memref<2x10x128xbf16, #tpu.memory_space<vmem>>, vector<2x1x128xbf16>
      tpu.vector_store %arg7[%c0_67, %c9, %c0_68], %76 {strides = array<i32>} : memref<2x10x128xbf16, #tpu.memory_space<vmem>>, vector<2x1x128xbf16>,
      %c0_69 = arith.constant 0 : index
      %c0_70 = arith.constant 0 : index
      %c0_71 = arith.constant 0 : index
      %79 = vector.load %arg8[%c0_69, %c0_70, %c0_71] : memref<2x10x128xbf16, #tpu.memory_space<vmem>>, vector<2x1x128xbf16>
      tpu.vector_store %arg8[%c0_69, %c0_70, %c0_71], %76 {strides = array<i32>} : memref<2x10x128xbf16, #tpu.memory_space<vmem>>, vector<2x1x128xbf16>,
      %c0_72 = arith.constant 0 : index
      %c9_73 = arith.constant 9 : index
      %c0_74 = arith.constant 0 : index
      %80 = vector.load %arg8[%c0_72, %c9_73, %c0_74] : memref<2x10x128xbf16, #tpu.memory_space<vmem>>, vector<2x1x128xbf16>
      tpu.vector_store %arg8[%c0_72, %c9_73, %c0_74], %76 {strides = array<i32>} : memref<2x10x128xbf16, #tpu.memory_space<vmem>>, vector<2x1x128xbf16>,
      %c0_75 = arith.constant 0 : index
      %c0_76 = arith.constant 0 : index
      %c0_77 = arith.constant 0 : index
      %81 = vector.load %arg2[%c0_75, %c0_76, %c0_77] : memref<2x8x128xf32, #tpu.memory_space<vmem>>, vector<2x8x128xf32>
      %c0_78 = arith.constant 0 : index
      %c0_79 = arith.constant 0 : index
      %c0_80 = arith.constant 0 : index
      %82 = vector.load %arg6[%c0_78, %c0_79, %c0_80] : memref<2x8x128xf32, #tpu.memory_space<vmem>>, vector<2x8x128xf32>
      tpu.vector_store %arg6[%c0_78, %c0_79, %c0_80], %81 {strides = array<i32>} : memref<2x8x128xf32, #tpu.memory_space<vmem>>, vector<2x8x128xf32>,
      %c0_81 = arith.constant 0 : index
      %c0_82 = arith.constant 0 : index
      %c0_83 = arith.constant 0 : index
      %83 = vector.load %arg2[%c0_81, %c0_82, %c0_83] : memref<2x8x128xf32, #tpu.memory_space<vmem>>, vector<2x8x128xf32>
      %84 = arith.truncf %83 : vector<2x8x128xf32> to vector<2x8x128xbf16>
      %c0_84 = arith.constant 0 : index
      %c1_85 = arith.constant 1 : index
      %c0_86 = arith.constant 0 : index
      %85 = vector.load %arg7[%c0_84, %c1_85, %c0_86] : memref<2x10x128xbf16, #tpu.memory_space<vmem>>, vector<2x8x128xbf16>
      tpu.vector_store %arg7[%c0_84, %c1_85, %c0_86], %84 {strides = array<i32>} : memref<2x10x128xbf16, #tpu.memory_space<vmem>>, vector<2x8x128xbf16>,
    } else {
    }
    %c0 = arith.constant 0 : index
    %c0_1 = arith.constant 0 : index
    %c0_2 = arith.constant 0 : index
    %c0_3 = arith.constant 0 : index
    %3 = vector.load %arg1[%c0, %c0_1, %c0_2, %c0_3] : memref<2x1x8x384xf32, #tpu.memory_space<vmem>>, vector<2x1x8x384xf32>
    %4 = vector.shape_cast %3 : vector<2x1x8x384xf32> to vector<16x384xf32>
    %cst = arith.constant 0.000000e+00 : f32
    %5 = vector.broadcast %cst : f32 to vector<16x256xf32>
    %c0_4 = arith.constant 0 : index
    %c0_5 = arith.constant 0 : index
    %c0_6 = arith.constant 0 : index
    %6 = vector.load %arg7[%c0_4, %c0_5, %c0_6] : memref<2x10x128xbf16, #tpu.memory_space<vmem>>, vector<2x8x128xbf16>
    %7 = vector.shape_cast %6 : vector<2x8x128xbf16> to vector<16x128xbf16>
    %c0_7 = arith.constant 0 : index
    %c0_8 = arith.constant 0 : index
    %c0_9 = arith.constant 0 : index
    %8 = vector.load %arg3[%c0_7, %c0_8, %c0_9] : memref<3x128x256xbf16, #tpu.memory_space<vmem>>, vector<1x128x256xbf16>
    %9 = vector.shape_cast %8 : vector<1x128x256xbf16> to vector<128x256xbf16>
    %cst_10 = arith.constant dense<0.000000e+00> : vector<16x256xf32>
    %10 = tpu.matmul %7, %9, %cst_10 {dimension_numbers = #tpu.dot_dimension_numbers<[1], [0], [0], [1], [0, 0, 1, 1], [], []>} : vector<16x128xbf16>, vector<128x256xbf16>, vector<16x256xf32> -> vector<16x256xf32>
    %11 = arith.addf %5, %10 : vector<16x256xf32>
    %c0_11 = arith.constant 0 : index
    %c1 = arith.constant 1 : index
    %c0_12 = arith.constant 0 : index
    %12 = vector.load %arg7[%c0_11, %c1, %c0_12] : memref<2x10x128xbf16, #tpu.memory_space<vmem>>, vector<2x8x128xbf16>
    %13 = vector.shape_cast %12 : vector<2x8x128xbf16> to vector<16x128xbf16>
    %c1_13 = arith.constant 1 : index
    %c0_14 = arith.constant 0 : index
    %c0_15 = arith.constant 0 : index
    %14 = vector.load %arg3[%c1_13, %c0_14, %c0_15] : memref<3x128x256xbf16, #tpu.memory_space<vmem>>, vector<1x128x256xbf16>
    %15 = vector.shape_cast %14 : vector<1x128x256xbf16> to vector<128x256xbf16>
    %cst_16 = arith.constant dense<0.000000e+00> : vector<16x256xf32>
    %16 = tpu.matmul %13, %15, %cst_16 {dimension_numbers = #tpu.dot_dimension_numbers<[1], [0], [0], [1], [0, 0, 1, 1], [], []>} : vector<16x128xbf16>, vector<128x256xbf16>, vector<16x256xf32> -> vector<16x256xf32>
    %17 = arith.addf %11, %16 : vector<16x256xf32>
    %c0_17 = arith.constant 0 : index
    %c2 = arith.constant 2 : index
    %c0_18 = arith.constant 0 : index
    %18 = vector.load %arg7[%c0_17, %c2, %c0_18] : memref<2x10x128xbf16, #tpu.memory_space<vmem>>, vector<2x8x128xbf16>
    %19 = vector.shape_cast %18 : vector<2x8x128xbf16> to vector<16x128xbf16>
    %c2_19 = arith.constant 2 : index
    %c0_20 = arith.constant 0 : index
    %c0_21 = arith.constant 0 : index
    %20 = vector.load %arg3[%c2_19, %c0_20, %c0_21] : memref<3x128x256xbf16, #tpu.memory_space<vmem>>, vector<1x128x256xbf16>
    %21 = vector.shape_cast %20 : vector<1x128x256xbf16> to vector<128x256xbf16>
    %cst_22 = arith.constant dense<0.000000e+00> : vector<16x256xf32>
    %22 = tpu.matmul %19, %21, %cst_22 {dimension_numbers = #tpu.dot_dimension_numbers<[1], [0], [0], [1], [0, 0, 1, 1], [], []>} : vector<16x128xbf16>, vector<128x256xbf16>, vector<16x256xf32> -> vector<16x256xf32>
    %23 = arith.addf %17, %22 : vector<16x256xf32>
    %24 = vector.extract_strided_slice %4 {offsets = [0, 0], sizes = [16, 256], strides = [1, 1]} : vector<16x384xf32> to vector<16x256xf32>
    %25 = arith.addf %24, %23 : vector<16x256xf32>
    %26 = vector.extract_strided_slice %25 {offsets = [0, 0], sizes = [16, 128], strides = [1, 1]} : vector<16x256xf32> to vector<16x128xf32>
    %27 = arith.negf %26 : vector<16x128xf32>
    %28 = math.exp %27 : vector<16x128xf32>
    %cst_23 = arith.constant 1.000000e+00 : f32
    %29 = vector.broadcast %cst_23 : f32 to vector<16x128xf32>
    %30 = arith.addf %29, %28 : vector<16x128xf32>
    %31 = arith.divf %29, %30 : vector<16x128xf32>
    %32 = vector.extract_strided_slice %25 {offsets = [0, 128], sizes = [16, 128], strides = [1, 1]} : vector<16x256xf32> to vector<16x128xf32>
    %33 = arith.negf %32 : vector<16x128xf32>
    %34 = math.exp %33 : vector<16x128xf32>
    %cst_24 = arith.constant 1.000000e+00 : f32
    %35 = vector.broadcast %cst_24 : f32 to vector<16x128xf32>
    %36 = arith.addf %35, %34 : vector<16x128xf32>
    %37 = arith.divf %35, %36 : vector<16x128xf32>
    %c0_25 = arith.constant 0 : index
    %c0_26 = arith.constant 0 : index
    %c0_27 = arith.constant 0 : index
    %38 = vector.load %arg6[%c0_25, %c0_26, %c0_27] : memref<2x8x128xf32, #tpu.memory_space<vmem>>, vector<2x8x128xf32>
    %39 = vector.shape_cast %38 : vector<2x8x128xf32> to vector<16x128xf32>
    %40 = arith.mulf %39, %37 : vector<16x128xf32>
    %41 = vector.shape_cast %40 : vector<16x128xf32> to vector<2x8x128xf32>
    %42 = arith.truncf %41 : vector<2x8x128xf32> to vector<2x8x128xbf16>
    %c0_28 = arith.constant 0 : index
    %c1_29 = arith.constant 1 : index
    %c0_30 = arith.constant 0 : index
    %43 = vector.load %arg8[%c0_28, %c1_29, %c0_30] : memref<2x10x128xbf16, #tpu.memory_space<vmem>>, vector<2x8x128xbf16>
    tpu.vector_store %arg8[%c0_28, %c1_29, %c0_30], %42 {strides = array<i32>} : memref<2x10x128xbf16, #tpu.memory_space<vmem>>, vector<2x8x128xbf16>,
    %44 = vector.extract_strided_slice %4 {offsets = [0, 256], sizes = [16, 128], strides = [1, 1]} : vector<16x384xf32> to vector<16x128xf32>
    %c0_31 = arith.constant 0 : index
    %c0_32 = arith.constant 0 : index
    %c0_33 = arith.constant 0 : index
    %45 = vector.load %arg8[%c0_31, %c0_32, %c0_33] : memref<2x10x128xbf16, #tpu.memory_space<vmem>>, vector<2x8x128xbf16>
    %46 = vector.shape_cast %45 : vector<2x8x128xbf16> to vector<16x128xbf16>
    %c0_34 = arith.constant 0 : index
    %c0_35 = arith.constant 0 : index
    %c0_36 = arith.constant 0 : index
    %47 = vector.load %arg4[%c0_34, %c0_35, %c0_36] : memref<3x128x128xbf16, #tpu.memory_space<vmem>>, vector<1x128x128xbf16>
    %48 = vector.shape_cast %47 : vector<1x128x128xbf16> to vector<128x128xbf16>
    %cst_37 = arith.constant dense<0.000000e+00> : vector<16x128xf32>
    %49 = tpu.matmul %46, %48, %cst_37 {dimension_numbers = #tpu.dot_dimension_numbers<[1], [0], [0], [1], [0, 0, 1, 1], [], []>} : vector<16x128xbf16>, vector<128x128xbf16>, vector<16x128xf32> -> vector<16x128xf32>
    %50 = arith.addf %44, %49 : vector<16x128xf32>
    %c0_38 = arith.constant 0 : index
    %c1_39 = arith.constant 1 : index
    %c0_40 = arith.constant 0 : index
    %51 = vector.load %arg8[%c0_38, %c1_39, %c0_40] : memref<2x10x128xbf16, #tpu.memory_space<vmem>>, vector<2x8x128xbf16>
    %52 = vector.shape_cast %51 : vector<2x8x128xbf16> to vector<16x128xbf16>
    %c1_41 = arith.constant 1 : index
    %c0_42 = arith.constant 0 : index
    %c0_43 = arith.constant 0 : index
    %53 = vector.load %arg4[%c1_41, %c0_42, %c0_43] : memref<3x128x128xbf16, #tpu.memory_space<vmem>>, vector<1x128x128xbf16>
    %54 = vector.shape_cast %53 : vector<1x128x128xbf16> to vector<128x128xbf16>
    %cst_44 = arith.constant dense<0.000000e+00> : vector<16x128xf32>
    %55 = tpu.matmul %52, %54, %cst_44 {dimension_numbers = #tpu.dot_dimension_numbers<[1], [0], [0], [1], [0, 0, 1, 1], [], []>} : vector<16x128xbf16>, vector<128x128xbf16>, vector<16x128xf32> -> vector<16x128xf32>
    %56 = arith.addf %50, %55 : vector<16x128xf32>
    %c0_45 = arith.constant 0 : index
    %c2_46 = arith.constant 2 : index
    %c0_47 = arith.constant 0 : index
    %57 = vector.load %arg8[%c0_45, %c2_46, %c0_47] : memref<2x10x128xbf16, #tpu.memory_space<vmem>>, vector<2x8x128xbf16>
    %58 = vector.shape_cast %57 : vector<2x8x128xbf16> to vector<16x128xbf16>
    %c2_48 = arith.constant 2 : index
    %c0_49 = arith.constant 0 : index
    %c0_50 = arith.constant 0 : index
    %59 = vector.load %arg4[%c2_48, %c0_49, %c0_50] : memref<3x128x128xbf16, #tpu.memory_space<vmem>>, vector<1x128x128xbf16>
    %60 = vector.shape_cast %59 : vector<1x128x128xbf16> to vector<128x128xbf16>
    %cst_51 = arith.constant dense<0.000000e+00> : vector<16x128xf32>
    %61 = tpu.matmul %58, %60, %cst_51 {dimension_numbers = #tpu.dot_dimension_numbers<[1], [0], [0], [1], [0, 0, 1, 1], [], []>} : vector<16x128xbf16>, vector<128x128xbf16>, vector<16x128xf32> -> vector<16x128xf32>
    %62 = arith.addf %56, %61 : vector<16x128xf32>
    %63 = math.tanh %62 : vector<16x128xf32>
    %cst_52 = arith.constant 1.000000e+00 : f32
    %64 = vector.broadcast %cst_52 : f32 to vector<16x128xf32>
    %65 = arith.subf %64, %31 : vector<16x128xf32>
    %66 = arith.mulf %39, %65 : vector<16x128xf32>
    %67 = arith.mulf %63, %31 : vector<16x128xf32>
    %68 = arith.addf %66, %67 : vector<16x128xf32>
    %69 = vector.shape_cast %68 : vector<16x128xf32> to vector<2x8x128xf32>
    %70 = vector.shape_cast %69 : vector<2x8x128xf32> to vector<2x1x8x128xf32>
    %71 = arith.truncf %70 : vector<2x1x8x128xf32> to vector<2x1x8x128xbf16>
    %c0_53 = arith.constant 0 : index
    %c0_54 = arith.constant 0 : index
    %c0_55 = arith.constant 0 : index
    %c0_56 = arith.constant 0 : index
    %72 = vector.load %arg5[%c0_53, %c0_54, %c0_55, %c0_56] : memref<2x1x8x128xbf16, #tpu.memory_space<vmem>>, vector<2x1x8x128xbf16>
    tpu.vector_store %arg5[%c0_53, %c0_54, %c0_55, %c0_56], %71 {strides = array<i32>} : memref<2x1x8x128xbf16, #tpu.memory_space<vmem>>, vector<2x1x8x128xbf16>,
    %c0_57 = arith.constant 0 : index
    %c0_58 = arith.constant 0 : index
    %c0_59 = arith.constant 0 : index
    %73 = vector.load %arg6[%c0_57, %c0_58, %c0_59] : memref<2x8x128xf32, #tpu.memory_space<vmem>>, vector<2x8x128xf32>
    tpu.vector_store %arg6[%c0_57, %c0_58, %c0_59], %69 {strides = array<i32>} : memref<2x8x128xf32, #tpu.memory_space<vmem>>, vector<2x8x128xf32>,
    %74 = arith.truncf %69 : vector<2x8x128xf32> to vector<2x8x128xbf16>
    %c0_60 = arith.constant 0 : index
    %c1_61 = arith.constant 1 : index
    %c0_62 = arith.constant 0 : index
    %75 = vector.load %arg7[%c0_60, %c1_61, %c0_62] : memref<2x10x128xbf16, #tpu.memory_space<vmem>>, vector<2x8x128xbf16>
    tpu.vector_store %arg7[%c0_60, %c1_61, %c0_62], %74 {strides = array<i32>} : memref<2x10x128xbf16, #tpu.memory_space<vmem>>, vector<2x8x128xbf16>,
    return
  }
  func.func @transform_0(%arg0: i32) -> (i32, i32, i32, i32) {
    %c0_i32 = arith.constant 0 : i32
    %c0_i32_0 = arith.constant 0 : i32
    %c0_i32_1 = arith.constant 0 : i32
    %c0_i32_2 = arith.constant 0 : i32
    return %c0_i32, %arg0, %c0_i32_0, %c0_i32_1 : i32, i32, i32, i32
  }
  func.func @transform_1(%arg0: i32) -> (i32, i32, i32) {
    %c0_i32 = arith.constant 0 : i32
    %c0_i32_0 = arith.constant 0 : i32
    %c0_i32_1 = arith.constant 0 : i32
    %c0_i32_2 = arith.constant 0 : i32
    return %c0_i32, %c0_i32_0, %c0_i32_1 : i32, i32, i32
  }
  func.func @transform_2(%arg0: i32) -> (i32, i32, i32) {
    %c0_i32 = arith.constant 0 : i32
    %c0_i32_0 = arith.constant 0 : i32
    %c0_i32_1 = arith.constant 0 : i32
    %c0_i32_2 = arith.constant 0 : i32
    return %c0_i32, %c0_i32_0, %c0_i32_1 : i32, i32, i32
  }
  func.func @transform_3(%arg0: i32) -> (i32, i32, i32) {
    %c0_i32 = arith.constant 0 : i32
    %c0_i32_0 = arith.constant 0 : i32
    %c0_i32_1 = arith.constant 0 : i32
    %c0_i32_2 = arith.constant 0 : i32
    return %c0_i32, %c0_i32_0, %c0_i32_1 : i32, i32, i32
  }
  func.func @transform_4(%arg0: i32) -> (i32, i32, i32, i32) {
    %c0_i32 = arith.constant 0 : i32
    %c0_i32_0 = arith.constant 0 : i32
    %c0_i32_1 = arith.constant 0 : i32
    %c0_i32_2 = arith.constant 0 : i32
    return %c0_i32, %arg0, %c0_i32_0, %c0_i32_1 : i32, i32, i32, i32
  }
}

module attributes {stable_mosaic.version = 11 : i64} {
  func.func @kernel(%arg0: i32, %arg1: memref<2x1x8x384xf32, #tpu.memory_space<vmem>>, %arg2: memref<2x8x128xf32, #tpu.memory_space<vmem>>, %arg3: memref<3x128x256xbf16, #tpu.memory_space<vmem>>, %arg4: memref<3x128x128xbf16, #tpu.memory_space<vmem>>, %arg5: memref<2x1x8x128xf32, #tpu.memory_space<vmem>>, %arg6: memref<2x8x128xf32, #tpu.memory_space<vmem>>, %arg7: memref<2x10x128xbf16, #tpu.memory_space<vmem>>, %arg8: memref<2x10x128xbf16, #tpu.memory_space<vmem>>) attributes {dimension_semantics = [#tpu.dimension_semantics<arbitrary>], iteration_bounds = array<i64: 3>, scalar_prefetch = 0 : i64, scratch_operands = 3 : i64, tpu.core_type = #tpu.core_type<tc>, window_params = [{transform_indices = @transform_0, window_bounds = array<i64: 2, 1, 8, 384>}, {pipeline_mode = #tpu.pipeline_mode<synchronous>, transform_indices = @transform_1, window_bounds = array<i64: 2, 8, 128>}, {pipeline_mode = #tpu.pipeline_mode<synchronous>, transform_indices = @transform_2, window_bounds = array<i64: 3, 128, 256>}, {pipeline_mode = #tpu.pipeline_mode<synchronous>, transform_indices = @transform_3, window_bounds = array<i64: 3, 128, 128>}, {transform_indices = @transform_4, window_bounds = array<i64: 2, 1, 8, 128>}]} {
    %c0_i32 = arith.constant 0 : i32
    %0 = arith.cmpi eq, %arg0, %c0_i32 : i32
    %1 = arith.extui %0 : i1 to i32
    %c0_i32_0 = arith.constant 0 : i32
    %2 = arith.cmpi ne, %1, %c0_i32_0 : i32
    scf.if %2 {
      %cst_63 = arith.constant 0.000000e+00 : bf16
      %75 = vector.broadcast %cst_63 : bf16 to vector<2x1x128xbf16>
      %c0_64 = arith.constant 0 : index
      %c0_65 = arith.constant 0 : index
      %c0_66 = arith.constant 0 : index
      %76 = vector.load %arg7[%c0_64, %c0_65, %c0_66] : memref<2x10x128xbf16, #tpu.memory_space<vmem>>, vector<2x1x128xbf16>
      tpu.vector_store %arg7[%c0_64, %c0_65, %c0_66], %75 {strides = array<i32>} : memref<2x10x128xbf16, #tpu.memory_space<vmem>>, vector<2x1x128xbf16>,
      %c0_67 = arith.constant 0 : index
      %c9 = arith.constant 9 : index
      %c0_68 = arith.constant 0 : index
      %77 = vector.load %arg7[%c0_67, %c9, %c0_68] : memref<2x10x128xbf16, #tpu.memory_space<vmem>>, vector<2x1x128xbf16>
      tpu.vector_store %arg7[%c0_67, %c9, %c0_68], %75 {strides = array<i32>} : memref<2x10x128xbf16, #tpu.memory_space<vmem>>, vector<2x1x128xbf16>,
      %c0_69 = arith.constant 0 : index
      %c0_70 = arith.constant 0 : index
      %c0_71 = arith.constant 0 : index
      %78 = vector.load %arg8[%c0_69, %c0_70, %c0_71] : memref<2x10x128xbf16, #tpu.memory_space<vmem>>, vector<2x1x128xbf16>
      tpu.vector_store %arg8[%c0_69, %c0_70, %c0_71], %75 {strides = array<i32>} : memref<2x10x128xbf16, #tpu.memory_space<vmem>>, vector<2x1x128xbf16>,
      %c0_72 = arith.constant 0 : index
      %c9_73 = arith.constant 9 : index
      %c0_74 = arith.constant 0 : index
      %79 = vector.load %arg8[%c0_72, %c9_73, %c0_74] : memref<2x10x128xbf16, #tpu.memory_space<vmem>>, vector<2x1x128xbf16>
      tpu.vector_store %arg8[%c0_72, %c9_73, %c0_74], %75 {strides = array<i32>} : memref<2x10x128xbf16, #tpu.memory_space<vmem>>, vector<2x1x128xbf16>,
      %c0_75 = arith.constant 0 : index
      %c0_76 = arith.constant 0 : index
      %c0_77 = arith.constant 0 : index
      %80 = vector.load %arg2[%c0_75, %c0_76, %c0_77] : memref<2x8x128xf32, #tpu.memory_space<vmem>>, vector<2x8x128xf32>
      %c0_78 = arith.constant 0 : index
      %c0_79 = arith.constant 0 : index
      %c0_80 = arith.constant 0 : index
      %81 = vector.load %arg6[%c0_78, %c0_79, %c0_80] : memref<2x8x128xf32, #tpu.memory_space<vmem>>, vector<2x8x128xf32>
      tpu.vector_store %arg6[%c0_78, %c0_79, %c0_80], %80 {strides = array<i32>} : memref<2x8x128xf32, #tpu.memory_space<vmem>>, vector<2x8x128xf32>,
      %c0_81 = arith.constant 0 : index
      %c0_82 = arith.constant 0 : index
      %c0_83 = arith.constant 0 : index
      %82 = vector.load %arg2[%c0_81, %c0_82, %c0_83] : memref<2x8x128xf32, #tpu.memory_space<vmem>>, vector<2x8x128xf32>
      %83 = arith.truncf %82 : vector<2x8x128xf32> to vector<2x8x128xbf16>
      %c0_84 = arith.constant 0 : index
      %c1_85 = arith.constant 1 : index
      %c0_86 = arith.constant 0 : index
      %84 = vector.load %arg7[%c0_84, %c1_85, %c0_86] : memref<2x10x128xbf16, #tpu.memory_space<vmem>>, vector<2x8x128xbf16>
      tpu.vector_store %arg7[%c0_84, %c1_85, %c0_86], %83 {strides = array<i32>} : memref<2x10x128xbf16, #tpu.memory_space<vmem>>, vector<2x8x128xbf16>,
    } else {
    }
    %c0 = arith.constant 0 : index
    %c0_1 = arith.constant 0 : index
    %c0_2 = arith.constant 0 : index
    %c0_3 = arith.constant 0 : index
    %3 = vector.load %arg1[%c0, %c0_1, %c0_2, %c0_3] : memref<2x1x8x384xf32, #tpu.memory_space<vmem>>, vector<2x1x8x384xf32>
    %4 = vector.shape_cast %3 : vector<2x1x8x384xf32> to vector<16x384xf32>
    %cst = arith.constant 0.000000e+00 : f32
    %5 = vector.broadcast %cst : f32 to vector<16x256xf32>
    %c0_4 = arith.constant 0 : index
    %c0_5 = arith.constant 0 : index
    %c0_6 = arith.constant 0 : index
    %6 = vector.load %arg7[%c0_4, %c0_5, %c0_6] : memref<2x10x128xbf16, #tpu.memory_space<vmem>>, vector<2x8x128xbf16>
    %7 = vector.shape_cast %6 : vector<2x8x128xbf16> to vector<16x128xbf16>
    %c0_7 = arith.constant 0 : index
    %c0_8 = arith.constant 0 : index
    %c0_9 = arith.constant 0 : index
    %8 = vector.load %arg3[%c0_7, %c0_8, %c0_9] : memref<3x128x256xbf16, #tpu.memory_space<vmem>>, vector<1x128x256xbf16>
    %9 = vector.shape_cast %8 : vector<1x128x256xbf16> to vector<128x256xbf16>
    %cst_10 = arith.constant dense<0.000000e+00> : vector<16x256xf32>
    %10 = tpu.matmul %7, %9, %cst_10 {dimension_numbers = #tpu.dot_dimension_numbers<[1], [0], [0], [1], [0, 0, 1, 1], [], []>} : vector<16x128xbf16>, vector<128x256xbf16>, vector<16x256xf32> -> vector<16x256xf32>
    %11 = arith.addf %5, %10 : vector<16x256xf32>
    %c0_11 = arith.constant 0 : index
    %c1 = arith.constant 1 : index
    %c0_12 = arith.constant 0 : index
    %12 = vector.load %arg7[%c0_11, %c1, %c0_12] : memref<2x10x128xbf16, #tpu.memory_space<vmem>>, vector<2x8x128xbf16>
    %13 = vector.shape_cast %12 : vector<2x8x128xbf16> to vector<16x128xbf16>
    %c1_13 = arith.constant 1 : index
    %c0_14 = arith.constant 0 : index
    %c0_15 = arith.constant 0 : index
    %14 = vector.load %arg3[%c1_13, %c0_14, %c0_15] : memref<3x128x256xbf16, #tpu.memory_space<vmem>>, vector<1x128x256xbf16>
    %15 = vector.shape_cast %14 : vector<1x128x256xbf16> to vector<128x256xbf16>
    %cst_16 = arith.constant dense<0.000000e+00> : vector<16x256xf32>
    %16 = tpu.matmul %13, %15, %cst_16 {dimension_numbers = #tpu.dot_dimension_numbers<[1], [0], [0], [1], [0, 0, 1, 1], [], []>} : vector<16x128xbf16>, vector<128x256xbf16>, vector<16x256xf32> -> vector<16x256xf32>
    %17 = arith.addf %11, %16 : vector<16x256xf32>
    %c0_17 = arith.constant 0 : index
    %c2 = arith.constant 2 : index
    %c0_18 = arith.constant 0 : index
    %18 = vector.load %arg7[%c0_17, %c2, %c0_18] : memref<2x10x128xbf16, #tpu.memory_space<vmem>>, vector<2x8x128xbf16>
    %19 = vector.shape_cast %18 : vector<2x8x128xbf16> to vector<16x128xbf16>
    %c2_19 = arith.constant 2 : index
    %c0_20 = arith.constant 0 : index
    %c0_21 = arith.constant 0 : index
    %20 = vector.load %arg3[%c2_19, %c0_20, %c0_21] : memref<3x128x256xbf16, #tpu.memory_space<vmem>>, vector<1x128x256xbf16>
    %21 = vector.shape_cast %20 : vector<1x128x256xbf16> to vector<128x256xbf16>
    %cst_22 = arith.constant dense<0.000000e+00> : vector<16x256xf32>
    %22 = tpu.matmul %19, %21, %cst_22 {dimension_numbers = #tpu.dot_dimension_numbers<[1], [0], [0], [1], [0, 0, 1, 1], [], []>} : vector<16x128xbf16>, vector<128x256xbf16>, vector<16x256xf32> -> vector<16x256xf32>
    %23 = arith.addf %17, %22 : vector<16x256xf32>
    %24 = vector.extract_strided_slice %4 {offsets = [0, 0], sizes = [16, 256], strides = [1, 1]} : vector<16x384xf32> to vector<16x256xf32>
    %25 = arith.addf %24, %23 : vector<16x256xf32>
    %26 = vector.extract_strided_slice %25 {offsets = [0, 0], sizes = [16, 128], strides = [1, 1]} : vector<16x256xf32> to vector<16x128xf32>
    %27 = arith.negf %26 : vector<16x128xf32>
    %28 = math.exp %27 : vector<16x128xf32>
    %cst_23 = arith.constant 1.000000e+00 : f32
    %29 = vector.broadcast %cst_23 : f32 to vector<16x128xf32>
    %30 = arith.addf %29, %28 : vector<16x128xf32>
    %31 = arith.divf %29, %30 : vector<16x128xf32>
    %32 = vector.extract_strided_slice %25 {offsets = [0, 128], sizes = [16, 128], strides = [1, 1]} : vector<16x256xf32> to vector<16x128xf32>
    %33 = arith.negf %32 : vector<16x128xf32>
    %34 = math.exp %33 : vector<16x128xf32>
    %cst_24 = arith.constant 1.000000e+00 : f32
    %35 = vector.broadcast %cst_24 : f32 to vector<16x128xf32>
    %36 = arith.addf %35, %34 : vector<16x128xf32>
    %37 = arith.divf %35, %36 : vector<16x128xf32>
    %c0_25 = arith.constant 0 : index
    %c0_26 = arith.constant 0 : index
    %c0_27 = arith.constant 0 : index
    %38 = vector.load %arg6[%c0_25, %c0_26, %c0_27] : memref<2x8x128xf32, #tpu.memory_space<vmem>>, vector<2x8x128xf32>
    %39 = vector.shape_cast %38 : vector<2x8x128xf32> to vector<16x128xf32>
    %40 = arith.mulf %39, %37 : vector<16x128xf32>
    %41 = vector.shape_cast %40 : vector<16x128xf32> to vector<2x8x128xf32>
    %42 = arith.truncf %41 : vector<2x8x128xf32> to vector<2x8x128xbf16>
    %c0_28 = arith.constant 0 : index
    %c1_29 = arith.constant 1 : index
    %c0_30 = arith.constant 0 : index
    %43 = vector.load %arg8[%c0_28, %c1_29, %c0_30] : memref<2x10x128xbf16, #tpu.memory_space<vmem>>, vector<2x8x128xbf16>
    tpu.vector_store %arg8[%c0_28, %c1_29, %c0_30], %42 {strides = array<i32>} : memref<2x10x128xbf16, #tpu.memory_space<vmem>>, vector<2x8x128xbf16>,
    %44 = vector.extract_strided_slice %4 {offsets = [0, 256], sizes = [16, 128], strides = [1, 1]} : vector<16x384xf32> to vector<16x128xf32>
    %c0_31 = arith.constant 0 : index
    %c0_32 = arith.constant 0 : index
    %c0_33 = arith.constant 0 : index
    %45 = vector.load %arg8[%c0_31, %c0_32, %c0_33] : memref<2x10x128xbf16, #tpu.memory_space<vmem>>, vector<2x8x128xbf16>
    %46 = vector.shape_cast %45 : vector<2x8x128xbf16> to vector<16x128xbf16>
    %c0_34 = arith.constant 0 : index
    %c0_35 = arith.constant 0 : index
    %c0_36 = arith.constant 0 : index
    %47 = vector.load %arg4[%c0_34, %c0_35, %c0_36] : memref<3x128x128xbf16, #tpu.memory_space<vmem>>, vector<1x128x128xbf16>
    %48 = vector.shape_cast %47 : vector<1x128x128xbf16> to vector<128x128xbf16>
    %cst_37 = arith.constant dense<0.000000e+00> : vector<16x128xf32>
    %49 = tpu.matmul %46, %48, %cst_37 {dimension_numbers = #tpu.dot_dimension_numbers<[1], [0], [0], [1], [0, 0, 1, 1], [], []>} : vector<16x128xbf16>, vector<128x128xbf16>, vector<16x128xf32> -> vector<16x128xf32>
    %50 = arith.addf %44, %49 : vector<16x128xf32>
    %c0_38 = arith.constant 0 : index
    %c1_39 = arith.constant 1 : index
    %c0_40 = arith.constant 0 : index
    %51 = vector.load %arg8[%c0_38, %c1_39, %c0_40] : memref<2x10x128xbf16, #tpu.memory_space<vmem>>, vector<2x8x128xbf16>
    %52 = vector.shape_cast %51 : vector<2x8x128xbf16> to vector<16x128xbf16>
    %c1_41 = arith.constant 1 : index
    %c0_42 = arith.constant 0 : index
    %c0_43 = arith.constant 0 : index
    %53 = vector.load %arg4[%c1_41, %c0_42, %c0_43] : memref<3x128x128xbf16, #tpu.memory_space<vmem>>, vector<1x128x128xbf16>
    %54 = vector.shape_cast %53 : vector<1x128x128xbf16> to vector<128x128xbf16>
    %cst_44 = arith.constant dense<0.000000e+00> : vector<16x128xf32>
    %55 = tpu.matmul %52, %54, %cst_44 {dimension_numbers = #tpu.dot_dimension_numbers<[1], [0], [0], [1], [0, 0, 1, 1], [], []>} : vector<16x128xbf16>, vector<128x128xbf16>, vector<16x128xf32> -> vector<16x128xf32>
    %56 = arith.addf %50, %55 : vector<16x128xf32>
    %c0_45 = arith.constant 0 : index
    %c2_46 = arith.constant 2 : index
    %c0_47 = arith.constant 0 : index
    %57 = vector.load %arg8[%c0_45, %c2_46, %c0_47] : memref<2x10x128xbf16, #tpu.memory_space<vmem>>, vector<2x8x128xbf16>
    %58 = vector.shape_cast %57 : vector<2x8x128xbf16> to vector<16x128xbf16>
    %c2_48 = arith.constant 2 : index
    %c0_49 = arith.constant 0 : index
    %c0_50 = arith.constant 0 : index
    %59 = vector.load %arg4[%c2_48, %c0_49, %c0_50] : memref<3x128x128xbf16, #tpu.memory_space<vmem>>, vector<1x128x128xbf16>
    %60 = vector.shape_cast %59 : vector<1x128x128xbf16> to vector<128x128xbf16>
    %cst_51 = arith.constant dense<0.000000e+00> : vector<16x128xf32>
    %61 = tpu.matmul %58, %60, %cst_51 {dimension_numbers = #tpu.dot_dimension_numbers<[1], [0], [0], [1], [0, 0, 1, 1], [], []>} : vector<16x128xbf16>, vector<128x128xbf16>, vector<16x128xf32> -> vector<16x128xf32>
    %62 = arith.addf %56, %61 : vector<16x128xf32>
    %63 = math.tanh %62 : vector<16x128xf32>
    %cst_52 = arith.constant 1.000000e+00 : f32
    %64 = vector.broadcast %cst_52 : f32 to vector<16x128xf32>
    %65 = arith.subf %64, %31 : vector<16x128xf32>
    %66 = arith.mulf %39, %65 : vector<16x128xf32>
    %67 = arith.mulf %63, %31 : vector<16x128xf32>
    %68 = arith.addf %66, %67 : vector<16x128xf32>
    %69 = vector.shape_cast %68 : vector<16x128xf32> to vector<2x8x128xf32>
    %70 = vector.shape_cast %69 : vector<2x8x128xf32> to vector<2x1x8x128xf32>
    %c0_53 = arith.constant 0 : index
    %c0_54 = arith.constant 0 : index
    %c0_55 = arith.constant 0 : index
    %c0_56 = arith.constant 0 : index
    %71 = vector.load %arg5[%c0_53, %c0_54, %c0_55, %c0_56] : memref<2x1x8x128xf32, #tpu.memory_space<vmem>>, vector<2x1x8x128xf32>
    tpu.vector_store %arg5[%c0_53, %c0_54, %c0_55, %c0_56], %70 {strides = array<i32>} : memref<2x1x8x128xf32, #tpu.memory_space<vmem>>, vector<2x1x8x128xf32>,
    %c0_57 = arith.constant 0 : index
    %c0_58 = arith.constant 0 : index
    %c0_59 = arith.constant 0 : index
    %72 = vector.load %arg6[%c0_57, %c0_58, %c0_59] : memref<2x8x128xf32, #tpu.memory_space<vmem>>, vector<2x8x128xf32>
    tpu.vector_store %arg6[%c0_57, %c0_58, %c0_59], %69 {strides = array<i32>} : memref<2x8x128xf32, #tpu.memory_space<vmem>>, vector<2x8x128xf32>,
    %73 = arith.truncf %69 : vector<2x8x128xf32> to vector<2x8x128xbf16>
    %c0_60 = arith.constant 0 : index
    %c1_61 = arith.constant 1 : index
    %c0_62 = arith.constant 0 : index
    %74 = vector.load %arg7[%c0_60, %c1_61, %c0_62] : memref<2x10x128xbf16, #tpu.memory_space<vmem>>, vector<2x8x128xbf16>
    tpu.vector_store %arg7[%c0_60, %c1_61, %c0_62], %73 {strides = array<i32>} : memref<2x10x128xbf16, #tpu.memory_space<vmem>>, vector<2x8x128xbf16>,
    return
  }
  func.func @transform_0(%arg0: i32) -> (i32, i32, i32, i32) {
    %c0_i32 = arith.constant 0 : i32
    %c0_i32_0 = arith.constant 0 : i32
    %c0_i32_1 = arith.constant 0 : i32
    %c0_i32_2 = arith.constant 0 : i32
    return %c0_i32, %arg0, %c0_i32_0, %c0_i32_1 : i32, i32, i32, i32
  }
  func.func @transform_1(%arg0: i32) -> (i32, i32, i32) {
    %c0_i32 = arith.constant 0 : i32
    %c0_i32_0 = arith.constant 0 : i32
    %c0_i32_1 = arith.constant 0 : i32
    %c0_i32_2 = arith.constant 0 : i32
    return %c0_i32, %c0_i32_0, %c0_i32_1 : i32, i32, i32
  }
  func.func @transform_2(%arg0: i32) -> (i32, i32, i32) {
    %c0_i32 = arith.constant 0 : i32
    %c0_i32_0 = arith.constant 0 : i32
    %c0_i32_1 = arith.constant 0 : i32
    %c0_i32_2 = arith.constant 0 : i32
    return %c0_i32, %c0_i32_0, %c0_i32_1 : i32, i32, i32
  }
  func.func @transform_3(%arg0: i32) -> (i32, i32, i32) {
    %c0_i32 = arith.constant 0 : i32
    %c0_i32_0 = arith.constant 0 : i32
    %c0_i32_1 = arith.constant 0 : i32
    %c0_i32_2 = arith.constant 0 : i32
    return %c0_i32, %c0_i32_0, %c0_i32_1 : i32, i32, i32
  }
  func.func @transform_4(%arg0: i32) -> (i32, i32, i32, i32) {
    %c0_i32 = arith.constant 0 : i32
    %c0_i32_0 = arith.constant 0 : i32
    %c0_i32_1 = arith.constant 0 : i32
    %c0_i32_2 = arith.constant 0 : i32
    return %c0_i32, %arg0, %c0_i32_0, %c0_i32_1 : i32, i32, i32, i32
  }
}

</mosaic_0001>

<llo_original>
// kernel: decoder_forward.4
$region0: #{decoder_forward.4}
  #allocation0 [shape = 'u32[]', space=smem, size = 0x4, offset = 0x4, fixed_abs, tag = 'smem constant byte address 0x4 - core index']
  #allocation1 [shape = 'u32[72,128]{1,0:T(1,128)}', space=vmem, size = 0x9000, scoped, tag = 'internal scratch']
  %s0 = inlined_call_operand.vmem [shape: bf16[2,3,10,128], index: 0, kind: input, shape index: {}]
  %s1 = inlined_call_operand.vmem [shape: bf16[3,128,384], index: 1, kind: input, shape index: {}]
  %s2 = inlined_call_operand.vmem [shape: f32[1,384], index: 2, kind: input, shape index: {}]
  %s3 = inlined_call_operand.vmem [shape: f32[2,3,8,384], index: 3, kind: output, shape index: {}]
  %s4 = sld [smem:[#allocation0]]
  $region22: #{decoder_forward.4} parent=0
    _
  %s6 = ssub.s32 1, %s4
  %s7 = scalar_select 0, %s6, %s4
  // Predicated region
  $region2: #{decoder_forward.4} parent=0 // pred_check
    _
  $region3: #{decoder_forward.4} parent=0 // pred_check_branch
    %9 = sbr.rel (0) target = $region5
  $region4: #{decoder_forward.4} parent=0 // pred_region
    _
  $region5: #{decoder_forward.4} parent=0 // pred_fallthru
    _
  // Predicated region
  $region6: #{decoder_forward.4} parent=0 // pred_check
    _
  $region7: #{decoder_forward.4} parent=0 // pred_check_branch
    %11 = sbr.rel (0) target = $region9
  $region8: #{decoder_forward.4} parent=0 // pred_region
    _
  $region9: #{decoder_forward.4} parent=0 // pred_fallthru
    _
  // Predicated region
  $region10: #{decoder_forward.4} parent=0 // pred_check
    _
  $region11: #{decoder_forward.4} parent=0 // pred_check_branch
    %13 = sbr.rel (0) target = $region13
  $region12: #{decoder_forward.4} parent=0 // pred_region
    _
  $region13: #{decoder_forward.4} parent=0 // pred_fallthru
    _
  %v14 = vld [vmem:[%s0] sm:$0xf]
  %v15 = vld [vmem:[%s0 + $0x8] sm:$0xf]
  %v16 = vld [vmem:[%s0 + $0x10] sm:$0xf]
  %v17 = vld [vmem:[%s0 + $0x18] sm:$0xf]
  %v18 = vld [vmem:[%s0 + $0x20] sm:$0xf]
  %v19 = vld [vmem:[%s0 + $0x28] sm:$0xf]
  %v20 = vld [vmem:[%s1] sm:$0xff]
  %v21 = vld [vmem:[%s1 + $0x8] sm:$0xf]
  %v22 = vld [vmem:[%s1 + $0xc] sm:$0xff]
  %v23 = vld [vmem:[%s1 + $0x14] sm:$0xf]
  %v24 = vld [vmem:[%s1 + $0x18] sm:$0xff]
  %v25 = vld [vmem:[%s1 + $0x20] sm:$0xf]
  %v26 = vld [vmem:[%s1 + $0x24] sm:$0xff]
  %v27 = vld [vmem:[%s1 + $0x2c] sm:$0xf]
  %v28 = vld [vmem:[%s1 + $0x30] sm:$0xff]
  %v29 = vld [vmem:[%s1 + $0x38] sm:$0xf]
  %v30 = vld [vmem:[%s1 + $0x3c] sm:$0xff]
  %v31 = vld [vmem:[%s1 + $0x44] sm:$0xf]
  %v32 = vld [vmem:[%s1 + $0x48] sm:$0xff]
  %v33 = vld [vmem:[%s1 + $0x50] sm:$0xf]
  %v34 = vld [vmem:[%s1 + $0x54] sm:$0xff]
  %v35 = vld [vmem:[%s1 + $0x5c] sm:$0xf]
  %v36 = vld [vmem:[%s1 + $0x60] sm:$0xff]
  %v37 = vld [vmem:[%s1 + $0x68] sm:$0xf]
  %v38 = vld [vmem:[%s1 + $0x6c] sm:$0xff]
  %v39 = vld [vmem:[%s1 + $0x74] sm:$0xf]
  %v40 = vld [vmem:[%s1 + $0x78] sm:$0xff]
  %v41 = vld [vmem:[%s1 + $0x80] sm:$0xf]
  %v42 = vld [vmem:[%s1 + $0x84] sm:$0xff]
  %v43 = vld [vmem:[%s1 + $0x8c] sm:$0xf]
  %v44 = vld [vmem:[%s1 + $0x90] sm:$0xff]
  %v45 = vld [vmem:[%s1 + $0x98] sm:$0xf]
  %v46 = vld [vmem:[%s1 + $0x9c] sm:$0xff]
  %v47 = vld [vmem:[%s1 + $0xa4] sm:$0xf]
  %v48 = vld [vmem:[%s1 + $0xa8] sm:$0xff]
  %v49 = vld [vmem:[%s1 + $0xb0] sm:$0xf]
  %v50 = vld [vmem:[%s1 + $0xb4] sm:$0xff]
  %v51 = vld [vmem:[%s1 + $0xbc] sm:$0xf]
  %v52 = vld [vmem:[%s0 + $0x4] sm:$0x1]
  %v53 = vld [vmem:[%s0 + $0xc] sm:$0x1]
  %v54 = vld [vmem:[%s0 + $0x14] sm:$0x1]
  %v55 = vld [vmem:[%s0 + $0x1c] sm:$0x1]
  %v56 = vld [vmem:[%s0 + $0x24] sm:$0x1]
  %v57 = vld [vmem:[%s0 + $0x2c] sm:$0x1]
  %vm58 = vsmask.f32 3328
  %vm59 = vsmask.f32 7440
  %vm60 = vmor %vm58, %vm59
  %v62 = vshrl.u32 %v14, 16
  %v64 = vrot.slane %v62, 4
  %v65 = vshll.u32 %v14, 16
  %v67 = vrot.slane %v65, 5
  %v68 = vor.u32 %v64, %v67
  %v69 = vrot.slane %v68, 4
  %v71 = vshll.u32 %v52, 16
  %v73 = vrot.slane %v71, 5
  %v74 = vsel %vm60, %v69, %v73
  %v76 = vshrl.u32 %v15, 16
  %v78 = vrot.slane %v76, 4
  %v79 = vshll.u32 %v15, 16
  %v81 = vrot.slane %v79, 5
  %v82 = vor.u32 %v78, %v81
  %v83 = vrot.slane %v82, 4
  %v85 = vshll.u32 %v53, 16
  %v87 = vrot.slane %v85, 5
  %v88 = vsel %vm60, %v83, %v87
  %v90 = vshrl.u32 %v16, 16
  %v92 = vrot.slane %v90, 4
  %v93 = vshll.u32 %v16, 16
  %v95 = vrot.slane %v93, 5
  %v96 = vor.u32 %v92, %v95
  %v97 = vrot.slane %v96, 4
  %v99 = vshll.u32 %v54, 16
  %v101 = vrot.slane %v99, 5
  %v102 = vsel %vm60, %v97, %v101
  %v104 = vshrl.u32 %v17, 16
  %v106 = vrot.slane %v104, 4
  %v107 = vshll.u32 %v17, 16
  %v109 = vrot.slane %v107, 5
  %v110 = vor.u32 %v106, %v109
  %v111 = vrot.slane %v110, 4
  %v113 = vshll.u32 %v55, 16
  %v115 = vrot.slane %v113, 5
  %v116 = vsel %vm60, %v111, %v115
  %v118 = vshrl.u32 %v18, 16
  %v120 = vrot.slane %v118, 4
  %v121 = vshll.u32 %v18, 16
  %v123 = vrot.slane %v121, 5
  %v124 = vor.u32 %v120, %v123
  %v125 = vrot.slane %v124, 4
  %v127 = vshll.u32 %v56, 16
  %v129 = vrot.slane %v127, 5
  %v130 = vsel %vm60, %v125, %v129
  %v132 = vshrl.u32 %v19, 16
  %v134 = vrot.slane %v132, 4
  %v135 = vshll.u32 %v19, 16
  %v137 = vrot.slane %v135, 5
  %v138 = vor.u32 %v134, %v137
  %v139 = vrot.slane %v138, 4
  %v141 = vshll.u32 %v57, 16
  %v143 = vrot.slane %v141, 5
  %v144 = vsel %vm60, %v139, %v143
  %s145 = scalar_lea.vmem %s1, 192
  %v146 = vld [vmem:[%s145] sm:$0xff]
  %v147 = vld [vmem:[%s145 + $0x8] sm:$0xf]
  %v148 = vld [vmem:[%s145 + $0xc] sm:$0xff]
  %v149 = vld [vmem:[%s145 + $0x14] sm:$0xf]
  %v150 = vld [vmem:[%s145 + $0x18] sm:$0xff]
  %v151 = vld [vmem:[%s145 + $0x20] sm:$0xf]
  %v152 = vld [vmem:[%s145 + $0x24] sm:$0xff]
  %v153 = vld [vmem:[%s145 + $0x2c] sm:$0xf]
  %v154 = vld [vmem:[%s145 + $0x30] sm:$0xff]
  %v155 = vld [vmem:[%s145 + $0x38] sm:$0xf]
  %v156 = vld [vmem:[%s145 + $0x3c] sm:$0xff]
  %v157 = vld [vmem:[%s145 + $0x44] sm:$0xf]
  %v158 = vld [vmem:[%s145 + $0x48] sm:$0xff]
  %v159 = vld [vmem:[%s145 + $0x50] sm:$0xf]
  %v160 = vld [vmem:[%s145 + $0x54] sm:$0xff]
  %v161 = vld [vmem:[%s145 + $0x5c] sm:$0xf]
  %v162 = vld [vmem:[%s145 + $0x60] sm:$0xff]
  %v163 = vld [vmem:[%s145 + $0x68] sm:$0xf]
  %v164 = vld [vmem:[%s145 + $0x6c] sm:$0xff]
  %v165 = vld [vmem:[%s145 + $0x74] sm:$0xf]
  %v166 = vld [vmem:[%s145 + $0x78] sm:$0xff]
  %v167 = vld [vmem:[%s145 + $0x80] sm:$0xf]
  %v168 = vld [vmem:[%s145 + $0x84] sm:$0xff]
  %v169 = vld [vmem:[%s145 + $0x8c] sm:$0xf]
  %v170 = vld [vmem:[%s145 + $0x90] sm:$0xff]
  %v171 = vld [vmem:[%s145 + $0x98] sm:$0xf]
  %v172 = vld [vmem:[%s145 + $0x9c] sm:$0xff]
  %v173 = vld [vmem:[%s145 + $0xa4] sm:$0xf]
  %v174 = vld [vmem:[%s145 + $0xa8] sm:$0xff]
  %v175 = vld [vmem:[%s145 + $0xb0] sm:$0xf]
  %v176 = vld [vmem:[%s145 + $0xb4] sm:$0xff]
  %v177 = vld [vmem:[%s145 + $0xbc] sm:$0xf]
  %v178 = vunpack.c.l.b16 %v74
  %v179 = vunpack.c.l.b16 %v88
  %v180 = vunpack.c.l.b16 %v102
  %v181 = vunpack.c.l.b16 %v116
  %v182 = vunpack.c.l.b16 %v130
  %v183 = vunpack.c.l.b16 %v144
  %v184 = vpack.c.b16 %v179, %v178
  %v185 = vpack.c.b16 %v181, %v180
  %v186 = vpack.c.b16 %v183, %v182
  %v222 = vunpack.c.l.b16 %v146
  %v223 = vunpack.c.h.b16 %v146
  %v224 = vunpack.c.l.b16 %v147
  %v225 = vunpack.c.l.b16 %v148
  %v226 = vunpack.c.h.b16 %v148
  %v227 = vunpack.c.l.b16 %v149
  %v228 = vunpack.c.l.b16 %v150
  %v229 = vunpack.c.h.b16 %v150
  %v230 = vunpack.c.l.b16 %v151
  %v231 = vunpack.c.l.b16 %v152
  %v232 = vunpack.c.h.b16 %v152
  %v233 = vunpack.c.l.b16 %v153
  %v234 = vunpack.c.l.b16 %v154
  %v235 = vunpack.c.h.b16 %v154
  %v236 = vunpack.c.l.b16 %v155
  %v237 = vunpack.c.l.b16 %v156
  %v238 = vunpack.c.h.b16 %v156
  %v239 = vunpack.c.l.b16 %v157
  %v240 = vunpack.c.l.b16 %v158
  %v241 = vunpack.c.h.b16 %v158
  %v242 = vunpack.c.l.b16 %v159
  %v243 = vunpack.c.l.b16 %v160
  %v244 = vunpack.c.h.b16 %v160
  %v245 = vunpack.c.l.b16 %v161
  %v246 = vunpack.c.l.b16 %v162
  %v247 = vunpack.c.h.b16 %v162
  %v248 = vunpack.c.l.b16 %v163
  %v249 = vunpack.c.l.b16 %v164
  %v250 = vunpack.c.h.b16 %v164
  %v251 = vunpack.c.l.b16 %v165
  %v252 = vunpack.c.l.b16 %v166
  %v253 = vunpack.c.h.b16 %v166
  %v254 = vunpack.c.l.b16 %v167
  %v255 = vunpack.c.l.b16 %v168
  %v256 = vunpack.c.h.b16 %v168
  %v257 = vunpack.c.l.b16 %v169
  %v258 = vunpack.c.l.b16 %v170
  %v259 = vunpack.c.h.b16 %v170
  %v260 = vunpack.c.l.b16 %v171
  %v261 = vunpack.c.l.b16 %v172
  %v262 = vunpack.c.h.b16 %v172
  %v263 = vunpack.c.l.b16 %v173
  %v264 = vunpack.c.l.b16 %v174
  %v265 = vunpack.c.h.b16 %v174
  %v266 = vunpack.c.l.b16 %v175
  %v267 = vunpack.c.l.b16 %v176
  %v268 = vunpack.c.h.b16 %v176
  %v269 = vunpack.c.l.b16 %v177
  %v270 = vpack.c.b16 %v225, %v222
  %v271 = vpack.c.b16 %v226, %v223
  %v272 = vpack.c.b16 %v227, %v224
  %v273 = vpack.c.b16 %v231, %v228
  %v274 = vpack.c.b16 %v232, %v229
  %v275 = vpack.c.b16 %v233, %v230
  %v276 = vpack.c.b16 %v237, %v234
  %v277 = vpack.c.b16 %v238, %v235
  %v278 = vpack.c.b16 %v239, %v236
  %v279 = vpack.c.b16 %v243, %v240
  %v280 = vpack.c.b16 %v244, %v241
  %v281 = vpack.c.b16 %v245, %v242
  %v282 = vpack.c.b16 %v249, %v246
  %v283 = vpack.c.b16 %v250, %v247
  %v284 = vpack.c.b16 %v251, %v248
  %v285 = vpack.c.b16 %v255, %v252
  %v286 = vpack.c.b16 %v256, %v253
  %v287 = vpack.c.b16 %v257, %v254
  %v288 = vpack.c.b16 %v261, %v258
  %v289 = vpack.c.b16 %v262, %v259
  %v290 = vpack.c.b16 %v263, %v260
  %v291 = vpack.c.b16 %v267, %v264
  %v292 = vpack.c.b16 %v268, %v265
  %v293 = vpack.c.b16 %v269, %v266
  %318 = vmatpush.bf16.msra.mxu0 %v291
  %319 = vmatpush.bf16.msra.mxu0 %v288
  %320 = vmatpush.bf16.msra.mxu0 %v285
  %321 = vmatpush.bf16.msra.mxu0 %v282
  %322 = vmatpush.bf16.msra.mxu0 %v279
  %323 = vmatpush.bf16.msra.mxu0 %v276
  %324 = vmatpush.bf16.msra.mxu0 %v273
  %325 = vmatpush.bf16.msra.mxu0 %v270
  %326 = vmatmul.bf16.gmra.mxu0 %v184
  %v327 = vpop.f32.mrf.mxu0
  %v328 = vadd.f32 0.0, %v327
  %v329 = vpop.f32.mrf.mxu0
  %v330 = vadd.f32 0.0, %v329
  %331 = vmatmul.bf16.gmra.mxu0 %v185
  %v332 = vpop.f32.mrf.mxu0
  %v333 = vadd.f32 0.0, %v332
  %v334 = vpop.f32.mrf.mxu0
  %v335 = vadd.f32 0.0, %v334
  %336 = vmatmul.bf16.gmra.mxu0 %v186
  %v337 = vpop.f32.mrf.mxu0
  %v338 = vadd.f32 0.0, %v337
  %v339 = vpop.f32.mrf.mxu0
  %v340 = vadd.f32 0.0, %v339
  %341 = vdwg.mxu0
  %342 = vmatpush.bf16.msra.mxu0 %v292
  %343 = vmatpush.bf16.msra.mxu0 %v289
  %344 = vmatpush.bf16.msra.mxu0 %v286
  %345 = vmatpush.bf16.msra.mxu0 %v283
  %346 = vmatpush.bf16.msra.mxu0 %v280
  %347 = vmatpush.bf16.msra.mxu0 %v277
  %348 = vmatpush.bf16.msra.mxu0 %v274
  %349 = vmatpush.bf16.msra.mxu0 %v271
  %350 = vmatmul.bf16.gmra.mxu0 %v184
  %v351 = vpop.f32.mrf.mxu0
  %v352 = vadd.f32 0.0, %v351
  %v353 = vpop.f32.mrf.mxu0
  %v354 = vadd.f32 0.0, %v353
  %355 = vmatmul.bf16.gmra.mxu0 %v185
  %v356 = vpop.f32.mrf.mxu0
  %v357 = vadd.f32 0.0, %v356
  %v358 = vpop.f32.mrf.mxu0
  %v359 = vadd.f32 0.0, %v358
  %360 = vmatmul.bf16.gmra.mxu0 %v186
  %v361 = vpop.f32.mrf.mxu0
  %v362 = vadd.f32 0.0, %v361
  %v363 = vpop.f32.mrf.mxu0
  %v364 = vadd.f32 0.0, %v363
  %365 = vdwg.mxu0
  %366 = vmatpush.bf16.msra.mxu0 %v293
  %367 = vmatpush.bf16.msra.mxu0 %v290
  %368 = vmatpush.bf16.msra.mxu0 %v287
  %369 = vmatpush.bf16.msra.mxu0 %v284
  %370 = vmatpush.bf16.msra.mxu0 %v281
  %371 = vmatpush.bf16.msra.mxu0 %v278
  %372 = vmatpush.bf16.msra.mxu0 %v275
  %373 = vmatpush.bf16.msra.mxu0 %v272
  %374 = vmatmul.bf16.gmra.mxu0 %v184
  %v375 = vpop.f32.mrf.mxu0
  %v376 = vadd.f32 0.0, %v375
  %v377 = vpop.f32.mrf.mxu0
  %v378 = vadd.f32 0.0, %v377
  %379 = vmatmul.bf16.gmra.mxu0 %v185
  %v380 = vpop.f32.mrf.mxu0
  %v381 = vadd.f32 0.0, %v380
  %v382 = vpop.f32.mrf.mxu0
  %v383 = vadd.f32 0.0, %v382
  %384 = vmatmul.bf16.gmra.mxu0 %v186
  %v385 = vpop.f32.mrf.mxu0
  %v386 = vadd.f32 0.0, %v385
  %v387 = vpop.f32.mrf.mxu0
  %v388 = vadd.f32 0.0, %v387
  %389 = vdwg.mxu0
  %v396 = vunpack.c.l.b16 %v14
  %v397 = vunpack.c.l.b16 %v15
  %v398 = vunpack.c.l.b16 %v16
  %v399 = vunpack.c.l.b16 %v17
  %v400 = vunpack.c.l.b16 %v18
  %v401 = vunpack.c.l.b16 %v19
  %v402 = vpack.c.b16 %v397, %v396
  %v403 = vpack.c.b16 %v399, %v398
  %v404 = vpack.c.b16 %v401, %v400
  %v440 = vunpack.c.l.b16 %v20
  %v441 = vunpack.c.h.b16 %v20
  %v442 = vunpack.c.l.b16 %v21
  %v443 = vunpack.c.l.b16 %v22
  %v444 = vunpack.c.h.b16 %v22
  %v445 = vunpack.c.l.b16 %v23
  %v446 = vunpack.c.l.b16 %v24
  %v447 = vunpack.c.h.b16 %v24
  %v448 = vunpack.c.l.b16 %v25
  %v449 = vunpack.c.l.b16 %v26
  %v450 = vunpack.c.h.b16 %v26
  %v451 = vunpack.c.l.b16 %v27
  %v452 = vunpack.c.l.b16 %v28
  %v453 = vunpack.c.h.b16 %v28
  %v454 = vunpack.c.l.b16 %v29
  %v455 = vunpack.c.l.b16 %v30
  %v456 = vunpack.c.h.b16 %v30
  %v457 = vunpack.c.l.b16 %v31
  %v458 = vunpack.c.l.b16 %v32
  %v459 = vunpack.c.h.b16 %v32
  %v460 = vunpack.c.l.b16 %v33
  %v461 = vunpack.c.l.b16 %v34
  %v462 = vunpack.c.h.b16 %v34
  %v463 = vunpack.c.l.b16 %v35
  %v464 = vunpack.c.l.b16 %v36
  %v465 = vunpack.c.h.b16 %v36
  %v466 = vunpack.c.l.b16 %v37
  %v467 = vunpack.c.l.b16 %v38
  %v468 = vunpack.c.h.b16 %v38
  %v469 = vunpack.c.l.b16 %v39
  %v470 = vunpack.c.l.b16 %v40
  %v471 = vunpack.c.h.b16 %v40
  %v472 = vunpack.c.l.b16 %v41
  %v473 = vunpack.c.l.b16 %v42
  %v474 = vunpack.c.h.b16 %v42
  %v475 = vunpack.c.l.b16 %v43
  %v476 = vunpack.c.l.b16 %v44
  %v477 = vunpack.c.h.b16 %v44
  %v478 = vunpack.c.l.b16 %v45
  %v479 = vunpack.c.l.b16 %v46
  %v480 = vunpack.c.h.b16 %v46
  %v481 = vunpack.c.l.b16 %v47
  %v482 = vunpack.c.l.b16 %v48
  %v483 = vunpack.c.h.b16 %v48
  %v484 = vunpack.c.l.b16 %v49
  %v485 = vunpack.c.l.b16 %v50
  %v486 = vunpack.c.h.b16 %v50
  %v487 = vunpack.c.l.b16 %v51
  %v488 = vpack.c.b16 %v443, %v440
  %v489 = vpack.c.b16 %v444, %v441
  %v490 = vpack.c.b16 %v445, %v442
  %v491 = vpack.c.b16 %v449, %v446
  %v492 = vpack.c.b16 %v450, %v447
  %v493 = vpack.c.b16 %v451, %v448
  %v494 = vpack.c.b16 %v455, %v452
  %v495 = vpack.c.b16 %v456, %v453
  %v496 = vpack.c.b16 %v457, %v454
  %v497 = vpack.c.b16 %v461, %v458
  %v498 = vpack.c.b16 %v462, %v459
  %v499 = vpack.c.b16 %v463, %v460
  %v500 = vpack.c.b16 %v467, %v464
  %v501 = vpack.c.b16 %v468, %v465
  %v502 = vpack.c.b16 %v469, %v466
  %v503 = vpack.c.b16 %v473, %v470
  %v504 = vpack.c.b16 %v474, %v471
  %v505 = vpack.c.b16 %v475, %v472
  %v506 = vpack.c.b16 %v479, %v476
  %v507 = vpack.c.b16 %v480, %v477
  %v508 = vpack.c.b16 %v481, %v478
  %v509 = vpack.c.b16 %v485, %v482
  %v510 = vpack.c.b16 %v486, %v483
  %v511 = vpack.c.b16 %v487, %v484
  %536 = vmatpush.bf16.msra.mxu0 %v509
  %537 = vmatpush.bf16.msra.mxu0 %v506
  %538 = vmatpush.bf16.msra.mxu0 %v503
  %539 = vmatpush.bf16.msra.mxu0 %v500
  %540 = vmatpush.bf16.msra.mxu0 %v497
  %541 = vmatpush.bf16.msra.mxu0 %v494
  %542 = vmatpush.bf16.msra.mxu0 %v491
  %543 = vmatpush.bf16.msra.mxu0 %v488
  %544 = vmatmul.bf16.gmra.mxu0 %v402
  %v545 = vpop.f32.mrf.mxu0
  %v546 = vadd.f32 %v328, %v545
  %v547 = vpop.f32.mrf.mxu0
  %v548 = vadd.f32 %v330, %v547
  %549 = vmatmul.bf16.gmra.mxu0 %v403
  %v550 = vpop.f32.mrf.mxu0
  %v551 = vadd.f32 %v333, %v550
  %v552 = vpop.f32.mrf.mxu0
  %v553 = vadd.f32 %v335, %v552
  %554 = vmatmul.bf16.gmra.mxu0 %v404
  %v555 = vpop.f32.mrf.mxu0
  %v556 = vadd.f32 %v338, %v555
  %v557 = vpop.f32.mrf.mxu0
  %v558 = vadd.f32 %v340, %v557
  %559 = vdwg.mxu0
  %560 = vmatpush.bf16.msra.mxu0 %v510
  %561 = vmatpush.bf16.msra.mxu0 %v507
  %562 = vmatpush.bf16.msra.mxu0 %v504
  %563 = vmatpush.bf16.msra.mxu0 %v501
  %564 = vmatpush.bf16.msra.mxu0 %v498
  %565 = vmatpush.bf16.msra.mxu0 %v495
  %566 = vmatpush.bf16.msra.mxu0 %v492
  %567 = vmatpush.bf16.msra.mxu0 %v489
  %568 = vmatmul.bf16.gmra.mxu0 %v402
  %v569 = vpop.f32.mrf.mxu0
  %v570 = vadd.f32 %v352, %v569
  %v571 = vpop.f32.mrf.mxu0
  %v572 = vadd.f32 %v354, %v571
  %573 = vmatmul.bf16.gmra.mxu0 %v403
  %v574 = vpop.f32.mrf.mxu0
  %v575 = vadd.f32 %v357, %v574
  %v576 = vpop.f32.mrf.mxu0
  %v577 = vadd.f32 %v359, %v576
  %578 = vmatmul.bf16.gmra.mxu0 %v404
  %v579 = vpop.f32.mrf.mxu0
  %v580 = vadd.f32 %v362, %v579
  %v581 = vpop.f32.mrf.mxu0
  %v582 = vadd.f32 %v364, %v581
  %583 = vdwg.mxu0
  %584 = vmatpush.bf16.msra.mxu0 %v511
  %585 = vmatpush.bf16.msra.mxu0 %v508
  %586 = vmatpush.bf16.msra.mxu0 %v505
  %587 = vmatpush.bf16.msra.mxu0 %v502
  %588 = vmatpush.bf16.msra.mxu0 %v499
  %589 = vmatpush.bf16.msra.mxu0 %v496
  %590 = vmatpush.bf16.msra.mxu0 %v493
  %591 = vmatpush.bf16.msra.mxu0 %v490
  %592 = vmatmul.bf16.gmra.mxu0 %v402
  %v593 = vpop.f32.mrf.mxu0
  %v594 = vadd.f32 %v376, %v593
  %v595 = vpop.f32.mrf.mxu0
  %v596 = vadd.f32 %v378, %v595
  %597 = vmatmul.bf16.gmra.mxu0 %v403
  %v598 = vpop.f32.mrf.mxu0
  %v599 = vadd.f32 %v381, %v598
  %v600 = vpop.f32.mrf.mxu0
  %v601 = vadd.f32 %v383, %v600
  %602 = vmatmul.bf16.gmra.mxu0 %v404
  %v603 = vpop.f32.mrf.mxu0
  %v604 = vadd.f32 %v386, %v603
  %v605 = vpop.f32.mrf.mxu0
  %v606 = vadd.f32 %v388, %v605
  %607 = vdwg.mxu0
  %v608 = vld [vmem:[%s0] sm:$0xe]
  %v609 = vld [vmem:[%s0 + $0x8] sm:$0xe]
  %v610 = vld [vmem:[%s0 + $0x10] sm:$0xe]
  %v611 = vld [vmem:[%s0 + $0x18] sm:$0xe]
  %v612 = vld [vmem:[%s0 + $0x20] sm:$0xe]
  %v613 = vld [vmem:[%s0 + $0x28] sm:$0xe]
  %vm626 = vcmask 1042432
  %vm627 = vcmask 1046532
  %vm628 = vmor %vm626, %vm627
  %v629 = vrot.slane %v608, 5
  %v630 = vrot.slane %v629, 4
  %v631 = vrot.slane %v52, 5
  %v632 = vsel %vm628, %v630, %v631
  %v633 = vrot.slane %v609, 5
  %v634 = vrot.slane %v633, 4
  %v635 = vrot.slane %v53, 5
  %v636 = vsel %vm628, %v634, %v635
  %v637 = vrot.slane %v610, 5
  %v638 = vrot.slane %v637, 4
  %v639 = vrot.slane %v54, 5
  %v640 = vsel %vm628, %v638, %v639
  %v641 = vrot.slane %v611, 5
  %v642 = vrot.slane %v641, 4
  %v643 = vrot.slane %v55, 5
  %v644 = vsel %vm628, %v642, %v643
  %v645 = vrot.slane %v612, 5
  %v646 = vrot.slane %v645, 4
  %v647 = vrot.slane %v56, 5
  %v648 = vsel %vm628, %v646, %v647
  %v649 = vrot.slane %v613, 5
  %v650 = vrot.slane %v649, 4
  %v651 = vrot.slane %v57, 5
  %v652 = vsel %vm628, %v650, %v651
  %s653 = scalar_lea.vmem %s1, 384
  %v654 = vld [vmem:[%s653] sm:$0xff]
  %v655 = vld [vmem:[%s653 + $0x8] sm:$0xf]
  %v656 = vld [vmem:[%s653 + $0xc] sm:$0xff]
  %v657 = vld [vmem:[%s653 + $0x14] sm:$0xf]
  %v658 = vld [vmem:[%s653 + $0x18] sm:$0xff]
  %v659 = vld [vmem:[%s653 + $0x20] sm:$0xf]
  %v660 = vld [vmem:[%s653 + $0x24] sm:$0xff]
  %v661 = vld [vmem:[%s653 + $0x2c] sm:$0xf]
  %v662 = vld [vmem:[%s653 + $0x30] sm:$0xff]
  %v663 = vld [vmem:[%s653 + $0x38] sm:$0xf]
  %v664 = vld [vmem:[%s653 + $0x3c] sm:$0xff]
  %v665 = vld [vmem:[%s653 + $0x44] sm:$0xf]
  %v666 = vld [vmem:[%s653 + $0x48] sm:$0xff]
  %v667 = vld [vmem:[%s653 + $0x50] sm:$0xf]
  %v668 = vld [vmem:[%s653 + $0x54] sm:$0xff]
  %v669 = vld [vmem:[%s653 + $0x5c] sm:$0xf]
  %v670 = vld [vmem:[%s653 + $0x60] sm:$0xff]
  %v671 = vld [vmem:[%s653 + $0x68] sm:$0xf]
  %v672 = vld [vmem:[%s653 + $0x6c] sm:$0xff]
  %v673 = vld [vmem:[%s653 + $0x74] sm:$0xf]
  %v674 = vld [vmem:[%s653 + $0x78] sm:$0xff]
  %v675 = vld [vmem:[%s653 + $0x80] sm:$0xf]
  %v676 = vld [vmem:[%s653 + $0x84] sm:$0xff]
  %v677 = vld [vmem:[%s653 + $0x8c] sm:$0xf]
  %v678 = vld [vmem:[%s653 + $0x90] sm:$0xff]
  %v679 = vld [vmem:[%s653 + $0x98] sm:$0xf]
  %v680 = vld [vmem:[%s653 + $0x9c] sm:$0xff]
  %v681 = vld [vmem:[%s653 + $0xa4] sm:$0xf]
  %v682 = vld [vmem:[%s653 + $0xa8] sm:$0xff]
  %v683 = vld [vmem:[%s653 + $0xb0] sm:$0xf]
  %v684 = vld [vmem:[%s653 + $0xb4] sm:$0xff]
  %v685 = vld [vmem:[%s653 + $0xbc] sm:$0xf]
  %v686 = vunpack.c.l.b16 %v632
  %v687 = vunpack.c.l.b16 %v636
  %v688 = vunpack.c.l.b16 %v640
  %v689 = vunpack.c.l.b16 %v644
  %v690 = vunpack.c.l.b16 %v648
  %v691 = vunpack.c.l.b16 %v652
  %v692 = vpack.c.b16 %v687, %v686
  %v693 = vpack.c.b16 %v689, %v688
  %v694 = vpack.c.b16 %v691, %v690
  %v730 = vunpack.c.l.b16 %v654
  %v731 = vunpack.c.h.b16 %v654
  %v732 = vunpack.c.l.b16 %v655
  %v733 = vunpack.c.l.b16 %v656
  %v734 = vunpack.c.h.b16 %v656
  %v735 = vunpack.c.l.b16 %v657
  %v736 = vunpack.c.l.b16 %v658
  %v737 = vunpack.c.h.b16 %v658
  %v738 = vunpack.c.l.b16 %v659
  %v739 = vunpack.c.l.b16 %v660
  %v740 = vunpack.c.h.b16 %v660
  %v741 = vunpack.c.l.b16 %v661
  %v742 = vunpack.c.l.b16 %v662
  %v743 = vunpack.c.h.b16 %v662
  %v744 = vunpack.c.l.b16 %v663
  %v745 = vunpack.c.l.b16 %v664
  %v746 = vunpack.c.h.b16 %v664
  %v747 = vunpack.c.l.b16 %v665
  %v748 = vunpack.c.l.b16 %v666
  %v749 = vunpack.c.h.b16 %v666
  %v750 = vunpack.c.l.b16 %v667
  %v751 = vunpack.c.l.b16 %v668
  %v752 = vunpack.c.h.b16 %v668
  %v753 = vunpack.c.l.b16 %v669
  %v754 = vunpack.c.l.b16 %v670
  %v755 = vunpack.c.h.b16 %v670
  %v756 = vunpack.c.l.b16 %v671
  %v757 = vunpack.c.l.b16 %v672
  %v758 = vunpack.c.h.b16 %v672
  %v759 = vunpack.c.l.b16 %v673
  %v760 = vunpack.c.l.b16 %v674
  %v761 = vunpack.c.h.b16 %v674
  %v762 = vunpack.c.l.b16 %v675
  %v763 = vunpack.c.l.b16 %v676
  %v764 = vunpack.c.h.b16 %v676
  %v765 = vunpack.c.l.b16 %v677
  %v766 = vunpack.c.l.b16 %v678
  %v767 = vunpack.c.h.b16 %v678
  %v768 = vunpack.c.l.b16 %v679
  %v769 = vunpack.c.l.b16 %v680
  %v770 = vunpack.c.h.b16 %v680
  %v771 = vunpack.c.l.b16 %v681
  %v772 = vunpack.c.l.b16 %v682
  %v773 = vunpack.c.h.b16 %v682
  %v774 = vunpack.c.l.b16 %v683
  %v775 = vunpack.c.l.b16 %v684
  %v776 = vunpack.c.h.b16 %v684
  %v777 = vunpack.c.l.b16 %v685
  %v778 = vpack.c.b16 %v733, %v730
  %v779 = vpack.c.b16 %v734, %v731
  %v780 = vpack.c.b16 %v735, %v732
  %v781 = vpack.c.b16 %v739, %v736
  %v782 = vpack.c.b16 %v740, %v737
  %v783 = vpack.c.b16 %v741, %v738
  %v784 = vpack.c.b16 %v745, %v742
  %v785 = vpack.c.b16 %v746, %v743
  %v786 = vpack.c.b16 %v747, %v744
  %v787 = vpack.c.b16 %v751, %v748
  %v788 = vpack.c.b16 %v752, %v749
  %v789 = vpack.c.b16 %v753, %v750
  %v790 = vpack.c.b16 %v757, %v754
  %v791 = vpack.c.b16 %v758, %v755
  %v792 = vpack.c.b16 %v759, %v756
  %v793 = vpack.c.b16 %v763, %v760
  %v794 = vpack.c.b16 %v764, %v761
  %v795 = vpack.c.b16 %v765, %v762
  %v796 = vpack.c.b16 %v769, %v766
  %v797 = vpack.c.b16 %v770, %v767
  %v798 = vpack.c.b16 %v771, %v768
  %v799 = vpack.c.b16 %v775, %v772
  %v800 = vpack.c.b16 %v776, %v773
  %v801 = vpack.c.b16 %v777, %v774
  %826 = vmatpush.bf16.msra.mxu0 %v799
  %827 = vmatpush.bf16.msra.mxu0 %v796
  %828 = vmatpush.bf16.msra.mxu0 %v793
  %829 = vmatpush.bf16.msra.mxu0 %v790
  %830 = vmatpush.bf16.msra.mxu0 %v787
  %831 = vmatpush.bf16.msra.mxu0 %v784
  %832 = vmatpush.bf16.msra.mxu0 %v781
  %833 = vmatpush.bf16.msra.mxu0 %v778
  %834 = vmatmul.bf16.gmra.mxu0 %v692
  %v835 = vpop.f32.mrf.mxu0
  %v836 = vadd.f32 0.0, %v835
  %v837 = vpop.f32.mrf.mxu0
  %v838 = vadd.f32 0.0, %v837
  %839 = vmatmul.bf16.gmra.mxu0 %v693
  %v840 = vpop.f32.mrf.mxu0
  %v841 = vadd.f32 0.0, %v840
  %v842 = vpop.f32.mrf.mxu0
  %v843 = vadd.f32 0.0, %v842
  %844 = vmatmul.bf16.gmra.mxu0 %v694
  %v845 = vpop.f32.mrf.mxu0
  %v846 = vadd.f32 0.0, %v845
  %v847 = vpop.f32.mrf.mxu0
  %v848 = vadd.f32 0.0, %v847
  %849 = vdwg.mxu0
  %850 = vmatpush.bf16.msra.mxu0 %v800
  %851 = vmatpush.bf16.msra.mxu0 %v797
  %852 = vmatpush.bf16.msra.mxu0 %v794
  %853 = vmatpush.bf16.msra.mxu0 %v791
  %854 = vmatpush.bf16.msra.mxu0 %v788
  %855 = vmatpush.bf16.msra.mxu0 %v785
  %856 = vmatpush.bf16.msra.mxu0 %v782
  %857 = vmatpush.bf16.msra.mxu0 %v779
  %858 = vmatmul.bf16.gmra.mxu0 %v692
  %v859 = vpop.f32.mrf.mxu0
  %v860 = vadd.f32 0.0, %v859
  %v861 = vpop.f32.mrf.mxu0
  %v862 = vadd.f32 0.0, %v861
  %863 = vmatmul.bf16.gmra.mxu0 %v693
  %v864 = vpop.f32.mrf.mxu0
  %v865 = vadd.f32 0.0, %v864
  %v866 = vpop.f32.mrf.mxu0
  %v867 = vadd.f32 0.0, %v866
  %868 = vmatmul.bf16.gmra.mxu0 %v694
  %v869 = vpop.f32.mrf.mxu0
  %v870 = vadd.f32 0.0, %v869
  %v871 = vpop.f32.mrf.mxu0
  %v872 = vadd.f32 0.0, %v871
  %873 = vdwg.mxu0
  %874 = vmatpush.bf16.msra.mxu0 %v801
  %875 = vmatpush.bf16.msra.mxu0 %v798
  %876 = vmatpush.bf16.msra.mxu0 %v795
  %877 = vmatpush.bf16.msra.mxu0 %v792
  %878 = vmatpush.bf16.msra.mxu0 %v789
  %879 = vmatpush.bf16.msra.mxu0 %v786
  %880 = vmatpush.bf16.msra.mxu0 %v783
  %881 = vmatpush.bf16.msra.mxu0 %v780
  %882 = vmatmul.bf16.gmra.mxu0 %v692
  %v883 = vpop.f32.mrf.mxu0
  %v884 = vadd.f32 0.0, %v883
  %v885 = vpop.f32.mrf.mxu0
  %v886 = vadd.f32 0.0, %v885
  %887 = vmatmul.bf16.gmra.mxu0 %v693
  %v888 = vpop.f32.mrf.mxu0
  %v889 = vadd.f32 0.0, %v888
  %v890 = vpop.f32.mrf.mxu0
  %v891 = vadd.f32 0.0, %v890
  %892 = vmatmul.bf16.gmra.mxu0 %v694
  %v893 = vpop.f32.mrf.mxu0
  %v894 = vadd.f32 0.0, %v893
  %v895 = vpop.f32.mrf.mxu0
  %v896 = vadd.f32 0.0, %v895
  %897 = vdwg.mxu0
  %v898 = vadd.f32 %v546, %v836
  %v899 = vadd.f32 %v570, %v860
  %v900 = vadd.f32 %v594, %v884
  %v901 = vadd.f32 %v548, %v838
  %v902 = vadd.f32 %v572, %v862
  %v903 = vadd.f32 %v596, %v886
  %v904 = vadd.f32 %v551, %v841
  %v905 = vadd.f32 %v575, %v865
  %v906 = vadd.f32 %v599, %v889
  %v907 = vadd.f32 %v553, %v843
  %v908 = vadd.f32 %v577, %v867
  %v909 = vadd.f32 %v601, %v891
  %v910 = vadd.f32 %v556, %v846
  %v911 = vadd.f32 %v580, %v870
  %v912 = vadd.f32 %v604, %v894
  %v913 = vadd.f32 %v558, %v848
  %v914 = vadd.f32 %v582, %v872
  %v915 = vadd.f32 %v606, %v896
  %v916 = vld [vmem:[%s2] sm:$0x7]
  %v918 = vperm.slane %v916, 0
  %v919 = vperm.slane %v916, 1
  %v920 = vperm.slane %v916, 2
  %v924 = vadd.f32 %v898, %v918
  %v925 = vadd.f32 %v899, %v919
  %v926 = vadd.f32 %v900, %v920
  %v927 = vadd.f32 %v901, %v918
  %v928 = vadd.f32 %v902, %v919
  %v929 = vadd.f32 %v903, %v920
  %v930 = vadd.f32 %v904, %v918
  %v931 = vadd.f32 %v905, %v919
  %v932 = vadd.f32 %v906, %v920
  %v933 = vadd.f32 %v907, %v918
  %v934 = vadd.f32 %v908, %v919
  %v935 = vadd.f32 %v909, %v920
  %v936 = vadd.f32 %v910, %v918
  %v937 = vadd.f32 %v911, %v919
  %v938 = vadd.f32 %v912, %v920
  %v939 = vadd.f32 %v913, %v918
  %v940 = vadd.f32 %v914, %v919
  %v941 = vadd.f32 %v915, %v920
  %942 = vst [vmem:[%s3] sm:$0xff] %v924
  %943 = vst [vmem:[%s3 + $0x8] sm:$0xff] %v925
  %944 = vst [vmem:[%s3 + $0x10] sm:$0xff] %v926
  %945 = vst [vmem:[%s3 + $0x18] sm:$0xff] %v927
  %946 = vst [vmem:[%s3 + $0x20] sm:$0xff] %v928
  %947 = vst [vmem:[%s3 + $0x28] sm:$0xff] %v929
  %948 = vst [vmem:[%s3 + $0x30] sm:$0xff] %v930
  %949 = vst [vmem:[%s3 + $0x38] sm:$0xff] %v931
  %950 = vst [vmem:[%s3 + $0x40] sm:$0xff] %v932
  %951 = vst [vmem:[%s3 + $0x48] sm:$0xff] %v933
  %952 = vst [vmem:[%s3 + $0x50] sm:$0xff] %v934
  %953 = vst [vmem:[%s3 + $0x58] sm:$0xff] %v935
  %954 = vst [vmem:[%s3 + $0x60] sm:$0xff] %v936
  %955 = vst [vmem:[%s3 + $0x68] sm:$0xff] %v937
  %956 = vst [vmem:[%s3 + $0x70] sm:$0xff] %v938
  %957 = vst [vmem:[%s3 + $0x78] sm:$0xff] %v939
  %958 = vst [vmem:[%s3 + $0x80] sm:$0xff] %v940
  %959 = vst [vmem:[%s3 + $0x88] sm:$0xff] %v941
  // Predicated region
  $region14: #{decoder_forward.4} parent=0 // pred_check
    _
  $region15: #{decoder_forward.4} parent=0 // pred_check_branch
    %961 = sbr.rel (0) target = $region17
  $region16: #{decoder_forward.4} parent=0 // pred_region
    _
  $region17: #{decoder_forward.4} parent=0 // pred_fallthru
    _
  // Predicated region
  $region18: #{decoder_forward.4} parent=0 // pred_check
    _
  $region19: #{decoder_forward.4} parent=0 // pred_check_branch
    %963 = sbr.rel (0) target = $region21
  $region20: #{decoder_forward.4} parent=0 // pred_region
    _
  $region21: #{decoder_forward.4} parent=0 // pred_fallthru
    _

// kernel: decoder_forward.5
$region0: #{decoder_forward.5}
  #allocation0 [shape = 'u32[]', space=smem, size = 0x4, offset = 0x4, fixed_abs, tag = 'smem constant byte address 0x4 - core index']
  #allocation1 [shape = 'u32[72,128]{1,0:T(1,128)}', space=vmem, size = 0x9000, scoped, tag = 'internal scratch']
  #allocation2 [shape = 'f32[2,8,128]{2,1,0:T(8,128)}', space=vmem, size = 0x2000, scoped, tag = 'scratch operand']
  #allocation3 [shape = 'bf16[2,10,128]{2,1,0:T(8,128)(2,1)}', space=vmem, size = 0x2000, scoped, tag = 'scratch operand']
  #allocation4 [shape = 'bf16[2,10,128]{2,1,0:T(8,128)(2,1)}', space=vmem, size = 0x2000, scoped, tag = 'scratch operand']
  %s0 = inlined_call_operand.vmem [shape: f32[2,3,8,384], index: 0, kind: input, shape index: {}]
  %s1 = inlined_call_operand.vmem [shape: f32[2,8,128], index: 1, kind: input, shape index: {}]
  %s2 = inlined_call_operand.vmem [shape: bf16[3,128,256], index: 2, kind: input, shape index: {}]
  %s3 = inlined_call_operand.vmem [shape: bf16[3,128,128], index: 3, kind: input, shape index: {}]
  %s4 = inlined_call_operand.vmem [shape: bf16[2,3,8,128], index: 4, kind: output, shape index: {}]
  %s5 = sld [smem:[#allocation0]]
  $region113: #{decoder_forward.5} parent=0
    _
  %s7 = ssub.s32 1, %s5
  %s8 = scalar_select 0, %s7, %s5
  $region1: #{decoder_forward.5} parent=0
    #allocation5 [shape = 'u8[49152]{0}', space=vmem, size = 0xc000, scoped, tag = 'input window, operand 0']
    #allocation6 [shape = 'u8[8192]{0}', space=vmem, size = 0x2000, scoped, tag = 'output window, operand 0']
    loop: start=0, step=1, limit=5
    $region2: #{decoder_forward.5} parent=1 // loop_pre_header
      _
    $region3: #{decoder_forward.5} parent=1 // loop_header
      %s10 = sphi 0, %s14
      %p11 = scmp.ge.s32.totalorder %s10, 5
      %s20 = sphi 0, %s22
      %s23 = sphi 0, %s20
      %s24 = sphi 0, %s23
      %s40 = sphi 0, %s24
      %s44 = sphi 0, %s44
      %s46 = sphi 0, %s44
      %s47 = sphi 0, %s46
      %s61 = sphi 0, %s47
      %s65 = sphi 0, %s65
      %s67 = sphi 0, %s65
      %s68 = sphi 0, %s67
      %s82 = sphi 0, %s68
      %s86 = sphi 0, %s86
      %s88 = sphi 0, %s86
      %s89 = sphi 0, %s88
      %s103 = sphi 0, %s89
      %s109 = sphi 0, %s111
      %s112 = sphi 0, %s109
      %s113 = sphi 0, %s112
      %s129 = sphi 0, %s113
    $region4: #{decoder_forward.5} parent=1 // loop_header_branch
      %13 = sbr.rel (%p11) target = $region8
    $region5: #{decoder_forward.5} parent=1 // loop_body
      %s15 = ssub.s32 %s10, 1
      %s16 = ssub.s32 %s10, 2
      %s17 = sadd.s32 %s10, 1
      %s18 = ssub.s32 %s10, %s17
      %p19 = scmp.eq.s32.totalorder %s18, 0
      %s21 = sadd.s32 %s20, 1
      %s22 = scalar_select %p19, %s20, %s21
      %p25 = pneg %p19
      %p26 = scmp.eq.s32.totalorder %s10, 2
      %p27 = por %p25, %p26
      %p28 = scmp.ne.s32.totalorder %s20, %s23
      %p29 = scmp.eq.s32.totalorder %s10, 0
      %p30 = por %p28, %p29
      %p31 = scmp.ne.s32.totalorder %s20, %s23
      %p32 = scmp.eq.s32.totalorder %s15, 2
      %p33 = por %p31, %p32
      %p34 = scmp.ne.s32.totalorder %s23, %s24
      %p35 = scmp.eq.s32.totalorder %s15, 0
      %p36 = por %p34, %p35
      %p37 = scmp.ne.s32.totalorder %s23, %s24
      %p38 = scmp.eq.s32.totalorder %s16, 2
      %p39 = por %p37, %p38
      %p41 = scmp.ne.s32.totalorder %s24, %s40
      %p42 = scmp.eq.s32.totalorder %s16, 0
      %p43 = por %p41, %p42
      %s45 = sadd.s32 %s44, 1
      %p48 = scmp.eq.s32.totalorder %s10, 2
      %p49 = scmp.ne.s32.totalorder %s44, %s46
      %p50 = scmp.eq.s32.totalorder %s10, 0
      %p51 = por %p49, %p50
      %p52 = scmp.ne.s32.totalorder %s44, %s46
      %p53 = scmp.eq.s32.totalorder %s15, 2
      %p54 = por %p52, %p53
      %p55 = scmp.ne.s32.totalorder %s46, %s47
      %p56 = scmp.eq.s32.totalorder %s15, 0
      %p57 = por %p55, %p56
      %p58 = scmp.ne.s32.totalorder %s46, %s47
      %p59 = scmp.eq.s32.totalorder %s16, 2
      %p60 = por %p58, %p59
      %p62 = scmp.ne.s32.totalorder %s47, %s61
      %p63 = scmp.eq.s32.totalorder %s16, 0
      %p64 = por %p62, %p63
      %s66 = sadd.s32 %s65, 1
      %p69 = scmp.eq.s32.totalorder %s10, 2
      %p70 = scmp.ne.s32.totalorder %s65, %s67
      %p71 = scmp.eq.s32.totalorder %s10, 0
      %p72 = por %p70, %p71
      %p73 = scmp.ne.s32.totalorder %s65, %s67
      %p74 = scmp.eq.s32.totalorder %s15, 2
      %p75 = por %p73, %p74
      %p76 = scmp.ne.s32.totalorder %s67, %s68
      %p77 = scmp.eq.s32.totalorder %s15, 0
      %p78 = por %p76, %p77
      %p79 = scmp.ne.s32.totalorder %s67, %s68
      %p80 = scmp.eq.s32.totalorder %s16, 2
      %p81 = por %p79, %p80
      %p83 = scmp.ne.s32.totalorder %s68, %s82
      %p84 = scmp.eq.s32.totalorder %s16, 0
      %p85 = por %p83, %p84
      %s87 = sadd.s32 %s86, 1
      %p90 = scmp.eq.s32.totalorder %s10, 2
      %p91 = scmp.ne.s32.totalorder %s86, %s88
      %p92 = scmp.eq.s32.totalorder %s10, 0
      %p93 = por %p91, %p92
      %p94 = scmp.ne.s32.totalorder %s86, %s88
      %p95 = scmp.eq.s32.totalorder %s15, 2
      %p96 = por %p94, %p95
      %p97 = scmp.ne.s32.totalorder %s88, %s89
      %p98 = scmp.eq.s32.totalorder %s15, 0
      %p99 = por %p97, %p98
      %p100 = scmp.ne.s32.totalorder %s88, %s89
      %p101 = scmp.eq.s32.totalorder %s16, 2
      %p102 = por %p100, %p101
      %p104 = scmp.ne.s32.totalorder %s89, %s103
      %p105 = scmp.eq.s32.totalorder %s16, 0
      %p106 = por %p104, %p105
      %s107 = ssub.s32 %s10, %s17
      %p108 = scmp.eq.s32.totalorder %s107, 0
      %s110 = sadd.s32 %s109, 1
      %s111 = scalar_select %p108, %s109, %s110
      %p114 = pneg %p108
      %p115 = scmp.eq.s32.totalorder %s10, 2
      %p116 = por %p114, %p115
      %p117 = scmp.ne.s32.totalorder %s109, %s112
      %p118 = scmp.eq.s32.totalorder %s10, 0
      %p119 = por %p117, %p118
      %p120 = scmp.ne.s32.totalorder %s109, %s112
      %p121 = scmp.eq.s32.totalorder %s15, 2
      %p122 = por %p120, %p121
      %p123 = scmp.ne.s32.totalorder %s112, %s113
      %p124 = scmp.eq.s32.totalorder %s15, 0
      %p125 = por %p123, %p124
      %p126 = scmp.ne.s32.totalorder %s112, %s113
      %p127 = scmp.eq.s32.totalorder %s16, 2
      %p128 = por %p126, %p127
      %p130 = scmp.ne.s32.totalorder %s113, %s129
      %p131 = scmp.eq.s32.totalorder %s16, 0
      %p132 = por %p130, %p131
      %p133 = scmp.le.s32.totalorder 1, %s10
      %p134 = scmp.lt.s32.totalorder %s10, 4
      %p135 = pnand %p133, %p134
      %p136 = pneg %p135
      // Predicated region
      $region9: #{decoder_forward.5} parent=5 // pred_check
        _
      $region10: #{decoder_forward.5} parent=5 // pred_check_branch
        %138 = sbr.rel (%p135) target = $region12
      $region11: #{decoder_forward.5} parent=5 // pred_region
        %s139 = ssub.s32 %s10, 1
        // Predicated region
        $region13: #{decoder_forward.5} parent=11 // pred_check
          %p140 = pneg %p57
        $region14: #{decoder_forward.5} parent=11 // pred_check_branch
          %142 = sbr.rel (%p140) target = $region16
        $region15: #{decoder_forward.5} parent=11 // pred_region
          _
        $region16: #{decoder_forward.5} parent=11 // pred_fallthru
          _
        // Predicated region
        $region17: #{decoder_forward.5} parent=11 // pred_check
          %p143 = pneg %p78
        $region18: #{decoder_forward.5} parent=11 // pred_check_branch
          %145 = sbr.rel (%p143) target = $region20
        $region19: #{decoder_forward.5} parent=11 // pred_region
          _
        $region20: #{decoder_forward.5} parent=11 // pred_fallthru
          _
        // Predicated region
        $region21: #{decoder_forward.5} parent=11 // pred_check
          %p146 = pneg %p99
        $region22: #{decoder_forward.5} parent=11 // pred_check_branch
          %148 = sbr.rel (%p146) target = $region24
        $region23: #{decoder_forward.5} parent=11 // pred_region
          _
        $region24: #{decoder_forward.5} parent=11 // pred_fallthru
          _
      $region12: #{decoder_forward.5} parent=5 // pred_fallthru
        _
      %p149 = scmp.lt.s32.totalorder %s10, 3
      // Predicated region
      $region25: #{decoder_forward.5} parent=5 // pred_check
        %p150 = pneg %p149
      $region26: #{decoder_forward.5} parent=5 // pred_check_branch
        %152 = sbr.rel (%p150) target = $region28
      $region27: #{decoder_forward.5} parent=5 // pred_region
        // Predicated region
        $region29: #{decoder_forward.5} parent=27 // pred_check
          %p153 = pneg %p30
        $region30: #{decoder_forward.5} parent=27 // pred_check_branch
          %155 = sbr.rel (%p153) target = $region32
        $region31: #{decoder_forward.5} parent=27 // pred_region
          %s156 = sand.u32 %s20, 1
          %s157 = sand.u32 %s20, 1
          %s158 = smul.addr %s157, 48
          %s159 = scalar_lea.vmem [#allocation5], %s158
          %s160 = smul.addr %s10, 3
          %s161 = smul.addr %s160, 8
          %s162 = scalar_lea.vmem %s0, %s161
          // Predicated region
          $region33: #{decoder_forward.5} parent=31 // pred_check
            _
          $region34: #{decoder_forward.5} parent=31 // pred_check_branch
            %164 = sbr.rel (0) target = $region36
          $region35: #{decoder_forward.5} parent=31 // pred_region
            // Predicated region
            $region37: #{decoder_forward.5} parent=35 // pred_check
              _
            $region38: #{decoder_forward.5} parent=35 // pred_check_branch
              %166 = sbr.rel (0) target = $region40
            $region39: #{decoder_forward.5} parent=35 // pred_region
              loop: start=0, step=1, limit=1
              $region41: #{decoder_forward.5} parent=39 // loop_pre_header
                _
              $region42: #{decoder_forward.5} parent=39 // loop_header
                %s168 = sphi 0, %s172
                %p169 = scmp.ge.s32.totalorder %s168, 1
                %s173 = sphi %s162, %s162
                %s174 = sphi %s159, %s159
              $region43: #{decoder_forward.5} parent=39 // loop_header_branch
                %171 = sbr.rel (%p169) target = $region47
              $region44: #{decoder_forward.5} parent=39 // loop_body
                %v175 = vld [vmem:[%s173] sm:$0xff]
                %176 = vst [vmem:[%s174] sm:$0xff] %v175
                %v177 = vld [vmem:[%s173 + $0x8] sm:$0xff]
                %178 = vst [vmem:[%s174 + $0x8] sm:$0xff] %v177
                %v179 = vld [vmem:[%s173 + $0x10] sm:$0xff]
                %180 = vst [vmem:[%s174 + $0x10] sm:$0xff] %v179
                %v181 = vld [vmem:[%s173 + $0x48] sm:$0xff]
                %182 = vst [vmem:[%s174 + $0x18] sm:$0xff] %v181
                %v183 = vld [vmem:[%s173 + $0x50] sm:$0xff]
                %184 = vst [vmem:[%s174 + $0x20] sm:$0xff] %v183
                %v185 = vld [vmem:[%s173 + $0x58] sm:$0xff]
                %186 = vst [vmem:[%s174 + $0x28] sm:$0xff] %v185
              $region45: #{decoder_forward.5} parent=39 // loop_footer
                %s172 = sadd.s32 1, %s168
              $region46: #{decoder_forward.5} parent=39 // loop_footer_branch
                %167 = sbr.rel target = $region42
              $region47: #{decoder_forward.5} parent=39 // loop_exit
                _
            $region40: #{decoder_forward.5} parent=35 // pred_fallthru
              _
            // Predicated region
            $region48: #{decoder_forward.5} parent=35 // pred_check
              _
            $region49: #{decoder_forward.5} parent=35 // pred_check_branch
              %188 = sbr.rel target = $region51
            $region50: #{decoder_forward.5} parent=35 // pred_region
              _
            $region51: #{decoder_forward.5} parent=35 // pred_fallthru
              _
          $region36: #{decoder_forward.5} parent=31 // pred_fallthru
            _
          %189 = vnop
        $region32: #{decoder_forward.5} parent=27 // pred_fallthru
          _
      $region28: #{decoder_forward.5} parent=5 // pred_fallthru
        _
      %p190 = scmp.le.s32.totalorder 1, %s10
      %p191 = scmp.lt.s32.totalorder %s10, 4
      %p192 = pnand %p190, %p191
      %p193 = pneg %p192
      // Predicated region
      $region52: #{decoder_forward.5} parent=5 // pred_check
        _
      $region53: #{decoder_forward.5} parent=5 // pred_check_branch
        %195 = sbr.rel (%p192) target = $region55
      $region54: #{decoder_forward.5} parent=5 // pred_region
        %s196 = ssub.s32 %s10, 1
        %s197 = sand.u32 %s23, 1
        %s198 = sand.u32 %s23, 1
        %s199 = smul.addr %s198, 48
        %s200 = scalar_lea.vmem [#allocation5], %s199
        // Predicated region
        $region56: #{decoder_forward.5} parent=54 // pred_check
          %p201 = pneg %p36
        $region57: #{decoder_forward.5} parent=54 // pred_check_branch
          %203 = sbr.rel (%p201) target = $region59
        $region58: #{decoder_forward.5} parent=54 // pred_region
          _
        $region59: #{decoder_forward.5} parent=54 // pred_fallthru
          _
        %s204 = sand.u32 %s23, 1
        %s205 = sand.u32 %s23, 1
        %s206 = smul.addr %s205, 48
        %s207 = scalar_lea.vmem [#allocation5], %s206
        %p208 = pneg %p36
        %p209 = pneg %p33
        %p210 = pneg %p57
        %p211 = pneg %p54
        %p212 = pneg %p78
        %p213 = pneg %p75
        %p214 = pneg %p99
        %p215 = pneg %p96
        %p216 = pneg %p125
        %p217 = pneg %p122
        %s218 = sand.u32 %s112, 1
        %s219 = sand.u32 %s112, 1
        %s220 = smul.addr %s219, 8
        %s221 = scalar_lea.vmem [#allocation6], %s220
        %p223 = scmp.eq.s32.totalorder %s15, 0
        // Predicated region
        $region60: #{decoder_forward.5} parent=54 // pred_check
          %p224 = pneg %p223
        $region61: #{decoder_forward.5} parent=54 // pred_check_branch
          %226 = sbr.rel (%p224) target = $region63
        $region62: #{decoder_forward.5} parent=54 // pred_region
          %vm227 = vcmask 1040384
          %vm228 = vsmask.f32 256
          %vm229 = vmand %vm227, %vm228
          %v230 = vld [vmem:[#allocation3] sm:$0x1]
          %v231 = vsel %vm229, 0, %v230
          %232 = vst [vmem:[#allocation3] sm:$0x1] %v231
          %v233 = vld [vmem:[#allocation3 + $0x8] sm:$0x1]
          %v234 = vsel %vm229, 0, %v233
          %235 = vst [vmem:[#allocation3 + $0x8] sm:$0x1] %v234
          %vm236 = vsmask.f32 7938
          %vm237 = vmand %vm227, %vm236
          %v238 = vld [vmem:[#allocation3 + $0x4] sm:$0x1]
          %v239 = vsel %vm237, 0, %v238
          %240 = vst [vmem:[#allocation3 + $0x4] sm:$0x1] %v239
          %v241 = vld [vmem:[#allocation3 + $0xc] sm:$0x1]
          %v242 = vsel %vm237, 0, %v241
          %243 = vst [vmem:[#allocation3 + $0xc] sm:$0x1] %v242
          %v244 = vld [vmem:[#allocation4] sm:$0x1]
          %v245 = vsel %vm229, 0, %v244
          %246 = vst [vmem:[#allocation4] sm:$0x1] %v245
          %v247 = vld [vmem:[#allocation4 + $0x8] sm:$0x1]
          %v248 = vsel %vm229, 0, %v247
          %249 = vst [vmem:[#allocation4 + $0x8] sm:$0x1] %v248
          %v250 = vld [vmem:[#allocation4 + $0x4] sm:$0x1]
          %v251 = vsel %vm237, 0, %v250
          %252 = vst [vmem:[#allocation4 + $0x4] sm:$0x1] %v251
          %v253 = vld [vmem:[#allocation4 + $0xc] sm:$0x1]
          %v254 = vsel %vm237, 0, %v253
          %255 = vst [vmem:[#allocation4 + $0xc] sm:$0x1] %v254
          %v256 = vld [vmem:[%s1] sm:$0xff]
          %v257 = vld [vmem:[%s1 + $0x8] sm:$0xff]
          %258 = vst [vmem:[#allocation2] sm:$0xff] %v256
          %259 = vst [vmem:[#allocation2 + $0x8] sm:$0xff] %v257
          %v260 = vld [vmem:[%s1] sm:$0xff]
          %v261 = vld [vmem:[%s1 + $0x8] sm:$0xff]
          %v262 = vpack.c.bf16 %v260, %v260
          %v263 = vpack.c.bf16 %v261, %v261
          %v265 = vshrl.u32 %v262, 16
          %v267 = vrot.slane %v265, 7
          %v268 = vshll.u32 %v262, 16
          %v270 = vor.u32 %v267, %v268
          %v271 = vrot.slane %v267, 4
          %v273 = vshrl.u32 %v263, 16
          %v275 = vrot.slane %v273, 7
          %v276 = vshll.u32 %v263, 16
          %v278 = vor.u32 %v275, %v276
          %v279 = vrot.slane %v275, 4
          %vm284 = vcmask 1043456
          %vm285 = vmand %vm284, %vm236
          %v286 = vld [vmem:[#allocation3] sm:$0xf]
          %v287 = vsel %vm285, %v270, %v286
          %288 = vst [vmem:[#allocation3] sm:$0xf] %v287
          %v289 = vld [vmem:[#allocation3 + $0x4] sm:$0x1]
          %v290 = vsel %vm229, %v271, %v289
          %291 = vst [vmem:[#allocation3 + $0x4] sm:$0x1] %v290
          %v292 = vld [vmem:[#allocation3 + $0x8] sm:$0xf]
          %v293 = vsel %vm285, %v278, %v292
          %294 = vst [vmem:[#allocation3 + $0x8] sm:$0xf] %v293
          %v295 = vld [vmem:[#allocation3 + $0xc] sm:$0x1]
          %v296 = vsel %vm229, %v279, %v295
          %297 = vst [vmem:[#allocation3 + $0xc] sm:$0x1] %v296
        $region63: #{decoder_forward.5} parent=54 // pred_fallthru
          _
        %v298 = vld [vmem:[%s200] sm:$0xff]
        %v299 = vld [vmem:[%s200 + $0x8] sm:$0xff]
        %v300 = vld [vmem:[%s200 + $0x10] sm:$0xff]
        %v301 = vld [vmem:[%s200 + $0x18] sm:$0xff]
        %v302 = vld [vmem:[%s200 + $0x20] sm:$0xff]
        %v303 = vld [vmem:[%s200 + $0x28] sm:$0xff]
        %v304 = vld [vmem:[#allocation3] sm:$0xf]
        %v305 = vld [vmem:[#allocation3 + $0x8] sm:$0xf]
        %v306 = vld [vmem:[%s2] sm:$0xff]
        %v307 = vld [vmem:[%s2 + $0x8] sm:$0xff]
        %v308 = vld [vmem:[%s2 + $0x10] sm:$0xff]
        %v309 = vld [vmem:[%s2 + $0x18] sm:$0xff]
        %v310 = vld [vmem:[%s2 + $0x20] sm:$0xff]
        %v311 = vld [vmem:[%s2 + $0x28] sm:$0xff]
        %v312 = vld [vmem:[%s2 + $0x30] sm:$0xff]
        %v313 = vld [vmem:[%s2 + $0x38] sm:$0xff]
        %v314 = vld [vmem:[%s2 + $0x40] sm:$0xff]
        %v315 = vld [vmem:[%s2 + $0x48] sm:$0xff]
        %v316 = vld [vmem:[%s2 + $0x50] sm:$0xff]
        %v317 = vld [vmem:[%s2 + $0x58] sm:$0xff]
        %v318 = vld [vmem:[%s2 + $0x60] sm:$0xff]
        %v319 = vld [vmem:[%s2 + $0x68] sm:$0xff]
        %v320 = vld [vmem:[%s2 + $0x70] sm:$0xff]
        %v321 = vld [vmem:[%s2 + $0x78] sm:$0xff]
        %v322 = vld [vmem:[#allocation3 + $0x4] sm:$0x1]
        %v323 = vld [vmem:[#allocation3 + $0xc] sm:$0x1]
        %vm324 = vsmask.f32 3328
        %vm325 = vsmask.f32 7440
        %vm326 = vmor %vm324, %vm325
        %v328 = vshrl.u32 %v304, 16
        %v330 = vrot.slane %v328, 4
        %v331 = vshll.u32 %v304, 16
        %v333 = vrot.slane %v331, 5
        %v334 = vor.u32 %v330, %v333
        %v335 = vrot.slane %v334, 4
        %v337 = vshll.u32 %v322, 16
        %v339 = vrot.slane %v337, 5
        %v340 = vsel %vm326, %v335, %v339
        %v342 = vshrl.u32 %v305, 16
        %v344 = vrot.slane %v342, 4
        %v345 = vshll.u32 %v305, 16
        %v347 = vrot.slane %v345, 5
        %v348 = vor.u32 %v344, %v347
        %v349 = vrot.slane %v348, 4
        %v351 = vshll.u32 %v323, 16
        %v353 = vrot.slane %v351, 5
        %v354 = vsel %vm326, %v349, %v353
        %s355 = scalar_lea.vmem %s2, 128
        %v356 = vld [vmem:[%s355] sm:$0xff]
        %v357 = vld [vmem:[%s355 + $0x8] sm:$0xff]
        %v358 = vld [vmem:[%s355 + $0x10] sm:$0xff]
        %v359 = vld [vmem:[%s355 + $0x18] sm:$0xff]
        %v360 = vld [vmem:[%s355 + $0x20] sm:$0xff]
        %v361 = vld [vmem:[%s355 + $0x28] sm:$0xff]
        %v362 = vld [vmem:[%s355 + $0x30] sm:$0xff]
        %v363 = vld [vmem:[%s355 + $0x38] sm:$0xff]
        %v364 = vld [vmem:[%s355 + $0x40] sm:$0xff]
        %v365 = vld [vmem:[%s355 + $0x48] sm:$0xff]
        %v366 = vld [vmem:[%s355 + $0x50] sm:$0xff]
        %v367 = vld [vmem:[%s355 + $0x58] sm:$0xff]
        %v368 = vld [vmem:[%s355 + $0x60] sm:$0xff]
        %v369 = vld [vmem:[%s355 + $0x68] sm:$0xff]
        %v370 = vld [vmem:[%s355 + $0x70] sm:$0xff]
        %v371 = vld [vmem:[%s355 + $0x78] sm:$0xff]
        %v372 = vunpack.c.l.b16 %v340
        %v373 = vunpack.c.l.b16 %v354
        %v374 = vpack.c.b16 %v373, %v372
        %v392 = vunpack.c.l.b16 %v356
        %v393 = vunpack.c.h.b16 %v356
        %v394 = vunpack.c.l.b16 %v357
        %v395 = vunpack.c.h.b16 %v357
        %v396 = vunpack.c.l.b16 %v358
        %v397 = vunpack.c.h.b16 %v358
        %v398 = vunpack.c.l.b16 %v359
        %v399 = vunpack.c.h.b16 %v359
        %v400 = vunpack.c.l.b16 %v360
        %v401 = vunpack.c.h.b16 %v360
        %v402 = vunpack.c.l.b16 %v361
        %v403 = vunpack.c.h.b16 %v361
        %v404 = vunpack.c.l.b16 %v362
        %v405 = vunpack.c.h.b16 %v362
        %v406 = vunpack.c.l.b16 %v363
        %v407 = vunpack.c.h.b16 %v363
        %v408 = vunpack.c.l.b16 %v364
        %v409 = vunpack.c.h.b16 %v364
        %v410 = vunpack.c.l.b16 %v365
        %v411 = vunpack.c.h.b16 %v365
        %v412 = vunpack.c.l.b16 %v366
        %v413 = vunpack.c.h.b16 %v366
        %v414 = vunpack.c.l.b16 %v367
        %v415 = vunpack.c.h.b16 %v367
        %v416 = vunpack.c.l.b16 %v368
        %v417 = vunpack.c.h.b16 %v368
        %v418 = vunpack.c.l.b16 %v369
        %v419 = vunpack.c.h.b16 %v369
        %v420 = vunpack.c.l.b16 %v370
        %v421 = vunpack.c.h.b16 %v370
        %v422 = vunpack.c.l.b16 %v371
        %v423 = vunpack.c.h.b16 %v371
        %v424 = vpack.c.b16 %v394, %v392
        %v425 = vpack.c.b16 %v395, %v393
        %v426 = vpack.c.b16 %v398, %v396
        %v427 = vpack.c.b16 %v399, %v397
        %v428 = vpack.c.b16 %v402, %v400
        %v429 = vpack.c.b16 %v403, %v401
        %v430 = vpack.c.b16 %v406, %v404
        %v431 = vpack.c.b16 %v407, %v405
        %v432 = vpack.c.b16 %v410, %v408
        %v433 = vpack.c.b16 %v411, %v409
        %v434 = vpack.c.b16 %v414, %v412
        %v435 = vpack.c.b16 %v415, %v413
        %v436 = vpack.c.b16 %v418, %v416
        %v437 = vpack.c.b16 %v419, %v417
        %v438 = vpack.c.b16 %v422, %v420
        %v439 = vpack.c.b16 %v423, %v421
        %456 = vmatpush.bf16.msra.mxu0 %v438
        %457 = vmatpush.bf16.msra.mxu0 %v436
        %458 = vmatpush.bf16.msra.mxu0 %v434
        %459 = vmatpush.bf16.msra.mxu0 %v432
        %460 = vmatpush.bf16.msra.mxu0 %v430
        %461 = vmatpush.bf16.msra.mxu0 %v428
        %462 = vmatpush.bf16.msra.mxu0 %v426
        %463 = vmatpush.bf16.msra.mxu0 %v424
        %464 = vmatmul.bf16.gmra.mxu0 %v374
        %v465 = vpop.f32.mrf.mxu0
        %v466 = vadd.f32 0.0, %v465
        %v467 = vpop.f32.mrf.mxu0
        %v468 = vadd.f32 0.0, %v467
        %469 = vdwg.mxu0
        %470 = vmatpush.bf16.msra.mxu0 %v439
        %471 = vmatpush.bf16.msra.mxu0 %v437
        %472 = vmatpush.bf16.msra.mxu0 %v435
        %473 = vmatpush.bf16.msra.mxu0 %v433
        %474 = vmatpush.bf16.msra.mxu0 %v431
        %475 = vmatpush.bf16.msra.mxu0 %v429
        %476 = vmatpush.bf16.msra.mxu0 %v427
        %477 = vmatpush.bf16.msra.mxu0 %v425
        %478 = vmatmul.bf16.gmra.mxu0 %v374
        %v479 = vpop.f32.mrf.mxu0
        %v480 = vadd.f32 0.0, %v479
        %v481 = vpop.f32.mrf.mxu0
        %v482 = vadd.f32 0.0, %v481
        %483 = vdwg.mxu0
        %v486 = vunpack.c.l.b16 %v304
        %v487 = vunpack.c.l.b16 %v305
        %v488 = vpack.c.b16 %v487, %v486
        %v506 = vunpack.c.l.b16 %v306
        %v507 = vunpack.c.h.b16 %v306
        %v508 = vunpack.c.l.b16 %v307
        %v509 = vunpack.c.h.b16 %v307
        %v510 = vunpack.c.l.b16 %v308
        %v511 = vunpack.c.h.b16 %v308
        %v512 = vunpack.c.l.b16 %v309
        %v513 = vunpack.c.h.b16 %v309
        %v514 = vunpack.c.l.b16 %v310
        %v515 = vunpack.c.h.b16 %v310
        %v516 = vunpack.c.l.b16 %v311
        %v517 = vunpack.c.h.b16 %v311
        %v518 = vunpack.c.l.b16 %v312
        %v519 = vunpack.c.h.b16 %v312
        %v520 = vunpack.c.l.b16 %v313
        %v521 = vunpack.c.h.b16 %v313
        %v522 = vunpack.c.l.b16 %v314
        %v523 = vunpack.c.h.b16 %v314
        %v524 = vunpack.c.l.b16 %v315
        %v525 = vunpack.c.h.b16 %v315
        %v526 = vunpack.c.l.b16 %v316
        %v527 = vunpack.c.h.b16 %v316
        %v528 = vunpack.c.l.b16 %v317
        %v529 = vunpack.c.h.b16 %v317
        %v530 = vunpack.c.l.b16 %v318
        %v531 = vunpack.c.h.b16 %v318
        %v532 = vunpack.c.l.b16 %v319
        %v533 = vunpack.c.h.b16 %v319
        %v534 = vunpack.c.l.b16 %v320
        %v535 = vunpack.c.h.b16 %v320
        %v536 = vunpack.c.l.b16 %v321
        %v537 = vunpack.c.h.b16 %v321
        %v538 = vpack.c.b16 %v508, %v506
        %v539 = vpack.c.b16 %v509, %v507
        %v540 = vpack.c.b16 %v512, %v510
        %v541 = vpack.c.b16 %v513, %v511
        %v542 = vpack.c.b16 %v516, %v514
        %v543 = vpack.c.b16 %v517, %v515
        %v544 = vpack.c.b16 %v520, %v518
        %v545 = vpack.c.b16 %v521, %v519
        %v546 = vpack.c.b16 %v524, %v522
        %v547 = vpack.c.b16 %v525, %v523
        %v548 = vpack.c.b16 %v528, %v526
        %v549 = vpack.c.b16 %v529, %v527
        %v550 = vpack.c.b16 %v532, %v530
        %v551 = vpack.c.b16 %v533, %v531
        %v552 = vpack.c.b16 %v536, %v534
        %v553 = vpack.c.b16 %v537, %v535
        %570 = vmatpush.bf16.msra.mxu0 %v552
        %571 = vmatpush.bf16.msra.mxu0 %v550
        %572 = vmatpush.bf16.msra.mxu0 %v548
        %573 = vmatpush.bf16.msra.mxu0 %v546
        %574 = vmatpush.bf16.msra.mxu0 %v544
        %575 = vmatpush.bf16.msra.mxu0 %v542
        %576 = vmatpush.bf16.msra.mxu0 %v540
        %577 = vmatpush.bf16.msra.mxu0 %v538
        %578 = vmatmul.bf16.gmra.mxu0 %v488
        %v579 = vpop.f32.mrf.mxu0
        %v580 = vadd.f32 %v466, %v579
        %v581 = vpop.f32.mrf.mxu0
        %v582 = vadd.f32 %v468, %v581
        %583 = vdwg.mxu0
        %584 = vmatpush.bf16.msra.mxu0 %v553
        %585 = vmatpush.bf16.msra.mxu0 %v551
        %586 = vmatpush.bf16.msra.mxu0 %v549
        %587 = vmatpush.bf16.msra.mxu0 %v547
        %588 = vmatpush.bf16.msra.mxu0 %v545
        %589 = vmatpush.bf16.msra.mxu0 %v543
        %590 = vmatpush.bf16.msra.mxu0 %v541
        %591 = vmatpush.bf16.msra.mxu0 %v539
        %592 = vmatmul.bf16.gmra.mxu0 %v488
        %v593 = vpop.f32.mrf.mxu0
        %v594 = vadd.f32 %v480, %v593
        %v595 = vpop.f32.mrf.mxu0
        %v596 = vadd.f32 %v482, %v595
        %597 = vdwg.mxu0
        %v598 = vld [vmem:[#allocation3] sm:$0xe]
        %v599 = vld [vmem:[#allocation3 + $0x8] sm:$0xe]
        %vm604 = vcmask 1042432
        %vm605 = vcmask 1046532
        %vm606 = vmor %vm604, %vm605
        %v607 = vrot.slane %v598, 5
        %v608 = vrot.slane %v607, 4
        %v609 = vrot.slane %v322, 5
        %v610 = vsel %vm606, %v608, %v609
        %v611 = vrot.slane %v599, 5
        %v612 = vrot.slane %v611, 4
        %v613 = vrot.slane %v323, 5
        %v614 = vsel %vm606, %v612, %v613
        %s615 = scalar_lea.vmem %s2, 256
        %v616 = vld [vmem:[%s615] sm:$0xff]
        %v617 = vld [vmem:[%s615 + $0x8] sm:$0xff]
        %v618 = vld [vmem:[%s615 + $0x10] sm:$0xff]
        %v619 = vld [vmem:[%s615 + $0x18] sm:$0xff]
        %v620 = vld [vmem:[%s615 + $0x20] sm:$0xff]
        %v621 = vld [vmem:[%s615 + $0x28] sm:$0xff]
        %v622 = vld [vmem:[%s615 + $0x30] sm:$0xff]
        %v623 = vld [vmem:[%s615 + $0x38] sm:$0xff]
        %v624 = vld [vmem:[%s615 + $0x40] sm:$0xff]
        %v625 = vld [vmem:[%s615 + $0x48] sm:$0xff]
        %v626 = vld [vmem:[%s615 + $0x50] sm:$0xff]
        %v627 = vld [vmem:[%s615 + $0x58] sm:$0xff]
        %v628 = vld [vmem:[%s615 + $0x60] sm:$0xff]
        %v629 = vld [vmem:[%s615 + $0x68] sm:$0xff]
        %v630 = vld [vmem:[%s615 + $0x70] sm:$0xff]
        %v631 = vld [vmem:[%s615 + $0x78] sm:$0xff]
        %v632 = vunpack.c.l.b16 %v610
        %v633 = vunpack.c.l.b16 %v614
        %v634 = vpack.c.b16 %v633, %v632
        %v652 = vunpack.c.l.b16 %v616
        %v653 = vunpack.c.h.b16 %v616
        %v654 = vunpack.c.l.b16 %v617
        %v655 = vunpack.c.h.b16 %v617
        %v656 = vunpack.c.l.b16 %v618
        %v657 = vunpack.c.h.b16 %v618
        %v658 = vunpack.c.l.b16 %v619
        %v659 = vunpack.c.h.b16 %v619
        %v660 = vunpack.c.l.b16 %v620
        %v661 = vunpack.c.h.b16 %v620
        %v662 = vunpack.c.l.b16 %v621
        %v663 = vunpack.c.h.b16 %v621
        %v664 = vunpack.c.l.b16 %v622
        %v665 = vunpack.c.h.b16 %v622
        %v666 = vunpack.c.l.b16 %v623
        %v667 = vunpack.c.h.b16 %v623
        %v668 = vunpack.c.l.b16 %v624
        %v669 = vunpack.c.h.b16 %v624
        %v670 = vunpack.c.l.b16 %v625
        %v671 = vunpack.c.h.b16 %v625
        %v672 = vunpack.c.l.b16 %v626
        %v673 = vunpack.c.h.b16 %v626
        %v674 = vunpack.c.l.b16 %v627
        %v675 = vunpack.c.h.b16 %v627
        %v676 = vunpack.c.l.b16 %v628
        %v677 = vunpack.c.h.b16 %v628
        %v678 = vunpack.c.l.b16 %v629
        %v679 = vunpack.c.h.b16 %v629
        %v680 = vunpack.c.l.b16 %v630
        %v681 = vunpack.c.h.b16 %v630
        %v682 = vunpack.c.l.b16 %v631
        %v683 = vunpack.c.h.b16 %v631
        %v684 = vpack.c.b16 %v654, %v652
        %v685 = vpack.c.b16 %v655, %v653
        %v686 = vpack.c.b16 %v658, %v656
        %v687 = vpack.c.b16 %v659, %v657
        %v688 = vpack.c.b16 %v662, %v660
        %v689 = vpack.c.b16 %v663, %v661
        %v690 = vpack.c.b16 %v666, %v664
        %v691 = vpack.c.b16 %v667, %v665
        %v692 = vpack.c.b16 %v670, %v668
        %v693 = vpack.c.b16 %v671, %v669
        %v694 = vpack.c.b16 %v674, %v672
        %v695 = vpack.c.b16 %v675, %v673
        %v696 = vpack.c.b16 %v678, %v676
        %v697 = vpack.c.b16 %v679, %v677
        %v698 = vpack.c.b16 %v682, %v680
        %v699 = vpack.c.b16 %v683, %v681
        %716 = vmatpush.bf16.msra.mxu0 %v698
        %717 = vmatpush.bf16.msra.mxu0 %v696
        %718 = vmatpush.bf16.msra.mxu0 %v694
        %719 = vmatpush.bf16.msra.mxu0 %v692
        %720 = vmatpush.bf16.msra.mxu0 %v690
        %721 = vmatpush.bf16.msra.mxu0 %v688
        %722 = vmatpush.bf16.msra.mxu0 %v686
        %723 = vmatpush.bf16.msra.mxu0 %v684
        %724 = vmatmul.bf16.gmra.mxu0 %v634
        %v725 = vpop.f32.mrf.mxu0
        %v726 = vadd.f32 0.0, %v725
        %v727 = vpop.f32.mrf.mxu0
        %v728 = vadd.f32 0.0, %v727
        %729 = vdwg.mxu0
        %730 = vmatpush.bf16.msra.mxu0 %v699
        %731 = vmatpush.bf16.msra.mxu0 %v697
        %732 = vmatpush.bf16.msra.mxu0 %v695
        %733 = vmatpush.bf16.msra.mxu0 %v693
        %734 = vmatpush.bf16.msra.mxu0 %v691
        %735 = vmatpush.bf16.msra.mxu0 %v689
        %736 = vmatpush.bf16.msra.mxu0 %v687
        %737 = vmatpush.bf16.msra.mxu0 %v685
        %738 = vmatmul.bf16.gmra.mxu0 %v634
        %v739 = vpop.f32.mrf.mxu0
        %v740 = vadd.f32 0.0, %v739
        %v741 = vpop.f32.mrf.mxu0
        %v742 = vadd.f32 0.0, %v741
        %743 = vdwg.mxu0
        %v744 = vadd.f32 %v580, %v726
        %v745 = vadd.f32 %v594, %v740
        %v746 = vadd.f32 %v582, %v728
        %v747 = vadd.f32 %v596, %v742
        %v748 = vadd.f32 %v298, %v744
        %v749 = vadd.f32 %v299, %v745
        %v750 = vadd.f32 %v301, %v746
        %v751 = vadd.f32 %v302, %v747
        %v752 = vxor.u32 %v748, 2147483648
        %v753 = vxor.u32 %v750, 2147483648
        %v754 = vmul.f32 %v752, 1.442695
        %v755 = vpow.pop %v754
        %v756 = vmul.f32 %v753, 1.442695
        %v757 = vpow.pop %v756
        %v758 = vadd.f32 %v755, 1.0
        %v759 = vadd.f32 %v757, 1.0
        %v760 = vrcp.pop %v758
        %v761 = vmul.f32 %v758, %v760
        %v762 = vsub.f32 1.0, %v761
        %v763 = vmul.f32 %v760, %v762
        %v764 = vadd.f32 %v760, %v763
        %vm765 = vweird.f32 %v758
        %vm766 = vweird.f32 %v760
        %vm767 = vmor %vm765, %vm766
        %v768 = vsel %vm767, %v760, %v764
        %v769 = vand.u32 2147483647, %v758
        %vm770 = vcmp.eq.f32.partialorder %v769, 8.507059e+37
        %v771 = vand.u32 %v758, 2147483648
        %v772 = vor.u32 1.1754944e-38, %v771
        %v773 = vsel %vm770, %v772, %v768
        %v774 = vmul.f32 1.0, %v773
        %v775 = vrcp.pop %v759
        %v776 = vmul.f32 %v759, %v775
        %v777 = vsub.f32 1.0, %v776
        %v778 = vmul.f32 %v775, %v777
        %v779 = vadd.f32 %v775, %v778
        %vm780 = vweird.f32 %v759
        %vm781 = vweird.f32 %v775
        %vm782 = vmor %vm780, %vm781
        %v783 = vsel %vm782, %v775, %v779
        %v784 = vand.u32 2147483647, %v759
        %vm785 = vcmp.eq.f32.partialorder %v784, 8.507059e+37
        %v786 = vand.u32 %v759, 2147483648
        %v787 = vor.u32 1.1754944e-38, %v786
        %v788 = vsel %vm785, %v787, %v783
        %v789 = vmul.f32 1.0, %v788
        %v790 = vxor.u32 %v749, 2147483648
        %v791 = vxor.u32 %v751, 2147483648
        %v792 = vmul.f32 %v790, 1.442695
        %v793 = vpow.pop %v792
        %v794 = vmul.f32 %v791, 1.442695
        %v795 = vpow.pop %v794
        %v796 = vadd.f32 %v793, 1.0
        %v797 = vadd.f32 %v795, 1.0
        %v798 = vrcp.pop %v796
        %v799 = vmul.f32 %v796, %v798
        %v800 = vsub.f32 1.0, %v799
        %v801 = vmul.f32 %v798, %v800
        %v802 = vadd.f32 %v798, %v801
        %vm803 = vweird.f32 %v796
        %vm804 = vweird.f32 %v798
        %vm805 = vmor %vm803, %vm804
        %v806 = vsel %vm805, %v798, %v802
        %v807 = vand.u32 2147483647, %v796
        %vm808 = vcmp.eq.f32.partialorder %v807, 8.507059e+37
        %v809 = vand.u32 %v796, 2147483648
        %v810 = vor.u32 1.1754944e-38, %v809
        %v811 = vsel %vm808, %v810, %v806
        %v812 = vmul.f32 1.0, %v811
        %v813 = vrcp.pop %v797
        %v814 = vmul.f32 %v797, %v813
        %v815 = vsub.f32 1.0, %v814
        %v816 = vmul.f32 %v813, %v815
        %v817 = vadd.f32 %v813, %v816
        %vm818 = vweird.f32 %v797
        %vm819 = vweird.f32 %v813
        %vm820 = vmor %vm818, %vm819
        %v821 = vsel %vm820, %v813, %v817
        %v822 = vand.u32 2147483647, %v797
        %vm823 = vcmp.eq.f32.partialorder %v822, 8.507059e+37
        %v824 = vand.u32 %v797, 2147483648
        %v825 = vor.u32 1.1754944e-38, %v824
        %v826 = vsel %vm823, %v825, %v821
        %v827 = vmul.f32 1.0, %v826
        %v828 = vld [vmem:[#allocation2] sm:$0xff]
        %v829 = vld [vmem:[#allocation2 + $0x8] sm:$0xff]
        %v830 = vmul.f32 %v828, %v812
        %v831 = vmul.f32 %v829, %v827
        %v832 = vpack.c.bf16 %v830, %v830
        %v833 = vpack.c.bf16 %v831, %v831
        %v835 = vshrl.u32 %v832, 16
        %v837 = vrot.slane %v835, 7
        %v838 = vshll.u32 %v832, 16
        %v840 = vor.u32 %v837, %v838
        %v841 = vrot.slane %v837, 4
        %v843 = vshrl.u32 %v833, 16
        %v845 = vrot.slane %v843, 7
        %v846 = vshll.u32 %v833, 16
        %v848 = vor.u32 %v845, %v846
        %v849 = vrot.slane %v845, 4
        %vm854 = vcmask 1043456
        %vm855 = vsmask.f32 7938
        %vm856 = vmand %vm854, %vm855
        %v857 = vld [vmem:[#allocation4] sm:$0xf]
        %v858 = vsel %vm856, %v840, %v857
        %859 = vst [vmem:[#allocation4] sm:$0xf] %v858
        %vm860 = vcmask 1040384
        %vm861 = vsmask.f32 256
        %vm862 = vmand %vm860, %vm861
        %v863 = vld [vmem:[#allocation4 + $0x4] sm:$0x1]
        %v864 = vsel %vm862, %v841, %v863
        %865 = vst [vmem:[#allocation4 + $0x4] sm:$0x1] %v864
        %v866 = vld [vmem:[#allocation4 + $0x8] sm:$0xf]
        %v867 = vsel %vm856, %v848, %v866
        %868 = vst [vmem:[#allocation4 + $0x8] sm:$0xf] %v867
        %v869 = vld [vmem:[#allocation4 + $0xc] sm:$0x1]
        %v870 = vsel %vm862, %v849, %v869
        %871 = vst [vmem:[#allocation4 + $0xc] sm:$0x1] %v870
        %v872 = vld [vmem:[#allocation4] sm:$0xf]
        %v873 = vld [vmem:[#allocation4 + $0x8] sm:$0xf]
        %v874 = vld [vmem:[%s3] sm:$0xf]
        %v875 = vld [vmem:[%s3 + $0x4] sm:$0xf]
        %v876 = vld [vmem:[%s3 + $0x8] sm:$0xf]
        %v877 = vld [vmem:[%s3 + $0xc] sm:$0xf]
        %v878 = vld [vmem:[%s3 + $0x10] sm:$0xf]
        %v879 = vld [vmem:[%s3 + $0x14] sm:$0xf]
        %v880 = vld [vmem:[%s3 + $0x18] sm:$0xf]
        %v881 = vld [vmem:[%s3 + $0x1c] sm:$0xf]
        %v882 = vld [vmem:[%s3 + $0x20] sm:$0xf]
        %v883 = vld [vmem:[%s3 + $0x24] sm:$0xf]
        %v884 = vld [vmem:[%s3 + $0x28] sm:$0xf]
        %v885 = vld [vmem:[%s3 + $0x2c] sm:$0xf]
        %v886 = vld [vmem:[%s3 + $0x30] sm:$0xf]
        %v887 = vld [vmem:[%s3 + $0x34] sm:$0xf]
        %v888 = vld [vmem:[%s3 + $0x38] sm:$0xf]
        %v889 = vld [vmem:[%s3 + $0x3c] sm:$0xf]
        %v892 = vunpack.c.l.b16 %v872
        %v893 = vunpack.c.l.b16 %v873
        %v894 = vpack.c.b16 %v893, %v892
        %v912 = vunpack.c.l.b16 %v874
        %v913 = vunpack.c.l.b16 %v875
        %v914 = vunpack.c.l.b16 %v876
        %v915 = vunpack.c.l.b16 %v877
        %v916 = vunpack.c.l.b16 %v878
        %v917 = vunpack.c.l.b16 %v879
        %v918 = vunpack.c.l.b16 %v880
        %v919 = vunpack.c.l.b16 %v881
        %v920 = vunpack.c.l.b16 %v882
        %v921 = vunpack.c.l.b16 %v883
        %v922 = vunpack.c.l.b16 %v884
        %v923 = vunpack.c.l.b16 %v885
        %v924 = vunpack.c.l.b16 %v886
        %v925 = vunpack.c.l.b16 %v887
        %v926 = vunpack.c.l.b16 %v888
        %v927 = vunpack.c.l.b16 %v889
        %v928 = vpack.c.b16 %v913, %v912
        %v929 = vpack.c.b16 %v915, %v914
        %v930 = vpack.c.b16 %v917, %v916
        %v931 = vpack.c.b16 %v919, %v918
        %v932 = vpack.c.b16 %v921, %v920
        %v933 = vpack.c.b16 %v923, %v922
        %v934 = vpack.c.b16 %v925, %v924
        %v935 = vpack.c.b16 %v927, %v926
        %944 = vmatpush.bf16.msra.mxu0 %v935
        %945 = vmatpush.bf16.msra.mxu0 %v934
        %946 = vmatpush.bf16.msra.mxu0 %v933
        %947 = vmatpush.bf16.msra.mxu0 %v932
        %948 = vmatpush.bf16.msra.mxu0 %v931
        %949 = vmatpush.bf16.msra.mxu0 %v930
        %950 = vmatpush.bf16.msra.mxu0 %v929
        %951 = vmatpush.bf16.msra.mxu0 %v928
        %952 = vmatmul.bf16.gmra.mxu0 %v894
        %v953 = vpop.f32.mrf.mxu0
        %v954 = vadd.f32 0.0, %v953
        %v955 = vpop.f32.mrf.mxu0
        %v956 = vadd.f32 0.0, %v955
        %957 = vdwg.mxu0
        %v958 = vadd.f32 %v300, %v954
        %v959 = vadd.f32 %v303, %v956
        %v960 = vld [vmem:[#allocation4] sm:$0xf]
        %v961 = vld [vmem:[#allocation4 + $0x4] sm:$0x1]
        %v962 = vld [vmem:[#allocation4 + $0x8] sm:$0xf]
        %v963 = vld [vmem:[#allocation4 + $0xc] sm:$0x1]
        %v965 = vshrl.u32 %v960, 16
        %v967 = vrot.slane %v965, 4
        %v968 = vshll.u32 %v960, 16
        %v970 = vrot.slane %v968, 5
        %v971 = vor.u32 %v967, %v970
        %v972 = vrot.slane %v971, 4
        %v974 = vshll.u32 %v961, 16
        %v976 = vrot.slane %v974, 5
        %v977 = vsel %vm326, %v972, %v976
        %v979 = vshrl.u32 %v962, 16
        %v981 = vrot.slane %v979, 4
        %v982 = vshll.u32 %v962, 16
        %v984 = vrot.slane %v982, 5
        %v985 = vor.u32 %v981, %v984
        %v986 = vrot.slane %v985, 4
        %v988 = vshll.u32 %v963, 16
        %v990 = vrot.slane %v988, 5
        %v991 = vsel %vm326, %v986, %v990
        %s992 = scalar_lea.vmem %s3, 64
        %v993 = vld [vmem:[%s992] sm:$0xf]
        %v994 = vld [vmem:[%s992 + $0x4] sm:$0xf]
        %v995 = vld [vmem:[%s992 + $0x8] sm:$0xf]
        %v996 = vld [vmem:[%s992 + $0xc] sm:$0xf]
        %v997 = vld [vmem:[%s992 + $0x10] sm:$0xf]
        %v998 = vld [vmem:[%s992 + $0x14] sm:$0xf]
        %v999 = vld [vmem:[%s992 + $0x18] sm:$0xf]
        %v1000 = vld [vmem:[%s992 + $0x1c] sm:$0xf]
        %v1001 = vld [vmem:[%s992 + $0x20] sm:$0xf]
        %v1002 = vld [vmem:[%s992 + $0x24] sm:$0xf]
        %v1003 = vld [vmem:[%s992 + $0x28] sm:$0xf]
        %v1004 = vld [vmem:[%s992 + $0x2c] sm:$0xf]
        %v1005 = vld [vmem:[%s992 + $0x30] sm:$0xf]
        %v1006 = vld [vmem:[%s992 + $0x34] sm:$0xf]
        %v1007 = vld [vmem:[%s992 + $0x38] sm:$0xf]
        %v1008 = vld [vmem:[%s992 + $0x3c] sm:$0xf]
        %v1009 = vunpack.c.l.b16 %v977
        %v1010 = vunpack.c.l.b16 %v991
        %v1011 = vpack.c.b16 %v1010, %v1009
        %v1029 = vunpack.c.l.b16 %v993
        %v1030 = vunpack.c.l.b16 %v994
        %v1031 = vunpack.c.l.b16 %v995
        %v1032 = vunpack.c.l.b16 %v996
        %v1033 = vunpack.c.l.b16 %v997
        %v1034 = vunpack.c.l.b16 %v998
        %v1035 = vunpack.c.l.b16 %v999
        %v1036 = vunpack.c.l.b16 %v1000
        %v1037 = vunpack.c.l.b16 %v1001
        %v1038 = vunpack.c.l.b16 %v1002
        %v1039 = vunpack.c.l.b16 %v1003
        %v1040 = vunpack.c.l.b16 %v1004
        %v1041 = vunpack.c.l.b16 %v1005
        %v1042 = vunpack.c.l.b16 %v1006
        %v1043 = vunpack.c.l.b16 %v1007
        %v1044 = vunpack.c.l.b16 %v1008
        %v1045 = vpack.c.b16 %v1030, %v1029
        %v1046 = vpack.c.b16 %v1032, %v1031
        %v1047 = vpack.c.b16 %v1034, %v1033
        %v1048 = vpack.c.b16 %v1036, %v1035
        %v1049 = vpack.c.b16 %v1038, %v1037
        %v1050 = vpack.c.b16 %v1040, %v1039
        %v1051 = vpack.c.b16 %v1042, %v1041
        %v1052 = vpack.c.b16 %v1044, %v1043
        %1061 = vmatpush.bf16.msra.mxu0 %v1052
        %1062 = vmatpush.bf16.msra.mxu0 %v1051
        %1063 = vmatpush.bf16.msra.mxu0 %v1050
        %1064 = vmatpush.bf16.msra.mxu0 %v1049
        %1065 = vmatpush.bf16.msra.mxu0 %v1048
        %1066 = vmatpush.bf16.msra.mxu0 %v1047
        %1067 = vmatpush.bf16.msra.mxu0 %v1046
        %1068 = vmatpush.bf16.msra.mxu0 %v1045
        %1069 = vmatmul.bf16.gmra.mxu0 %v1011
        %v1070 = vpop.f32.mrf.mxu0
        %v1071 = vadd.f32 0.0, %v1070
        %v1072 = vpop.f32.mrf.mxu0
        %v1073 = vadd.f32 0.0, %v1072
        %1074 = vdwg.mxu0
        %v1075 = vadd.f32 %v958, %v1071
        %v1076 = vadd.f32 %v959, %v1073
        %v1077 = vld [vmem:[#allocation4] sm:$0xe]
        %v1078 = vld [vmem:[#allocation4 + $0x8] sm:$0xe]
        %v1083 = vrot.slane %v1077, 5
        %v1084 = vrot.slane %v1083, 4
        %v1085 = vrot.slane %v961, 5
        %v1086 = vsel %vm606, %v1084, %v1085
        %v1087 = vrot.slane %v1078, 5
        %v1088 = vrot.slane %v1087, 4
        %v1089 = vrot.slane %v963, 5
        %v1090 = vsel %vm606, %v1088, %v1089
        %s1091 = scalar_lea.vmem %s3, 128
        %v1092 = vld [vmem:[%s1091] sm:$0xf]
        %v1093 = vld [vmem:[%s1091 + $0x4] sm:$0xf]
        %v1094 = vld [vmem:[%s1091 + $0x8] sm:$0xf]
        %v1095 = vld [vmem:[%s1091 + $0xc] sm:$0xf]
        %v1096 = vld [vmem:[%s1091 + $0x10] sm:$0xf]
        %v1097 = vld [vmem:[%s1091 + $0x14] sm:$0xf]
        %v1098 = vld [vmem:[%s1091 + $0x18] sm:$0xf]
        %v1099 = vld [vmem:[%s1091 + $0x1c] sm:$0xf]
        %v1100 = vld [vmem:[%s1091 + $0x20] sm:$0xf]
        %v1101 = vld [vmem:[%s1091 + $0x24] sm:$0xf]
        %v1102 = vld [vmem:[%s1091 + $0x28] sm:$0xf]
        %v1103 = vld [vmem:[%s1091 + $0x2c] sm:$0xf]
        %v1104 = vld [vmem:[%s1091 + $0x30] sm:$0xf]
        %v1105 = vld [vmem:[%s1091 + $0x34] sm:$0xf]
        %v1106 = vld [vmem:[%s1091 + $0x38] sm:$0xf]
        %v1107 = vld [vmem:[%s1091 + $0x3c] sm:$0xf]
        %v1108 = vunpack.c.l.b16 %v1086
        %v1109 = vunpack.c.l.b16 %v1090
        %v1110 = vpack.c.b16 %v1109, %v1108
        %v1128 = vunpack.c.l.b16 %v1092
        %v1129 = vunpack.c.l.b16 %v1093
        %v1130 = vunpack.c.l.b16 %v1094
        %v1131 = vunpack.c.l.b16 %v1095
        %v1132 = vunpack.c.l.b16 %v1096
        %v1133 = vunpack.c.l.b16 %v1097
        %v1134 = vunpack.c.l.b16 %v1098
        %v1135 = vunpack.c.l.b16 %v1099
        %v1136 = vunpack.c.l.b16 %v1100
        %v1137 = vunpack.c.l.b16 %v1101
        %v1138 = vunpack.c.l.b16 %v1102
        %v1139 = vunpack.c.l.b16 %v1103
        %v1140 = vunpack.c.l.b16 %v1104
        %v1141 = vunpack.c.l.b16 %v1105
        %v1142 = vunpack.c.l.b16 %v1106
        %v1143 = vunpack.c.l.b16 %v1107
        %v1144 = vpack.c.b16 %v1129, %v1128
        %v1145 = vpack.c.b16 %v1131, %v1130
        %v1146 = vpack.c.b16 %v1133, %v1132
        %v1147 = vpack.c.b16 %v1135, %v1134
        %v1148 = vpack.c.b16 %v1137, %v1136
        %v1149 = vpack.c.b16 %v1139, %v1138
        %v1150 = vpack.c.b16 %v1141, %v1140
        %v1151 = vpack.c.b16 %v1143, %v1142
        %1160 = vmatpush.bf16.msra.mxu0 %v1151
        %1161 = vmatpush.bf16.msra.mxu0 %v1150
        %1162 = vmatpush.bf16.msra.mxu0 %v1149
        %1163 = vmatpush.bf16.msra.mxu0 %v1148
        %1164 = vmatpush.bf16.msra.mxu0 %v1147
        %1165 = vmatpush.bf16.msra.mxu0 %v1146
        %1166 = vmatpush.bf16.msra.mxu0 %v1145
        %1167 = vmatpush.bf16.msra.mxu0 %v1144
        %1168 = vmatmul.bf16.gmra.mxu0 %v1110
        %v1169 = vpop.f32.mrf.mxu0
        %v1170 = vadd.f32 0.0, %v1169
        %v1171 = vpop.f32.mrf.mxu0
        %v1172 = vadd.f32 0.0, %v1171
        %1173 = vdwg.mxu0
        %v1174 = vadd.f32 %v1075, %v1170
        %v1175 = vadd.f32 %v1076, %v1172
        %v1176 = vtanh.pop %v1174
        %v1177 = vtanh.pop %v1175
        %v1178 = vsub.f32 1.0, %v774
        %v1179 = vsub.f32 1.0, %v789
        %v1180 = vmul.f32 %v828, %v1178
        %v1181 = vmul.f32 %v829, %v1179
        %v1182 = vmul.f32 %v1176, %v774
        %v1183 = vmul.f32 %v1177, %v789
        %v1184 = vadd.f32 %v1180, %v1182
        %v1185 = vadd.f32 %v1181, %v1183
        %v1186 = vpack.c.bf16 %v1184, %v1184
        %v1187 = vpack.c.bf16 %v1185, %v1185
        %1188 = vst [vmem:[%s221] sm:$0xf] %v1186
        %1189 = vst [vmem:[%s221 + $0x4] sm:$0xf] %v1187
        %1190 = vst [vmem:[#allocation2] sm:$0xff] %v1184
        %1191 = vst [vmem:[#allocation2 + $0x8] sm:$0xff] %v1185
        %v1193 = vshrl.u32 %v1186, 16
        %v1195 = vrot.slane %v1193, 7
        %v1196 = vshll.u32 %v1186, 16
        %v1198 = vor.u32 %v1195, %v1196
        %v1199 = vrot.slane %v1195, 4
        %v1201 = vshrl.u32 %v1187, 16
        %v1203 = vrot.slane %v1201, 7
        %v1204 = vshll.u32 %v1187, 16
        %v1206 = vor.u32 %v1203, %v1204
        %v1207 = vrot.slane %v1203, 4
        %v1212 = vld [vmem:[#allocation3] sm:$0xf]
        %v1213 = vsel %vm856, %v1198, %v1212
        %1214 = vst [vmem:[#allocation3] sm:$0xf] %v1213
        %v1215 = vld [vmem:[#allocation3 + $0x4] sm:$0x1]
        %v1216 = vsel %vm862, %v1199, %v1215
        %1217 = vst [vmem:[#allocation3 + $0x4] sm:$0x1] %v1216
        %v1218 = vld [vmem:[#allocation3 + $0x8] sm:$0xf]
        %v1219 = vsel %vm856, %v1206, %v1218
        %1220 = vst [vmem:[#allocation3 + $0x8] sm:$0xf] %v1219
        %v1221 = vld [vmem:[#allocation3 + $0xc] sm:$0x1]
        %v1222 = vsel %vm862, %v1207, %v1221
        %1223 = vst [vmem:[#allocation3 + $0xc] sm:$0x1] %v1222
        %s1224 = sand.u32 %s112, 1
        %s1225 = sand.u32 %s112, 1
        %s1226 = smul.addr %s1225, 8
        %s1227 = scalar_lea.vmem [#allocation6], %s1226
        // Predicated region
        $region64: #{decoder_forward.5} parent=54 // pred_check
          %p1228 = pneg %p122
        $region65: #{decoder_forward.5} parent=54 // pred_check_branch
          %1230 = sbr.rel (%p1228) target = $region67
        $region66: #{decoder_forward.5} parent=54 // pred_region
          %s1231 = smul.addr %s15, 4
          %s1232 = scalar_lea.vmem %s4, %s1231
          // Predicated region
          $region68: #{decoder_forward.5} parent=66 // pred_check
            _
          $region69: #{decoder_forward.5} parent=66 // pred_check_branch
            %1234 = sbr.rel (0) target = $region71
          $region70: #{decoder_forward.5} parent=66 // pred_region
            // Predicated region
            $region72: #{decoder_forward.5} parent=70 // pred_check
              _
            $region73: #{decoder_forward.5} parent=70 // pred_check_branch
              %1236 = sbr.rel target = $region75
            $region74: #{decoder_forward.5} parent=70 // pred_region
              // Predicated region
              $region87: #{decoder_forward.5} parent=74 // pred_check
                _
              $region88: #{decoder_forward.5} parent=74 // pred_check_branch
                %1254 = sbr.rel (0) target = $region90
              $region89: #{decoder_forward.5} parent=74 // pred_region
                loop: start=0, step=1, limit=1
                $region91: #{decoder_forward.5} parent=89 // loop_pre_header
                  _
                $region92: #{decoder_forward.5} parent=89 // loop_header
                  %s1256 = sphi 0, %s1260
                  %p1257 = scmp.ge.s32.totalorder %s1256, 1
                  %s1261 = sphi %s1227, %s1227
                  %s1262 = sphi %s1232, %s1232
                $region93: #{decoder_forward.5} parent=89 // loop_header_branch
                  %1259 = sbr.rel (%p1257) target = $region97
                $region94: #{decoder_forward.5} parent=89 // loop_body
                  _
                $region95: #{decoder_forward.5} parent=89 // loop_footer
                  %s1260 = sadd.s32 1, %s1256
                $region96: #{decoder_forward.5} parent=89 // loop_footer_branch
                  %1255 = sbr.rel target = $region92
                $region97: #{decoder_forward.5} parent=89 // loop_exit
                  _
                %s1264 = ssub.s32 16, 1
                loop: start=0, step=1, limit=1
                $region98: #{decoder_forward.5} parent=89 // loop_pre_header
                  _
                $region99: #{decoder_forward.5} parent=89 // loop_header
                  %s1266 = sphi 0, %s1270
                  %p1267 = scmp.ge.s32.totalorder %s1266, 1
                  %s1271 = sphi %s1227, %s1227
                  %s1272 = sphi %s1232, %s1232
                $region100: #{decoder_forward.5} parent=89 // loop_header_branch
                  %1269 = sbr.rel (%p1267) target = $region104
                $region101: #{decoder_forward.5} parent=89 // loop_body
                  %v1273 = vld [vmem:[%s1271] sm:%s1264]
                  %1274 = vst [vmem:[%s1272] sm:%s1264] %v1273
                  %v1275 = vld [vmem:[%s1271 + $0x4] sm:%s1264]
                  %1276 = vst [vmem:[%s1272 + $0xc] sm:%s1264] %v1275
                $region102: #{decoder_forward.5} parent=89 // loop_footer
                  %s1270 = sadd.s32 1, %s1266
                $region103: #{decoder_forward.5} parent=89 // loop_footer_branch
                  %1265 = sbr.rel target = $region99
                $region104: #{decoder_forward.5} parent=89 // loop_exit
                  _
              $region90: #{decoder_forward.5} parent=74 // pred_fallthru
                _
            $region75: #{decoder_forward.5} parent=70 // pred_fallthru
              _
            // Predicated region
            $region76: #{decoder_forward.5} parent=70 // pred_check
              _
            $region77: #{decoder_forward.5} parent=70 // pred_check_branch
              %1238 = sbr.rel (0) target = $region79
            $region78: #{decoder_forward.5} parent=70 // pred_region
              %s1240 = ssub.s32 16, 1
              loop: start=0, step=1, limit=1
              $region80: #{decoder_forward.5} parent=78 // loop_pre_header
                _
              $region81: #{decoder_forward.5} parent=78 // loop_header
                %s1242 = sphi 0, %s1246
                %p1243 = scmp.ge.s32.totalorder %s1242, 1
                %s1247 = sphi %s1227, %s1227
                %s1248 = sphi %s1232, %s1232
              $region82: #{decoder_forward.5} parent=78 // loop_header_branch
                %1245 = sbr.rel (%p1243) target = $region86
              $region83: #{decoder_forward.5} parent=78 // loop_body
                %v1249 = vld [vmem:[%s1247] sm:%s1240]
                %1250 = vst [vmem:[%s1248] sm:%s1240] %v1249
                %v1251 = vld [vmem:[%s1247 + $0x4] sm:%s1240]
                %1252 = vst [vmem:[%s1248 + $0xc] sm:%s1240] %v1251
              $region84: #{decoder_forward.5} parent=78 // loop_footer
                %s1246 = sadd.s32 1, %s1242
              $region85: #{decoder_forward.5} parent=78 // loop_footer_branch
                %1241 = sbr.rel target = $region81
              $region86: #{decoder_forward.5} parent=78 // loop_exit
                _
            $region79: #{decoder_forward.5} parent=70 // pred_fallthru
              _
          $region71: #{decoder_forward.5} parent=66 // pred_fallthru
            _
          %1277 = vnop
        $region67: #{decoder_forward.5} parent=54 // pred_fallthru
          _
      $region55: #{decoder_forward.5} parent=5 // pred_fallthru
        _
      %p1278 = scmp.le.s32.totalorder 2, %s10
      // Predicated region
      $region105: #{decoder_forward.5} parent=5 // pred_check
        %p1279 = pneg %p1278
      $region106: #{decoder_forward.5} parent=5 // pred_check_branch
        %1281 = sbr.rel (%p1279) target = $region108
      $region107: #{decoder_forward.5} parent=5 // pred_region
        %s1282 = ssub.s32 %s10, 2
        // Predicated region
        $region109: #{decoder_forward.5} parent=107 // pred_check
          %p1283 = pneg %p128
        $region110: #{decoder_forward.5} parent=107 // pred_check_branch
          %1285 = sbr.rel (%p1283) target = $region112
        $region111: #{decoder_forward.5} parent=107 // pred_region
          %s1286 = sand.u32 %s113, 1
          %s1287 = sand.u32 %s113, 1
          %s1288 = smul.addr %s1287, 8
          %s1289 = scalar_lea.vmem [#allocation6], %s1288
        $region112: #{decoder_forward.5} parent=107 // pred_fallthru
          _
      $region108: #{decoder_forward.5} parent=5 // pred_fallthru
        _
    $region6: #{decoder_forward.5} parent=1 // loop_footer
      %s14 = sadd.s32 1, %s10
    $region7: #{decoder_forward.5} parent=1 // loop_footer_branch
      %9 = sbr.rel target = $region3
    $region8: #{decoder_forward.5} parent=1 // loop_exit
      _

// kernel: decoder_forward.7
$region0: #{decoder_forward.7}
  #allocation0 [shape = 'u32[]', space=smem, size = 0x4, offset = 0x4, fixed_abs, tag = 'smem constant byte address 0x4 - core index']
  #allocation1 [shape = 'u32[72,128]{1,0:T(1,128)}', space=vmem, size = 0x9000, scoped, tag = 'internal scratch']
  #allocation2 [shape = 'f32[2,8,128]{2,1,0:T(8,128)}', space=vmem, size = 0x2000, scoped, tag = 'scratch operand']
  #allocation3 [shape = 'bf16[2,10,128]{2,1,0:T(8,128)(2,1)}', space=vmem, size = 0x2000, scoped, tag = 'scratch operand']
  #allocation4 [shape = 'bf16[2,10,128]{2,1,0:T(8,128)(2,1)}', space=vmem, size = 0x2000, scoped, tag = 'scratch operand']
  %s0 = inlined_call_operand.vmem [shape: f32[2,3,8,384], index: 0, kind: input, shape index: {}]
  %s1 = inlined_call_operand.vmem [shape: f32[2,8,128], index: 1, kind: input, shape index: {}]
  %s2 = inlined_call_operand.vmem [shape: bf16[3,128,256], index: 2, kind: input, shape index: {}]
  %s3 = inlined_call_operand.vmem [shape: bf16[3,128,128], index: 3, kind: input, shape index: {}]
  %s4 = inlined_call_operand.vmem [shape: f32[2,3,8,128], index: 4, kind: output, shape index: {}]
  %s5 = sld [smem:[#allocation0]]
  $region110: #{decoder_forward.7} parent=0
    _
  %s7 = ssub.s32 1, %s5
  %s8 = scalar_select 0, %s7, %s5
  $region1: #{decoder_forward.7} parent=0
    #allocation5 [shape = 'u8[49152]{0}', space=vmem, size = 0xc000, scoped, tag = 'input window, operand 0']
    #allocation6 [shape = 'u8[16384]{0}', space=vmem, size = 0x4000, scoped, tag = 'output window, operand 0']
    loop: start=0, step=1, limit=5
    $region2: #{decoder_forward.7} parent=1 // loop_pre_header
      _
    $region3: #{decoder_forward.7} parent=1 // loop_header
      %s10 = sphi 0, %s14
      %p11 = scmp.ge.s32.totalorder %s10, 5
      %s20 = sphi 0, %s22
      %s23 = sphi 0, %s20
      %s24 = sphi 0, %s23
      %s40 = sphi 0, %s24
      %s44 = sphi 0, %s44
      %s46 = sphi 0, %s44
      %s47 = sphi 0, %s46
      %s61 = sphi 0, %s47
      %s65 = sphi 0, %s65
      %s67 = sphi 0, %s65
      %s68 = sphi 0, %s67
      %s82 = sphi 0, %s68
      %s86 = sphi 0, %s86
      %s88 = sphi 0, %s86
      %s89 = sphi 0, %s88
      %s103 = sphi 0, %s89
      %s109 = sphi 0, %s111
      %s112 = sphi 0, %s109
      %s113 = sphi 0, %s112
      %s129 = sphi 0, %s113
    $region4: #{decoder_forward.7} parent=1 // loop_header_branch
      %13 = sbr.rel (%p11) target = $region8
    $region5: #{decoder_forward.7} parent=1 // loop_body
      %s15 = ssub.s32 %s10, 1
      %s16 = ssub.s32 %s10, 2
      %s17 = sadd.s32 %s10, 1
      %s18 = ssub.s32 %s10, %s17
      %p19 = scmp.eq.s32.totalorder %s18, 0
      %s21 = sadd.s32 %s20, 1
      %s22 = scalar_select %p19, %s20, %s21
      %p25 = pneg %p19
      %p26 = scmp.eq.s32.totalorder %s10, 2
      %p27 = por %p25, %p26
      %p28 = scmp.ne.s32.totalorder %s20, %s23
      %p29 = scmp.eq.s32.totalorder %s10, 0
      %p30 = por %p28, %p29
      %p31 = scmp.ne.s32.totalorder %s20, %s23
      %p32 = scmp.eq.s32.totalorder %s15, 2
      %p33 = por %p31, %p32
      %p34 = scmp.ne.s32.totalorder %s23, %s24
      %p35 = scmp.eq.s32.totalorder %s15, 0
      %p36 = por %p34, %p35
      %p37 = scmp.ne.s32.totalorder %s23, %s24
      %p38 = scmp.eq.s32.totalorder %s16, 2
      %p39 = por %p37, %p38
      %p41 = scmp.ne.s32.totalorder %s24, %s40
      %p42 = scmp.eq.s32.totalorder %s16, 0
      %p43 = por %p41, %p42
      %s45 = sadd.s32 %s44, 1
      %p48 = scmp.eq.s32.totalorder %s10, 2
      %p49 = scmp.ne.s32.totalorder %s44, %s46
      %p50 = scmp.eq.s32.totalorder %s10, 0
      %p51 = por %p49, %p50
      %p52 = scmp.ne.s32.totalorder %s44, %s46
      %p53 = scmp.eq.s32.totalorder %s15, 2
      %p54 = por %p52, %p53
      %p55 = scmp.ne.s32.totalorder %s46, %s47
      %p56 = scmp.eq.s32.totalorder %s15, 0
      %p57 = por %p55, %p56
      %p58 = scmp.ne.s32.totalorder %s46, %s47
      %p59 = scmp.eq.s32.totalorder %s16, 2
      %p60 = por %p58, %p59
      %p62 = scmp.ne.s32.totalorder %s47, %s61
      %p63 = scmp.eq.s32.totalorder %s16, 0
      %p64 = por %p62, %p63
      %s66 = sadd.s32 %s65, 1
      %p69 = scmp.eq.s32.totalorder %s10, 2
      %p70 = scmp.ne.s32.totalorder %s65, %s67
      %p71 = scmp.eq.s32.totalorder %s10, 0
      %p72 = por %p70, %p71
      %p73 = scmp.ne.s32.totalorder %s65, %s67
      %p74 = scmp.eq.s32.totalorder %s15, 2
      %p75 = por %p73, %p74
      %p76 = scmp.ne.s32.totalorder %s67, %s68
      %p77 = scmp.eq.s32.totalorder %s15, 0
      %p78 = por %p76, %p77
      %p79 = scmp.ne.s32.totalorder %s67, %s68
      %p80 = scmp.eq.s32.totalorder %s16, 2
      %p81 = por %p79, %p80
      %p83 = scmp.ne.s32.totalorder %s68, %s82
      %p84 = scmp.eq.s32.totalorder %s16, 0
      %p85 = por %p83, %p84
      %s87 = sadd.s32 %s86, 1
      %p90 = scmp.eq.s32.totalorder %s10, 2
      %p91 = scmp.ne.s32.totalorder %s86, %s88
      %p92 = scmp.eq.s32.totalorder %s10, 0
      %p93 = por %p91, %p92
      %p94 = scmp.ne.s32.totalorder %s86, %s88
      %p95 = scmp.eq.s32.totalorder %s15, 2
      %p96 = por %p94, %p95
      %p97 = scmp.ne.s32.totalorder %s88, %s89
      %p98 = scmp.eq.s32.totalorder %s15, 0
      %p99 = por %p97, %p98
      %p100 = scmp.ne.s32.totalorder %s88, %s89
      %p101 = scmp.eq.s32.totalorder %s16, 2
      %p102 = por %p100, %p101
      %p104 = scmp.ne.s32.totalorder %s89, %s103
      %p105 = scmp.eq.s32.totalorder %s16, 0
      %p106 = por %p104, %p105
      %s107 = ssub.s32 %s10, %s17
      %p108 = scmp.eq.s32.totalorder %s107, 0
      %s110 = sadd.s32 %s109, 1
      %s111 = scalar_select %p108, %s109, %s110
      %p114 = pneg %p108
      %p115 = scmp.eq.s32.totalorder %s10, 2
      %p116 = por %p114, %p115
      %p117 = scmp.ne.s32.totalorder %s109, %s112
      %p118 = scmp.eq.s32.totalorder %s10, 0
      %p119 = por %p117, %p118
      %p120 = scmp.ne.s32.totalorder %s109, %s112
      %p121 = scmp.eq.s32.totalorder %s15, 2
      %p122 = por %p120, %p121
      %p123 = scmp.ne.s32.totalorder %s112, %s113
      %p124 = scmp.eq.s32.totalorder %s15, 0
      %p125 = por %p123, %p124
      %p126 = scmp.ne.s32.totalorder %s112, %s113
      %p127 = scmp.eq.s32.totalorder %s16, 2
      %p128 = por %p126, %p127
      %p130 = scmp.ne.s32.totalorder %s113, %s129
      %p131 = scmp.eq.s32.totalorder %s16, 0
      %p132 = por %p130, %p131
      %p133 = scmp.le.s32.totalorder 1, %s10
      %p134 = scmp.lt.s32.totalorder %s10, 4
      %p135 = pnand %p133, %p134
      %p136 = pneg %p135
      // Predicated region
      $region9: #{decoder_forward.7} parent=5 // pred_check
        _
      $region10: #{decoder_forward.7} parent=5 // pred_check_branch
        %138 = sbr.rel (%p135) target = $region12
      $region11: #{decoder_forward.7} parent=5 // pred_region
        %s139 = ssub.s32 %s10, 1
        // Predicated region
        $region13: #{decoder_forward.7} parent=11 // pred_check
          %p140 = pneg %p57
        $region14: #{decoder_forward.7} parent=11 // pred_check_branch
          %142 = sbr.rel (%p140) target = $region16
        $region15: #{decoder_forward.7} parent=11 // pred_region
          _
        $region16: #{decoder_forward.7} parent=11 // pred_fallthru
          _
        // Predicated region
        $region17: #{decoder_forward.7} parent=11 // pred_check
          %p143 = pneg %p78
        $region18: #{decoder_forward.7} parent=11 // pred_check_branch
          %145 = sbr.rel (%p143) target = $region20
        $region19: #{decoder_forward.7} parent=11 // pred_region
          _
        $region20: #{decoder_forward.7} parent=11 // pred_fallthru
          _
        // Predicated region
        $region21: #{decoder_forward.7} parent=11 // pred_check
          %p146 = pneg %p99
        $region22: #{decoder_forward.7} parent=11 // pred_check_branch
          %148 = sbr.rel (%p146) target = $region24
        $region23: #{decoder_forward.7} parent=11 // pred_region
          _
        $region24: #{decoder_forward.7} parent=11 // pred_fallthru
          _
      $region12: #{decoder_forward.7} parent=5 // pred_fallthru
        _
      %p149 = scmp.lt.s32.totalorder %s10, 3
      // Predicated region
      $region25: #{decoder_forward.7} parent=5 // pred_check
        %p150 = pneg %p149
      $region26: #{decoder_forward.7} parent=5 // pred_check_branch
        %152 = sbr.rel (%p150) target = $region28
      $region27: #{decoder_forward.7} parent=5 // pred_region
        // Predicated region
        $region29: #{decoder_forward.7} parent=27 // pred_check
          %p153 = pneg %p30
        $region30: #{decoder_forward.7} parent=27 // pred_check_branch
          %155 = sbr.rel (%p153) target = $region32
        $region31: #{decoder_forward.7} parent=27 // pred_region
          %s156 = sand.u32 %s20, 1
          %s157 = sand.u32 %s20, 1
          %s158 = smul.addr %s157, 48
          %s159 = scalar_lea.vmem [#allocation5], %s158
          %s160 = smul.addr %s10, 3
          %s161 = smul.addr %s160, 8
          %s162 = scalar_lea.vmem %s0, %s161
          // Predicated region
          $region33: #{decoder_forward.7} parent=31 // pred_check
            _
          $region34: #{decoder_forward.7} parent=31 // pred_check_branch
            %164 = sbr.rel (0) target = $region36
          $region35: #{decoder_forward.7} parent=31 // pred_region
            // Predicated region
            $region37: #{decoder_forward.7} parent=35 // pred_check
              _
            $region38: #{decoder_forward.7} parent=35 // pred_check_branch
              %166 = sbr.rel (0) target = $region40
            $region39: #{decoder_forward.7} parent=35 // pred_region
              loop: start=0, step=1, limit=1
              $region41: #{decoder_forward.7} parent=39 // loop_pre_header
                _
              $region42: #{decoder_forward.7} parent=39 // loop_header
                %s168 = sphi 0, %s172
                %p169 = scmp.ge.s32.totalorder %s168, 1
                %s173 = sphi %s162, %s162
                %s174 = sphi %s159, %s159
              $region43: #{decoder_forward.7} parent=39 // loop_header_branch
                %171 = sbr.rel (%p169) target = $region47
              $region44: #{decoder_forward.7} parent=39 // loop_body
                %v175 = vld [vmem:[%s173] sm:$0xff]
                %176 = vst [vmem:[%s174] sm:$0xff] %v175
                %v177 = vld [vmem:[%s173 + $0x8] sm:$0xff]
                %178 = vst [vmem:[%s174 + $0x8] sm:$0xff] %v177
                %v179 = vld [vmem:[%s173 + $0x10] sm:$0xff]
                %180 = vst [vmem:[%s174 + $0x10] sm:$0xff] %v179
                %v181 = vld [vmem:[%s173 + $0x48] sm:$0xff]
                %182 = vst [vmem:[%s174 + $0x18] sm:$0xff] %v181
                %v183 = vld [vmem:[%s173 + $0x50] sm:$0xff]
                %184 = vst [vmem:[%s174 + $0x20] sm:$0xff] %v183
                %v185 = vld [vmem:[%s173 + $0x58] sm:$0xff]
                %186 = vst [vmem:[%s174 + $0x28] sm:$0xff] %v185
              $region45: #{decoder_forward.7} parent=39 // loop_footer
                %s172 = sadd.s32 1, %s168
              $region46: #{decoder_forward.7} parent=39 // loop_footer_branch
                %167 = sbr.rel target = $region42
              $region47: #{decoder_forward.7} parent=39 // loop_exit
                _
            $region40: #{decoder_forward.7} parent=35 // pred_fallthru
              _
            // Predicated region
            $region48: #{decoder_forward.7} parent=35 // pred_check
              _
            $region49: #{decoder_forward.7} parent=35 // pred_check_branch
              %188 = sbr.rel target = $region51
            $region50: #{decoder_forward.7} parent=35 // pred_region
              _
            $region51: #{decoder_forward.7} parent=35 // pred_fallthru
              _
          $region36: #{decoder_forward.7} parent=31 // pred_fallthru
            _
          %189 = vnop
        $region32: #{decoder_forward.7} parent=27 // pred_fallthru
          _
      $region28: #{decoder_forward.7} parent=5 // pred_fallthru
        _
      %p190 = scmp.le.s32.totalorder 1, %s10
      %p191 = scmp.lt.s32.totalorder %s10, 4
      %p192 = pnand %p190, %p191
      %p193 = pneg %p192
      // Predicated region
      $region52: #{decoder_forward.7} parent=5 // pred_check
        _
      $region53: #{decoder_forward.7} parent=5 // pred_check_branch
        %195 = sbr.rel (%p192) target = $region55
      $region54: #{decoder_forward.7} parent=5 // pred_region
        %s196 = ssub.s32 %s10, 1
        %s197 = sand.u32 %s23, 1
        %s198 = sand.u32 %s23, 1
        %s199 = smul.addr %s198, 48
        %s200 = scalar_lea.vmem [#allocation5], %s199
        // Predicated region
        $region56: #{decoder_forward.7} parent=54 // pred_check
          %p201 = pneg %p36
        $region57: #{decoder_forward.7} parent=54 // pred_check_branch
          %203 = sbr.rel (%p201) target = $region59
        $region58: #{decoder_forward.7} parent=54 // pred_region
          _
        $region59: #{decoder_forward.7} parent=54 // pred_fallthru
          _
        %s204 = sand.u32 %s23, 1
        %s205 = sand.u32 %s23, 1
        %s206 = smul.addr %s205, 48
        %s207 = scalar_lea.vmem [#allocation5], %s206
        %p208 = pneg %p36
        %p209 = pneg %p33
        %p210 = pneg %p57
        %p211 = pneg %p54
        %p212 = pneg %p78
        %p213 = pneg %p75
        %p214 = pneg %p99
        %p215 = pneg %p96
        %p216 = pneg %p125
        %p217 = pneg %p122
        %s218 = sand.u32 %s112, 1
        %s219 = sand.u32 %s112, 1
        %s220 = smul.addr %s219, 16
        %s221 = scalar_lea.vmem [#allocation6], %s220
        %p223 = scmp.eq.s32.totalorder %s15, 0
        // Predicated region
        $region60: #{decoder_forward.7} parent=54 // pred_check
          %p224 = pneg %p223
        $region61: #{decoder_forward.7} parent=54 // pred_check_branch
          %226 = sbr.rel (%p224) target = $region63
        $region62: #{decoder_forward.7} parent=54 // pred_region
          %vm227 = vcmask 1040384
          %vm228 = vsmask.f32 256
          %vm229 = vmand %vm227, %vm228
          %v230 = vld [vmem:[#allocation3] sm:$0x1]
          %v231 = vsel %vm229, 0, %v230
          %232 = vst [vmem:[#allocation3] sm:$0x1] %v231
          %v233 = vld [vmem:[#allocation3 + $0x8] sm:$0x1]
          %v234 = vsel %vm229, 0, %v233
          %235 = vst [vmem:[#allocation3 + $0x8] sm:$0x1] %v234
          %vm236 = vsmask.f32 7938
          %vm237 = vmand %vm227, %vm236
          %v238 = vld [vmem:[#allocation3 + $0x4] sm:$0x1]
          %v239 = vsel %vm237, 0, %v238
          %240 = vst [vmem:[#allocation3 + $0x4] sm:$0x1] %v239
          %v241 = vld [vmem:[#allocation3 + $0xc] sm:$0x1]
          %v242 = vsel %vm237, 0, %v241
          %243 = vst [vmem:[#allocation3 + $0xc] sm:$0x1] %v242
          %v244 = vld [vmem:[#allocation4] sm:$0x1]
          %v245 = vsel %vm229, 0, %v244
          %246 = vst [vmem:[#allocation4] sm:$0x1] %v245
          %v247 = vld [vmem:[#allocation4 + $0x8] sm:$0x1]
          %v248 = vsel %vm229, 0, %v247
          %249 = vst [vmem:[#allocation4 + $0x8] sm:$0x1] %v248
          %v250 = vld [vmem:[#allocation4 + $0x4] sm:$0x1]
          %v251 = vsel %vm237, 0, %v250
          %252 = vst [vmem:[#allocation4 + $0x4] sm:$0x1] %v251
          %v253 = vld [vmem:[#allocation4 + $0xc] sm:$0x1]
          %v254 = vsel %vm237, 0, %v253
          %255 = vst [vmem:[#allocation4 + $0xc] sm:$0x1] %v254
          %v256 = vld [vmem:[%s1] sm:$0xff]
          %v257 = vld [vmem:[%s1 + $0x8] sm:$0xff]
          %258 = vst [vmem:[#allocation2] sm:$0xff] %v256
          %259 = vst [vmem:[#allocation2 + $0x8] sm:$0xff] %v257
          %v260 = vld [vmem:[%s1] sm:$0xff]
          %v261 = vld [vmem:[%s1 + $0x8] sm:$0xff]
          %v262 = vpack.c.bf16 %v260, %v260
          %v263 = vpack.c.bf16 %v261, %v261
          %v265 = vshrl.u32 %v262, 16
          %v267 = vrot.slane %v265, 7
          %v268 = vshll.u32 %v262, 16
          %v270 = vor.u32 %v267, %v268
          %v271 = vrot.slane %v267, 4
          %v273 = vshrl.u32 %v263, 16
          %v275 = vrot.slane %v273, 7
          %v276 = vshll.u32 %v263, 16
          %v278 = vor.u32 %v275, %v276
          %v279 = vrot.slane %v275, 4
          %vm284 = vcmask 1043456
          %vm285 = vmand %vm284, %vm236
          %v286 = vld [vmem:[#allocation3] sm:$0xf]
          %v287 = vsel %vm285, %v270, %v286
          %288 = vst [vmem:[#allocation3] sm:$0xf] %v287
          %v289 = vld [vmem:[#allocation3 + $0x4] sm:$0x1]
          %v290 = vsel %vm229, %v271, %v289
          %291 = vst [vmem:[#allocation3 + $0x4] sm:$0x1] %v290
          %v292 = vld [vmem:[#allocation3 + $0x8] sm:$0xf]
          %v293 = vsel %vm285, %v278, %v292
          %294 = vst [vmem:[#allocation3 + $0x8] sm:$0xf] %v293
          %v295 = vld [vmem:[#allocation3 + $0xc] sm:$0x1]
          %v296 = vsel %vm229, %v279, %v295
          %297 = vst [vmem:[#allocation3 + $0xc] sm:$0x1] %v296
        $region63: #{decoder_forward.7} parent=54 // pred_fallthru
          _
        %v298 = vld [vmem:[%s200] sm:$0xff]
        %v299 = vld [vmem:[%s200 + $0x8] sm:$0xff]
        %v300 = vld [vmem:[%s200 + $0x10] sm:$0xff]
        %v301 = vld [vmem:[%s200 + $0x18] sm:$0xff]
        %v302 = vld [vmem:[%s200 + $0x20] sm:$0xff]
        %v303 = vld [vmem:[%s200 + $0x28] sm:$0xff]
        %v304 = vld [vmem:[#allocation3] sm:$0xf]
        %v305 = vld [vmem:[#allocation3 + $0x8] sm:$0xf]
        %v306 = vld [vmem:[%s2] sm:$0xff]
        %v307 = vld [vmem:[%s2 + $0x8] sm:$0xff]
        %v308 = vld [vmem:[%s2 + $0x10] sm:$0xff]
        %v309 = vld [vmem:[%s2 + $0x18] sm:$0xff]
        %v310 = vld [vmem:[%s2 + $0x20] sm:$0xff]
        %v311 = vld [vmem:[%s2 + $0x28] sm:$0xff]
        %v312 = vld [vmem:[%s2 + $0x30] sm:$0xff]
        %v313 = vld [vmem:[%s2 + $0x38] sm:$0xff]
        %v314 = vld [vmem:[%s2 + $0x40] sm:$0xff]
        %v315 = vld [vmem:[%s2 + $0x48] sm:$0xff]
        %v316 = vld [vmem:[%s2 + $0x50] sm:$0xff]
        %v317 = vld [vmem:[%s2 + $0x58] sm:$0xff]
        %v318 = vld [vmem:[%s2 + $0x60] sm:$0xff]
        %v319 = vld [vmem:[%s2 + $0x68] sm:$0xff]
        %v320 = vld [vmem:[%s2 + $0x70] sm:$0xff]
        %v321 = vld [vmem:[%s2 + $0x78] sm:$0xff]
        %v322 = vld [vmem:[#allocation3 + $0x4] sm:$0x1]
        %v323 = vld [vmem:[#allocation3 + $0xc] sm:$0x1]
        %vm324 = vsmask.f32 3328
        %vm325 = vsmask.f32 7440
        %vm326 = vmor %vm324, %vm325
        %v328 = vshrl.u32 %v304, 16
        %v330 = vrot.slane %v328, 4
        %v331 = vshll.u32 %v304, 16
        %v333 = vrot.slane %v331, 5
        %v334 = vor.u32 %v330, %v333
        %v335 = vrot.slane %v334, 4
        %v337 = vshll.u32 %v322, 16
        %v339 = vrot.slane %v337, 5
        %v340 = vsel %vm326, %v335, %v339
        %v342 = vshrl.u32 %v305, 16
        %v344 = vrot.slane %v342, 4
        %v345 = vshll.u32 %v305, 16
        %v347 = vrot.slane %v345, 5
        %v348 = vor.u32 %v344, %v347
        %v349 = vrot.slane %v348, 4
        %v351 = vshll.u32 %v323, 16
        %v353 = vrot.slane %v351, 5
        %v354 = vsel %vm326, %v349, %v353
        %s355 = scalar_lea.vmem %s2, 128
        %v356 = vld [vmem:[%s355] sm:$0xff]
        %v357 = vld [vmem:[%s355 + $0x8] sm:$0xff]
        %v358 = vld [vmem:[%s355 + $0x10] sm:$0xff]
        %v359 = vld [vmem:[%s355 + $0x18] sm:$0xff]
        %v360 = vld [vmem:[%s355 + $0x20] sm:$0xff]
        %v361 = vld [vmem:[%s355 + $0x28] sm:$0xff]
        %v362 = vld [vmem:[%s355 + $0x30] sm:$0xff]
        %v363 = vld [vmem:[%s355 + $0x38] sm:$0xff]
        %v364 = vld [vmem:[%s355 + $0x40] sm:$0xff]
        %v365 = vld [vmem:[%s355 + $0x48] sm:$0xff]
        %v366 = vld [vmem:[%s355 + $0x50] sm:$0xff]
        %v367 = vld [vmem:[%s355 + $0x58] sm:$0xff]
        %v368 = vld [vmem:[%s355 + $0x60] sm:$0xff]
        %v369 = vld [vmem:[%s355 + $0x68] sm:$0xff]
        %v370 = vld [vmem:[%s355 + $0x70] sm:$0xff]
        %v371 = vld [vmem:[%s355 + $0x78] sm:$0xff]
        %v372 = vunpack.c.l.b16 %v340
        %v373 = vunpack.c.l.b16 %v354
        %v374 = vpack.c.b16 %v373, %v372
        %v392 = vunpack.c.l.b16 %v356
        %v393 = vunpack.c.h.b16 %v356
        %v394 = vunpack.c.l.b16 %v357
        %v395 = vunpack.c.h.b16 %v357
        %v396 = vunpack.c.l.b16 %v358
        %v397 = vunpack.c.h.b16 %v358
        %v398 = vunpack.c.l.b16 %v359
        %v399 = vunpack.c.h.b16 %v359
        %v400 = vunpack.c.l.b16 %v360
        %v401 = vunpack.c.h.b16 %v360
        %v402 = vunpack.c.l.b16 %v361
        %v403 = vunpack.c.h.b16 %v361
        %v404 = vunpack.c.l.b16 %v362
        %v405 = vunpack.c.h.b16 %v362
        %v406 = vunpack.c.l.b16 %v363
        %v407 = vunpack.c.h.b16 %v363
        %v408 = vunpack.c.l.b16 %v364
        %v409 = vunpack.c.h.b16 %v364
        %v410 = vunpack.c.l.b16 %v365
        %v411 = vunpack.c.h.b16 %v365
        %v412 = vunpack.c.l.b16 %v366
        %v413 = vunpack.c.h.b16 %v366
        %v414 = vunpack.c.l.b16 %v367
        %v415 = vunpack.c.h.b16 %v367
        %v416 = vunpack.c.l.b16 %v368
        %v417 = vunpack.c.h.b16 %v368
        %v418 = vunpack.c.l.b16 %v369
        %v419 = vunpack.c.h.b16 %v369
        %v420 = vunpack.c.l.b16 %v370
        %v421 = vunpack.c.h.b16 %v370
        %v422 = vunpack.c.l.b16 %v371
        %v423 = vunpack.c.h.b16 %v371
        %v424 = vpack.c.b16 %v394, %v392
        %v425 = vpack.c.b16 %v395, %v393
        %v426 = vpack.c.b16 %v398, %v396
        %v427 = vpack.c.b16 %v399, %v397
        %v428 = vpack.c.b16 %v402, %v400
        %v429 = vpack.c.b16 %v403, %v401
        %v430 = vpack.c.b16 %v406, %v404
        %v431 = vpack.c.b16 %v407, %v405
        %v432 = vpack.c.b16 %v410, %v408
        %v433 = vpack.c.b16 %v411, %v409
        %v434 = vpack.c.b16 %v414, %v412
        %v435 = vpack.c.b16 %v415, %v413
        %v436 = vpack.c.b16 %v418, %v416
        %v437 = vpack.c.b16 %v419, %v417
        %v438 = vpack.c.b16 %v422, %v420
        %v439 = vpack.c.b16 %v423, %v421
        %456 = vmatpush.bf16.msra.mxu0 %v438
        %457 = vmatpush.bf16.msra.mxu0 %v436
        %458 = vmatpush.bf16.msra.mxu0 %v434
        %459 = vmatpush.bf16.msra.mxu0 %v432
        %460 = vmatpush.bf16.msra.mxu0 %v430
        %461 = vmatpush.bf16.msra.mxu0 %v428
        %462 = vmatpush.bf16.msra.mxu0 %v426
        %463 = vmatpush.bf16.msra.mxu0 %v424
        %464 = vmatmul.bf16.gmra.mxu0 %v374
        %v465 = vpop.f32.mrf.mxu0
        %v466 = vadd.f32 0.0, %v465
        %v467 = vpop.f32.mrf.mxu0
        %v468 = vadd.f32 0.0, %v467
        %469 = vdwg.mxu0
        %470 = vmatpush.bf16.msra.mxu0 %v439
        %471 = vmatpush.bf16.msra.mxu0 %v437
        %472 = vmatpush.bf16.msra.mxu0 %v435
        %473 = vmatpush.bf16.msra.mxu0 %v433
        %474 = vmatpush.bf16.msra.mxu0 %v431
        %475 = vmatpush.bf16.msra.mxu0 %v429
        %476 = vmatpush.bf16.msra.mxu0 %v427
        %477 = vmatpush.bf16.msra.mxu0 %v425
        %478 = vmatmul.bf16.gmra.mxu0 %v374
        %v479 = vpop.f32.mrf.mxu0
        %v480 = vadd.f32 0.0, %v479
        %v481 = vpop.f32.mrf.mxu0
        %v482 = vadd.f32 0.0, %v481
        %483 = vdwg.mxu0
        %v486 = vunpack.c.l.b16 %v304
        %v487 = vunpack.c.l.b16 %v305
        %v488 = vpack.c.b16 %v487, %v486
        %v506 = vunpack.c.l.b16 %v306
        %v507 = vunpack.c.h.b16 %v306
        %v508 = vunpack.c.l.b16 %v307
        %v509 = vunpack.c.h.b16 %v307
        %v510 = vunpack.c.l.b16 %v308
        %v511 = vunpack.c.h.b16 %v308
        %v512 = vunpack.c.l.b16 %v309
        %v513 = vunpack.c.h.b16 %v309
        %v514 = vunpack.c.l.b16 %v310
        %v515 = vunpack.c.h.b16 %v310
        %v516 = vunpack.c.l.b16 %v311
        %v517 = vunpack.c.h.b16 %v311
        %v518 = vunpack.c.l.b16 %v312
        %v519 = vunpack.c.h.b16 %v312
        %v520 = vunpack.c.l.b16 %v313
        %v521 = vunpack.c.h.b16 %v313
        %v522 = vunpack.c.l.b16 %v314
        %v523 = vunpack.c.h.b16 %v314
        %v524 = vunpack.c.l.b16 %v315
        %v525 = vunpack.c.h.b16 %v315
        %v526 = vunpack.c.l.b16 %v316
        %v527 = vunpack.c.h.b16 %v316
        %v528 = vunpack.c.l.b16 %v317
        %v529 = vunpack.c.h.b16 %v317
        %v530 = vunpack.c.l.b16 %v318
        %v531 = vunpack.c.h.b16 %v318
        %v532 = vunpack.c.l.b16 %v319
        %v533 = vunpack.c.h.b16 %v319
        %v534 = vunpack.c.l.b16 %v320
        %v535 = vunpack.c.h.b16 %v320
        %v536 = vunpack.c.l.b16 %v321
        %v537 = vunpack.c.h.b16 %v321
        %v538 = vpack.c.b16 %v508, %v506
        %v539 = vpack.c.b16 %v509, %v507
        %v540 = vpack.c.b16 %v512, %v510
        %v541 = vpack.c.b16 %v513, %v511
        %v542 = vpack.c.b16 %v516, %v514
        %v543 = vpack.c.b16 %v517, %v515
        %v544 = vpack.c.b16 %v520, %v518
        %v545 = vpack.c.b16 %v521, %v519
        %v546 = vpack.c.b16 %v524, %v522
        %v547 = vpack.c.b16 %v525, %v523
        %v548 = vpack.c.b16 %v528, %v526
        %v549 = vpack.c.b16 %v529, %v527
        %v550 = vpack.c.b16 %v532, %v530
        %v551 = vpack.c.b16 %v533, %v531
        %v552 = vpack.c.b16 %v536, %v534
        %v553 = vpack.c.b16 %v537, %v535
        %570 = vmatpush.bf16.msra.mxu0 %v552
        %571 = vmatpush.bf16.msra.mxu0 %v550
        %572 = vmatpush.bf16.msra.mxu0 %v548
        %573 = vmatpush.bf16.msra.mxu0 %v546
        %574 = vmatpush.bf16.msra.mxu0 %v544
        %575 = vmatpush.bf16.msra.mxu0 %v542
        %576 = vmatpush.bf16.msra.mxu0 %v540
        %577 = vmatpush.bf16.msra.mxu0 %v538
        %578 = vmatmul.bf16.gmra.mxu0 %v488
        %v579 = vpop.f32.mrf.mxu0
        %v580 = vadd.f32 %v466, %v579
        %v581 = vpop.f32.mrf.mxu0
        %v582 = vadd.f32 %v468, %v581
        %583 = vdwg.mxu0
        %584 = vmatpush.bf16.msra.mxu0 %v553
        %585 = vmatpush.bf16.msra.mxu0 %v551
        %586 = vmatpush.bf16.msra.mxu0 %v549
        %587 = vmatpush.bf16.msra.mxu0 %v547
        %588 = vmatpush.bf16.msra.mxu0 %v545
        %589 = vmatpush.bf16.msra.mxu0 %v543
        %590 = vmatpush.bf16.msra.mxu0 %v541
        %591 = vmatpush.bf16.msra.mxu0 %v539
        %592 = vmatmul.bf16.gmra.mxu0 %v488
        %v593 = vpop.f32.mrf.mxu0
        %v594 = vadd.f32 %v480, %v593
        %v595 = vpop.f32.mrf.mxu0
        %v596 = vadd.f32 %v482, %v595
        %597 = vdwg.mxu0
        %v598 = vld [vmem:[#allocation3] sm:$0xe]
        %v599 = vld [vmem:[#allocation3 + $0x8] sm:$0xe]
        %vm604 = vcmask 1042432
        %vm605 = vcmask 1046532
        %vm606 = vmor %vm604, %vm605
        %v607 = vrot.slane %v598, 5
        %v608 = vrot.slane %v607, 4
        %v609 = vrot.slane %v322, 5
        %v610 = vsel %vm606, %v608, %v609
        %v611 = vrot.slane %v599, 5
        %v612 = vrot.slane %v611, 4
        %v613 = vrot.slane %v323, 5
        %v614 = vsel %vm606, %v612, %v613
        %s615 = scalar_lea.vmem %s2, 256
        %v616 = vld [vmem:[%s615] sm:$0xff]
        %v617 = vld [vmem:[%s615 + $0x8] sm:$0xff]
        %v618 = vld [vmem:[%s615 + $0x10] sm:$0xff]
        %v619 = vld [vmem:[%s615 + $0x18] sm:$0xff]
        %v620 = vld [vmem:[%s615 + $0x20] sm:$0xff]
        %v621 = vld [vmem:[%s615 + $0x28] sm:$0xff]
        %v622 = vld [vmem:[%s615 + $0x30] sm:$0xff]
        %v623 = vld [vmem:[%s615 + $0x38] sm:$0xff]
        %v624 = vld [vmem:[%s615 + $0x40] sm:$0xff]
        %v625 = vld [vmem:[%s615 + $0x48] sm:$0xff]
        %v626 = vld [vmem:[%s615 + $0x50] sm:$0xff]
        %v627 = vld [vmem:[%s615 + $0x58] sm:$0xff]
        %v628 = vld [vmem:[%s615 + $0x60] sm:$0xff]
        %v629 = vld [vmem:[%s615 + $0x68] sm:$0xff]
        %v630 = vld [vmem:[%s615 + $0x70] sm:$0xff]
        %v631 = vld [vmem:[%s615 + $0x78] sm:$0xff]
        %v632 = vunpack.c.l.b16 %v610
        %v633 = vunpack.c.l.b16 %v614
        %v634 = vpack.c.b16 %v633, %v632
        %v652 = vunpack.c.l.b16 %v616
        %v653 = vunpack.c.h.b16 %v616
        %v654 = vunpack.c.l.b16 %v617
        %v655 = vunpack.c.h.b16 %v617
        %v656 = vunpack.c.l.b16 %v618
        %v657 = vunpack.c.h.b16 %v618
        %v658 = vunpack.c.l.b16 %v619
        %v659 = vunpack.c.h.b16 %v619
        %v660 = vunpack.c.l.b16 %v620
        %v661 = vunpack.c.h.b16 %v620
        %v662 = vunpack.c.l.b16 %v621
        %v663 = vunpack.c.h.b16 %v621
        %v664 = vunpack.c.l.b16 %v622
        %v665 = vunpack.c.h.b16 %v622
        %v666 = vunpack.c.l.b16 %v623
        %v667 = vunpack.c.h.b16 %v623
        %v668 = vunpack.c.l.b16 %v624
        %v669 = vunpack.c.h.b16 %v624
        %v670 = vunpack.c.l.b16 %v625
        %v671 = vunpack.c.h.b16 %v625
        %v672 = vunpack.c.l.b16 %v626
        %v673 = vunpack.c.h.b16 %v626
        %v674 = vunpack.c.l.b16 %v627
        %v675 = vunpack.c.h.b16 %v627
        %v676 = vunpack.c.l.b16 %v628
        %v677 = vunpack.c.h.b16 %v628
        %v678 = vunpack.c.l.b16 %v629
        %v679 = vunpack.c.h.b16 %v629
        %v680 = vunpack.c.l.b16 %v630
        %v681 = vunpack.c.h.b16 %v630
        %v682 = vunpack.c.l.b16 %v631
        %v683 = vunpack.c.h.b16 %v631
        %v684 = vpack.c.b16 %v654, %v652
        %v685 = vpack.c.b16 %v655, %v653
        %v686 = vpack.c.b16 %v658, %v656
        %v687 = vpack.c.b16 %v659, %v657
        %v688 = vpack.c.b16 %v662, %v660
        %v689 = vpack.c.b16 %v663, %v661
        %v690 = vpack.c.b16 %v666, %v664
        %v691 = vpack.c.b16 %v667, %v665
        %v692 = vpack.c.b16 %v670, %v668
        %v693 = vpack.c.b16 %v671, %v669
        %v694 = vpack.c.b16 %v674, %v672
        %v695 = vpack.c.b16 %v675, %v673
        %v696 = vpack.c.b16 %v678, %v676
        %v697 = vpack.c.b16 %v679, %v677
        %v698 = vpack.c.b16 %v682, %v680
        %v699 = vpack.c.b16 %v683, %v681
        %716 = vmatpush.bf16.msra.mxu0 %v698
        %717 = vmatpush.bf16.msra.mxu0 %v696
        %718 = vmatpush.bf16.msra.mxu0 %v694
        %719 = vmatpush.bf16.msra.mxu0 %v692
        %720 = vmatpush.bf16.msra.mxu0 %v690
        %721 = vmatpush.bf16.msra.mxu0 %v688
        %722 = vmatpush.bf16.msra.mxu0 %v686
        %723 = vmatpush.bf16.msra.mxu0 %v684
        %724 = vmatmul.bf16.gmra.mxu0 %v634
        %v725 = vpop.f32.mrf.mxu0
        %v726 = vadd.f32 0.0, %v725
        %v727 = vpop.f32.mrf.mxu0
        %v728 = vadd.f32 0.0, %v727
        %729 = vdwg.mxu0
        %730 = vmatpush.bf16.msra.mxu0 %v699
        %731 = vmatpush.bf16.msra.mxu0 %v697
        %732 = vmatpush.bf16.msra.mxu0 %v695
        %733 = vmatpush.bf16.msra.mxu0 %v693
        %734 = vmatpush.bf16.msra.mxu0 %v691
        %735 = vmatpush.bf16.msra.mxu0 %v689
        %736 = vmatpush.bf16.msra.mxu0 %v687
        %737 = vmatpush.bf16.msra.mxu0 %v685
        %738 = vmatmul.bf16.gmra.mxu0 %v634
        %v739 = vpop.f32.mrf.mxu0
        %v740 = vadd.f32 0.0, %v739
        %v741 = vpop.f32.mrf.mxu0
        %v742 = vadd.f32 0.0, %v741
        %743 = vdwg.mxu0
        %v744 = vadd.f32 %v580, %v726
        %v745 = vadd.f32 %v594, %v740
        %v746 = vadd.f32 %v582, %v728
        %v747 = vadd.f32 %v596, %v742
        %v748 = vadd.f32 %v298, %v744
        %v749 = vadd.f32 %v299, %v745
        %v750 = vadd.f32 %v301, %v746
        %v751 = vadd.f32 %v302, %v747
        %v752 = vxor.u32 %v748, 2147483648
        %v753 = vxor.u32 %v750, 2147483648
        %v754 = vmul.f32 %v752, 1.442695
        %v755 = vpow.pop %v754
        %v756 = vmul.f32 %v753, 1.442695
        %v757 = vpow.pop %v756
        %v758 = vadd.f32 %v755, 1.0
        %v759 = vadd.f32 %v757, 1.0
        %v760 = vrcp.pop %v758
        %v761 = vmul.f32 %v758, %v760
        %v762 = vsub.f32 1.0, %v761
        %v763 = vmul.f32 %v760, %v762
        %v764 = vadd.f32 %v760, %v763
        %vm765 = vweird.f32 %v758
        %vm766 = vweird.f32 %v760
        %vm767 = vmor %vm765, %vm766
        %v768 = vsel %vm767, %v760, %v764
        %v769 = vand.u32 2147483647, %v758
        %vm770 = vcmp.eq.f32.partialorder %v769, 8.507059e+37
        %v771 = vand.u32 %v758, 2147483648
        %v772 = vor.u32 1.1754944e-38, %v771
        %v773 = vsel %vm770, %v772, %v768
        %v774 = vmul.f32 1.0, %v773
        %v775 = vrcp.pop %v759
        %v776 = vmul.f32 %v759, %v775
        %v777 = vsub.f32 1.0, %v776
        %v778 = vmul.f32 %v775, %v777
        %v779 = vadd.f32 %v775, %v778
        %vm780 = vweird.f32 %v759
        %vm781 = vweird.f32 %v775
        %vm782 = vmor %vm780, %vm781
        %v783 = vsel %vm782, %v775, %v779
        %v784 = vand.u32 2147483647, %v759
        %vm785 = vcmp.eq.f32.partialorder %v784, 8.507059e+37
        %v786 = vand.u32 %v759, 2147483648
        %v787 = vor.u32 1.1754944e-38, %v786
        %v788 = vsel %vm785, %v787, %v783
        %v789 = vmul.f32 1.0, %v788
        %v790 = vxor.u32 %v749, 2147483648
        %v791 = vxor.u32 %v751, 2147483648
        %v792 = vmul.f32 %v790, 1.442695
        %v793 = vpow.pop %v792
        %v794 = vmul.f32 %v791, 1.442695
        %v795 = vpow.pop %v794
        %v796 = vadd.f32 %v793, 1.0
        %v797 = vadd.f32 %v795, 1.0
        %v798 = vrcp.pop %v796
        %v799 = vmul.f32 %v796, %v798
        %v800 = vsub.f32 1.0, %v799
        %v801 = vmul.f32 %v798, %v800
        %v802 = vadd.f32 %v798, %v801
        %vm803 = vweird.f32 %v796
        %vm804 = vweird.f32 %v798
        %vm805 = vmor %vm803, %vm804
        %v806 = vsel %vm805, %v798, %v802
        %v807 = vand.u32 2147483647, %v796
        %vm808 = vcmp.eq.f32.partialorder %v807, 8.507059e+37
        %v809 = vand.u32 %v796, 2147483648
        %v810 = vor.u32 1.1754944e-38, %v809
        %v811 = vsel %vm808, %v810, %v806
        %v812 = vmul.f32 1.0, %v811
        %v813 = vrcp.pop %v797
        %v814 = vmul.f32 %v797, %v813
        %v815 = vsub.f32 1.0, %v814
        %v816 = vmul.f32 %v813, %v815
        %v817 = vadd.f32 %v813, %v816
        %vm818 = vweird.f32 %v797
        %vm819 = vweird.f32 %v813
        %vm820 = vmor %vm818, %vm819
        %v821 = vsel %vm820, %v813, %v817
        %v822 = vand.u32 2147483647, %v797
        %vm823 = vcmp.eq.f32.partialorder %v822, 8.507059e+37
        %v824 = vand.u32 %v797, 2147483648
        %v825 = vor.u32 1.1754944e-38, %v824
        %v826 = vsel %vm823, %v825, %v821
        %v827 = vmul.f32 1.0, %v826
        %v828 = vld [vmem:[#allocation2] sm:$0xff]
        %v829 = vld [vmem:[#allocation2 + $0x8] sm:$0xff]
        %v830 = vmul.f32 %v828, %v812
        %v831 = vmul.f32 %v829, %v827
        %v832 = vpack.c.bf16 %v830, %v830
        %v833 = vpack.c.bf16 %v831, %v831
        %v835 = vshrl.u32 %v832, 16
        %v837 = vrot.slane %v835, 7
        %v838 = vshll.u32 %v832, 16
        %v840 = vor.u32 %v837, %v838
        %v841 = vrot.slane %v837, 4
        %v843 = vshrl.u32 %v833, 16
        %v845 = vrot.slane %v843, 7
        %v846 = vshll.u32 %v833, 16
        %v848 = vor.u32 %v845, %v846
        %v849 = vrot.slane %v845, 4
        %vm854 = vcmask 1043456
        %vm855 = vsmask.f32 7938
        %vm856 = vmand %vm854, %vm855
        %v857 = vld [vmem:[#allocation4] sm:$0xf]
        %v858 = vsel %vm856, %v840, %v857
        %859 = vst [vmem:[#allocation4] sm:$0xf] %v858
        %vm860 = vcmask 1040384
        %vm861 = vsmask.f32 256
        %vm862 = vmand %vm860, %vm861
        %v863 = vld [vmem:[#allocation4 + $0x4] sm:$0x1]
        %v864 = vsel %vm862, %v841, %v863
        %865 = vst [vmem:[#allocation4 + $0x4] sm:$0x1] %v864
        %v866 = vld [vmem:[#allocation4 + $0x8] sm:$0xf]
        %v867 = vsel %vm856, %v848, %v866
        %868 = vst [vmem:[#allocation4 + $0x8] sm:$0xf] %v867
        %v869 = vld [vmem:[#allocation4 + $0xc] sm:$0x1]
        %v870 = vsel %vm862, %v849, %v869
        %871 = vst [vmem:[#allocation4 + $0xc] sm:$0x1] %v870
        %v872 = vld [vmem:[#allocation4] sm:$0xf]
        %v873 = vld [vmem:[#allocation4 + $0x8] sm:$0xf]
        %v874 = vld [vmem:[%s3] sm:$0xf]
        %v875 = vld [vmem:[%s3 + $0x4] sm:$0xf]
        %v876 = vld [vmem:[%s3 + $0x8] sm:$0xf]
        %v877 = vld [vmem:[%s3 + $0xc] sm:$0xf]
        %v878 = vld [vmem:[%s3 + $0x10] sm:$0xf]
        %v879 = vld [vmem:[%s3 + $0x14] sm:$0xf]
        %v880 = vld [vmem:[%s3 + $0x18] sm:$0xf]
        %v881 = vld [vmem:[%s3 + $0x1c] sm:$0xf]
        %v882 = vld [vmem:[%s3 + $0x20] sm:$0xf]
        %v883 = vld [vmem:[%s3 + $0x24] sm:$0xf]
        %v884 = vld [vmem:[%s3 + $0x28] sm:$0xf]
        %v885 = vld [vmem:[%s3 + $0x2c] sm:$0xf]
        %v886 = vld [vmem:[%s3 + $0x30] sm:$0xf]
        %v887 = vld [vmem:[%s3 + $0x34] sm:$0xf]
        %v888 = vld [vmem:[%s3 + $0x38] sm:$0xf]
        %v889 = vld [vmem:[%s3 + $0x3c] sm:$0xf]
        %v892 = vunpack.c.l.b16 %v872
        %v893 = vunpack.c.l.b16 %v873
        %v894 = vpack.c.b16 %v893, %v892
        %v912 = vunpack.c.l.b16 %v874
        %v913 = vunpack.c.l.b16 %v875
        %v914 = vunpack.c.l.b16 %v876
        %v915 = vunpack.c.l.b16 %v877
        %v916 = vunpack.c.l.b16 %v878
        %v917 = vunpack.c.l.b16 %v879
        %v918 = vunpack.c.l.b16 %v880
        %v919 = vunpack.c.l.b16 %v881
        %v920 = vunpack.c.l.b16 %v882
        %v921 = vunpack.c.l.b16 %v883
        %v922 = vunpack.c.l.b16 %v884
        %v923 = vunpack.c.l.b16 %v885
        %v924 = vunpack.c.l.b16 %v886
        %v925 = vunpack.c.l.b16 %v887
        %v926 = vunpack.c.l.b16 %v888
        %v927 = vunpack.c.l.b16 %v889
        %v928 = vpack.c.b16 %v913, %v912
        %v929 = vpack.c.b16 %v915, %v914
        %v930 = vpack.c.b16 %v917, %v916
        %v931 = vpack.c.b16 %v919, %v918
        %v932 = vpack.c.b16 %v921, %v920
        %v933 = vpack.c.b16 %v923, %v922
        %v934 = vpack.c.b16 %v925, %v924
        %v935 = vpack.c.b16 %v927, %v926
        %944 = vmatpush.bf16.msra.mxu0 %v935
        %945 = vmatpush.bf16.msra.mxu0 %v934
        %946 = vmatpush.bf16.msra.mxu0 %v933
        %947 = vmatpush.bf16.msra.mxu0 %v932
        %948 = vmatpush.bf16.msra.mxu0 %v931
        %949 = vmatpush.bf16.msra.mxu0 %v930
        %950 = vmatpush.bf16.msra.mxu0 %v929
        %951 = vmatpush.bf16.msra.mxu0 %v928
        %952 = vmatmul.bf16.gmra.mxu0 %v894
        %v953 = vpop.f32.mrf.mxu0
        %v954 = vadd.f32 0.0, %v953
        %v955 = vpop.f32.mrf.mxu0
        %v956 = vadd.f32 0.0, %v955
        %957 = vdwg.mxu0
        %v958 = vadd.f32 %v300, %v954
        %v959 = vadd.f32 %v303, %v956
        %v960 = vld [vmem:[#allocation4] sm:$0xf]
        %v961 = vld [vmem:[#allocation4 + $0x4] sm:$0x1]
        %v962 = vld [vmem:[#allocation4 + $0x8] sm:$0xf]
        %v963 = vld [vmem:[#allocation4 + $0xc] sm:$0x1]
        %v965 = vshrl.u32 %v960, 16
        %v967 = vrot.slane %v965, 4
        %v968 = vshll.u32 %v960, 16
        %v970 = vrot.slane %v968, 5
        %v971 = vor.u32 %v967, %v970
        %v972 = vrot.slane %v971, 4
        %v974 = vshll.u32 %v961, 16
        %v976 = vrot.slane %v974, 5
        %v977 = vsel %vm326, %v972, %v976
        %v979 = vshrl.u32 %v962, 16
        %v981 = vrot.slane %v979, 4
        %v982 = vshll.u32 %v962, 16
        %v984 = vrot.slane %v982, 5
        %v985 = vor.u32 %v981, %v984
        %v986 = vrot.slane %v985, 4
        %v988 = vshll.u32 %v963, 16
        %v990 = vrot.slane %v988, 5
        %v991 = vsel %vm326, %v986, %v990
        %s992 = scalar_lea.vmem %s3, 64
        %v993 = vld [vmem:[%s992] sm:$0xf]
        %v994 = vld [vmem:[%s992 + $0x4] sm:$0xf]
        %v995 = vld [vmem:[%s992 + $0x8] sm:$0xf]
        %v996 = vld [vmem:[%s992 + $0xc] sm:$0xf]
        %v997 = vld [vmem:[%s992 + $0x10] sm:$0xf]
        %v998 = vld [vmem:[%s992 + $0x14] sm:$0xf]
        %v999 = vld [vmem:[%s992 + $0x18] sm:$0xf]
        %v1000 = vld [vmem:[%s992 + $0x1c] sm:$0xf]
        %v1001 = vld [vmem:[%s992 + $0x20] sm:$0xf]
        %v1002 = vld [vmem:[%s992 + $0x24] sm:$0xf]
        %v1003 = vld [vmem:[%s992 + $0x28] sm:$0xf]
        %v1004 = vld [vmem:[%s992 + $0x2c] sm:$0xf]
        %v1005 = vld [vmem:[%s992 + $0x30] sm:$0xf]
        %v1006 = vld [vmem:[%s992 + $0x34] sm:$0xf]
        %v1007 = vld [vmem:[%s992 + $0x38] sm:$0xf]
        %v1008 = vld [vmem:[%s992 + $0x3c] sm:$0xf]
        %v1009 = vunpack.c.l.b16 %v977
        %v1010 = vunpack.c.l.b16 %v991
        %v1011 = vpack.c.b16 %v1010, %v1009
        %v1029 = vunpack.c.l.b16 %v993
        %v1030 = vunpack.c.l.b16 %v994
        %v1031 = vunpack.c.l.b16 %v995
        %v1032 = vunpack.c.l.b16 %v996
        %v1033 = vunpack.c.l.b16 %v997
        %v1034 = vunpack.c.l.b16 %v998
        %v1035 = vunpack.c.l.b16 %v999
        %v1036 = vunpack.c.l.b16 %v1000
        %v1037 = vunpack.c.l.b16 %v1001
        %v1038 = vunpack.c.l.b16 %v1002
        %v1039 = vunpack.c.l.b16 %v1003
        %v1040 = vunpack.c.l.b16 %v1004
        %v1041 = vunpack.c.l.b16 %v1005
        %v1042 = vunpack.c.l.b16 %v1006
        %v1043 = vunpack.c.l.b16 %v1007
        %v1044 = vunpack.c.l.b16 %v1008
        %v1045 = vpack.c.b16 %v1030, %v1029
        %v1046 = vpack.c.b16 %v1032, %v1031
        %v1047 = vpack.c.b16 %v1034, %v1033
        %v1048 = vpack.c.b16 %v1036, %v1035
        %v1049 = vpack.c.b16 %v1038, %v1037
        %v1050 = vpack.c.b16 %v1040, %v1039
        %v1051 = vpack.c.b16 %v1042, %v1041
        %v1052 = vpack.c.b16 %v1044, %v1043
        %1061 = vmatpush.bf16.msra.mxu0 %v1052
        %1062 = vmatpush.bf16.msra.mxu0 %v1051
        %1063 = vmatpush.bf16.msra.mxu0 %v1050
        %1064 = vmatpush.bf16.msra.mxu0 %v1049
        %1065 = vmatpush.bf16.msra.mxu0 %v1048
        %1066 = vmatpush.bf16.msra.mxu0 %v1047
        %1067 = vmatpush.bf16.msra.mxu0 %v1046
        %1068 = vmatpush.bf16.msra.mxu0 %v1045
        %1069 = vmatmul.bf16.gmra.mxu0 %v1011
        %v1070 = vpop.f32.mrf.mxu0
        %v1071 = vadd.f32 0.0, %v1070
        %v1072 = vpop.f32.mrf.mxu0
        %v1073 = vadd.f32 0.0, %v1072
        %1074 = vdwg.mxu0
        %v1075 = vadd.f32 %v958, %v1071
        %v1076 = vadd.f32 %v959, %v1073
        %v1077 = vld [vmem:[#allocation4] sm:$0xe]
        %v1078 = vld [vmem:[#allocation4 + $0x8] sm:$0xe]
        %v1083 = vrot.slane %v1077, 5
        %v1084 = vrot.slane %v1083, 4
        %v1085 = vrot.slane %v961, 5
        %v1086 = vsel %vm606, %v1084, %v1085
        %v1087 = vrot.slane %v1078, 5
        %v1088 = vrot.slane %v1087, 4
        %v1089 = vrot.slane %v963, 5
        %v1090 = vsel %vm606, %v1088, %v1089
        %s1091 = scalar_lea.vmem %s3, 128
        %v1092 = vld [vmem:[%s1091] sm:$0xf]
        %v1093 = vld [vmem:[%s1091 + $0x4] sm:$0xf]
        %v1094 = vld [vmem:[%s1091 + $0x8] sm:$0xf]
        %v1095 = vld [vmem:[%s1091 + $0xc] sm:$0xf]
        %v1096 = vld [vmem:[%s1091 + $0x10] sm:$0xf]
        %v1097 = vld [vmem:[%s1091 + $0x14] sm:$0xf]
        %v1098 = vld [vmem:[%s1091 + $0x18] sm:$0xf]
        %v1099 = vld [vmem:[%s1091 + $0x1c] sm:$0xf]
        %v1100 = vld [vmem:[%s1091 + $0x20] sm:$0xf]
        %v1101 = vld [vmem:[%s1091 + $0x24] sm:$0xf]
        %v1102 = vld [vmem:[%s1091 + $0x28] sm:$0xf]
        %v1103 = vld [vmem:[%s1091 + $0x2c] sm:$0xf]
        %v1104 = vld [vmem:[%s1091 + $0x30] sm:$0xf]
        %v1105 = vld [vmem:[%s1091 + $0x34] sm:$0xf]
        %v1106 = vld [vmem:[%s1091 + $0x38] sm:$0xf]
        %v1107 = vld [vmem:[%s1091 + $0x3c] sm:$0xf]
        %v1108 = vunpack.c.l.b16 %v1086
        %v1109 = vunpack.c.l.b16 %v1090
        %v1110 = vpack.c.b16 %v1109, %v1108
        %v1128 = vunpack.c.l.b16 %v1092
        %v1129 = vunpack.c.l.b16 %v1093
        %v1130 = vunpack.c.l.b16 %v1094
        %v1131 = vunpack.c.l.b16 %v1095
        %v1132 = vunpack.c.l.b16 %v1096
        %v1133 = vunpack.c.l.b16 %v1097
        %v1134 = vunpack.c.l.b16 %v1098
        %v1135 = vunpack.c.l.b16 %v1099
        %v1136 = vunpack.c.l.b16 %v1100
        %v1137 = vunpack.c.l.b16 %v1101
        %v1138 = vunpack.c.l.b16 %v1102
        %v1139 = vunpack.c.l.b16 %v1103
        %v1140 = vunpack.c.l.b16 %v1104
        %v1141 = vunpack.c.l.b16 %v1105
        %v1142 = vunpack.c.l.b16 %v1106
        %v1143 = vunpack.c.l.b16 %v1107
        %v1144 = vpack.c.b16 %v1129, %v1128
        %v1145 = vpack.c.b16 %v1131, %v1130
        %v1146 = vpack.c.b16 %v1133, %v1132
        %v1147 = vpack.c.b16 %v1135, %v1134
        %v1148 = vpack.c.b16 %v1137, %v1136
        %v1149 = vpack.c.b16 %v1139, %v1138
        %v1150 = vpack.c.b16 %v1141, %v1140
        %v1151 = vpack.c.b16 %v1143, %v1142
        %1160 = vmatpush.bf16.msra.mxu0 %v1151
        %1161 = vmatpush.bf16.msra.mxu0 %v1150
        %1162 = vmatpush.bf16.msra.mxu0 %v1149
        %1163 = vmatpush.bf16.msra.mxu0 %v1148
        %1164 = vmatpush.bf16.msra.mxu0 %v1147
        %1165 = vmatpush.bf16.msra.mxu0 %v1146
        %1166 = vmatpush.bf16.msra.mxu0 %v1145
        %1167 = vmatpush.bf16.msra.mxu0 %v1144
        %1168 = vmatmul.bf16.gmra.mxu0 %v1110
        %v1169 = vpop.f32.mrf.mxu0
        %v1170 = vadd.f32 0.0, %v1169
        %v1171 = vpop.f32.mrf.mxu0
        %v1172 = vadd.f32 0.0, %v1171
        %1173 = vdwg.mxu0
        %v1174 = vadd.f32 %v1075, %v1170
        %v1175 = vadd.f32 %v1076, %v1172
        %v1176 = vtanh.pop %v1174
        %v1177 = vtanh.pop %v1175
        %v1178 = vsub.f32 1.0, %v774
        %v1179 = vsub.f32 1.0, %v789
        %v1180 = vmul.f32 %v828, %v1178
        %v1181 = vmul.f32 %v829, %v1179
        %v1182 = vmul.f32 %v1176, %v774
        %v1183 = vmul.f32 %v1177, %v789
        %v1184 = vadd.f32 %v1180, %v1182
        %v1185 = vadd.f32 %v1181, %v1183
        %1186 = vst [vmem:[%s221] sm:$0xff] %v1184
        %1187 = vst [vmem:[%s221 + $0x8] sm:$0xff] %v1185
        %1188 = vst [vmem:[#allocation2] sm:$0xff] %v1184
        %1189 = vst [vmem:[#allocation2 + $0x8] sm:$0xff] %v1185
        %v1190 = vpack.c.bf16 %v1184, %v1184
        %v1191 = vpack.c.bf16 %v1185, %v1185
        %v1193 = vshrl.u32 %v1190, 16
        %v1195 = vrot.slane %v1193, 7
        %v1196 = vshll.u32 %v1190, 16
        %v1198 = vor.u32 %v1195, %v1196
        %v1199 = vrot.slane %v1195, 4
        %v1201 = vshrl.u32 %v1191, 16
        %v1203 = vrot.slane %v1201, 7
        %v1204 = vshll.u32 %v1191, 16
        %v1206 = vor.u32 %v1203, %v1204
        %v1207 = vrot.slane %v1203, 4
        %v1212 = vld [vmem:[#allocation3] sm:$0xf]
        %v1213 = vsel %vm856, %v1198, %v1212
        %1214 = vst [vmem:[#allocation3] sm:$0xf] %v1213
        %v1215 = vld [vmem:[#allocation3 + $0x4] sm:$0x1]
        %v1216 = vsel %vm862, %v1199, %v1215
        %1217 = vst [vmem:[#allocation3 + $0x4] sm:$0x1] %v1216
        %v1218 = vld [vmem:[#allocation3 + $0x8] sm:$0xf]
        %v1219 = vsel %vm856, %v1206, %v1218
        %1220 = vst [vmem:[#allocation3 + $0x8] sm:$0xf] %v1219
        %v1221 = vld [vmem:[#allocation3 + $0xc] sm:$0x1]
        %v1222 = vsel %vm862, %v1207, %v1221
        %1223 = vst [vmem:[#allocation3 + $0xc] sm:$0x1] %v1222
        %s1224 = sand.u32 %s112, 1
        %s1225 = sand.u32 %s112, 1
        %s1226 = smul.addr %s1225, 16
        %s1227 = scalar_lea.vmem [#allocation6], %s1226
        // Predicated region
        $region64: #{decoder_forward.7} parent=54 // pred_check
          %p1228 = pneg %p122
        $region65: #{decoder_forward.7} parent=54 // pred_check_branch
          %1230 = sbr.rel (%p1228) target = $region67
        $region66: #{decoder_forward.7} parent=54 // pred_region
          %s1231 = smul.addr %s15, 8
          %s1232 = scalar_lea.vmem %s4, %s1231
          // Predicated region
          $region68: #{decoder_forward.7} parent=66 // pred_check
            _
          $region69: #{decoder_forward.7} parent=66 // pred_check_branch
            %1234 = sbr.rel (0) target = $region71
          $region70: #{decoder_forward.7} parent=66 // pred_region
            // Predicated region
            $region72: #{decoder_forward.7} parent=70 // pred_check
              _
            $region73: #{decoder_forward.7} parent=70 // pred_check_branch
              %1236 = sbr.rel (0) target = $region75
            $region74: #{decoder_forward.7} parent=70 // pred_region
              // Predicated region
              $region87: #{decoder_forward.7} parent=74 // pred_check
                _
              $region88: #{decoder_forward.7} parent=74 // pred_check_branch
                %1254 = sbr.rel (0) target = $region90
              $region89: #{decoder_forward.7} parent=74 // pred_region
                loop: start=0, step=1, limit=1
                $region91: #{decoder_forward.7} parent=89 // loop_pre_header
                  _
                $region92: #{decoder_forward.7} parent=89 // loop_header
                  %s1256 = sphi 0, %s1260
                  %p1257 = scmp.ge.s32.totalorder %s1256, 1
                  %s1261 = sphi %s1227, %s1227
                  %s1262 = sphi %s1232, %s1232
                $region93: #{decoder_forward.7} parent=89 // loop_header_branch
                  %1259 = sbr.rel (%p1257) target = $region97
                $region94: #{decoder_forward.7} parent=89 // loop_body
                  %v1263 = vld [vmem:[%s1261] sm:$0xff]
                  %1264 = vst [vmem:[%s1262] sm:$0xff] %v1263
                  %v1265 = vld [vmem:[%s1261 + $0x8] sm:$0xff]
                  %1266 = vst [vmem:[%s1262 + $0x18] sm:$0xff] %v1265
                $region95: #{decoder_forward.7} parent=89 // loop_footer
                  %s1260 = sadd.s32 1, %s1256
                $region96: #{decoder_forward.7} parent=89 // loop_footer_branch
                  %1255 = sbr.rel target = $region92
                $region97: #{decoder_forward.7} parent=89 // loop_exit
                  _
              $region90: #{decoder_forward.7} parent=74 // pred_fallthru
                _
              // Predicated region
              $region98: #{decoder_forward.7} parent=74 // pred_check
                _
              $region99: #{decoder_forward.7} parent=74 // pred_check_branch
                %1268 = sbr.rel target = $region101
              $region100: #{decoder_forward.7} parent=74 // pred_region
                _
              $region101: #{decoder_forward.7} parent=74 // pred_fallthru
                _
            $region75: #{decoder_forward.7} parent=70 // pred_fallthru
              _
            // Predicated region
            $region76: #{decoder_forward.7} parent=70 // pred_check
              _
            $region77: #{decoder_forward.7} parent=70 // pred_check_branch
              %1238 = sbr.rel target = $region79
            $region78: #{decoder_forward.7} parent=70 // pred_region
              %s1240 = ssub.s32 256, 1
              loop: start=0, step=1, limit=1
              $region80: #{decoder_forward.7} parent=78 // loop_pre_header
                _
              $region81: #{decoder_forward.7} parent=78 // loop_header
                %s1242 = sphi 0, %s1246
                %p1243 = scmp.ge.s32.totalorder %s1242, 1
                %s1247 = sphi %s1227, %s1227
                %s1248 = sphi %s1232, %s1232
              $region82: #{decoder_forward.7} parent=78 // loop_header_branch
                %1245 = sbr.rel (%p1243) target = $region86
              $region83: #{decoder_forward.7} parent=78 // loop_body
                %v1249 = vld [vmem:[%s1247] sm:%s1240]
                %1250 = vst [vmem:[%s1248] sm:%s1240] %v1249
                %v1251 = vld [vmem:[%s1247 + $0x8] sm:%s1240]
                %1252 = vst [vmem:[%s1248 + $0x18] sm:%s1240] %v1251
              $region84: #{decoder_forward.7} parent=78 // loop_footer
                %s1246 = sadd.s32 1, %s1242
              $region85: #{decoder_forward.7} parent=78 // loop_footer_branch
                %1241 = sbr.rel target = $region81
              $region86: #{decoder_forward.7} parent=78 // loop_exit
                _
            $region79: #{decoder_forward.7} parent=70 // pred_fallthru
              _
          $region71: #{decoder_forward.7} parent=66 // pred_fallthru
            _
          %1269 = vnop
        $region67: #{decoder_forward.7} parent=54 // pred_fallthru
          _
      $region55: #{decoder_forward.7} parent=5 // pred_fallthru
        _
      %p1270 = scmp.le.s32.totalorder 2, %s10
      // Predicated region
      $region102: #{decoder_forward.7} parent=5 // pred_check
        %p1271 = pneg %p1270
      $region103: #{decoder_forward.7} parent=5 // pred_check_branch
        %1273 = sbr.rel (%p1271) target = $region105
      $region104: #{decoder_forward.7} parent=5 // pred_region
        %s1274 = ssub.s32 %s10, 2
        // Predicated region
        $region106: #{decoder_forward.7} parent=104 // pred_check
          %p1275 = pneg %p128
        $region107: #{decoder_forward.7} parent=104 // pred_check_branch
          %1277 = sbr.rel (%p1275) target = $region109
        $region108: #{decoder_forward.7} parent=104 // pred_region
          %s1278 = sand.u32 %s113, 1
          %s1279 = sand.u32 %s113, 1
          %s1280 = smul.addr %s1279, 16
          %s1281 = scalar_lea.vmem [#allocation6], %s1280
        $region109: #{decoder_forward.7} parent=104 // pred_fallthru
          _
      $region105: #{decoder_forward.7} parent=5 // pred_fallthru
        _
    $region6: #{decoder_forward.7} parent=1 // loop_footer
      %s14 = sadd.s32 1, %s10
    $region7: #{decoder_forward.7} parent=1 // loop_footer_branch
      %9 = sbr.rel target = $region3
    $region8: #{decoder_forward.7} parent=1 // loop_exit
      _

</llo_original>
